<compile_context>
chip_gen: v5e
topology: v5e:2x2
jax: 0.10.0
libtpu: 0.0.40
codegen_flags: <defaults>
</compile_context>

<pallas_src>
import functools

import jax
import jax.numpy as jnp
import numpy as np
from jax.experimental import pallas as pl
from jax.experimental.pallas import tpu as pltpu

_KS = (3, 5, 7)


def _pool_cols(w, ks=_KS):
    """Concatenated column-pooling matrix and per-scale (k, offset, width)."""
    blocks, scales, off = [], [], 0
    for k in ks:
        wo = w // k
        m = np.zeros((w, wo), dtype=np.float32)
        for q in range(wo):
            m[q * k:(q + 1) * k, q] = 1.0
        blocks.append(m)
        scales.append((k, off, wo))
        off += wo
    return np.concatenate(blocks, axis=1), tuple(scales)


def _choose_tb(B, h, cap, sub_mult):
    """Largest divisor of B <= cap whose block row-count is sublane aligned."""
    cap = max(1, min(cap, B))
    for tb in range(cap, 0, -1):
        if B % tb == 0 and (tb * h) % sub_mult == 0:
            return tb
    # No aligned divisor: fall back to the full batch (a block equal to the
    # full array extent is always a legal BlockSpec).
    return B


def _pl_loss_kernel(pred_ref, label_ref, pwcat_ref, out_ref, *, h, scales):
    # Per-P accumulator: init on the first step of the sequential axis.
    @pl.when(pl.program_id(1) == 0)
    def _():
        out_ref[...] = jnp.zeros_like(out_ref)

    # (TB*h, w) diff in f32 (inputs may be bf16 in HBM).
    d = pred_ref[...].astype(jnp.float32) - label_ref[...].astype(jnp.float32)
    tbh = d.shape[0]

    # Scale 0: plain L1 over the whole block.
    partial = jnp.sum(jnp.abs(d))

    # Column pooling for all scales at once: one big-M matmul on the MXU.
    cp = jnp.dot(d, pwcat_ref[...], preferred_element_type=jnp.float32)
    wtot = cp.shape[1]

    # Zero-pad 8 rows so shifted windows never read past the block.
    cp_pad = jnp.concatenate([cp, jnp.zeros((8, wtot), jnp.float32)], axis=0)

    # Row index within each image / column index (for scale selection).
    rr = jax.lax.broadcasted_iota(jnp.int32, (tbh, wtot), 0) % h
    cc = jax.lax.broadcasted_iota(jnp.int32, (tbh, wtot), 1)

    # Row pooling: win[r, c] = sum_{j<k} cp[r+j, c]; valid window starts are
    # rows with (r % h) % k == 0 and (r % h) + k <= h (crop, no image overlap).
    win = cp
    prev_k = 1
    for (k, off, wo) in scales:
        for j in range(prev_k, k):
            win = win + cp_pad[j:j + tbh, :]
        prev_k = k
        mask = (rr % k == 0) & (rr <= h - k) & (cc >= off) & (cc < off + wo)
        partial = partial + jnp.sum(jnp.where(mask, jnp.abs(win), 0.0))

    out_ref[...] += partial


def pl_loss(pred, label, *, tb_max=None):
    """Pallas implementation of PL.forward. pred/label: (n, t, c, h, w)."""
    assert pred.shape == label.shape
    n, t, c, h, w = pred.shape
    assert h >= max(_KS) and w >= max(_KS), "pooling needs h, w >= 7"
    N = n * t
    B = n * t * c

    # Free reshapes (collapse contiguous dims); keep original dtype in HBM.
    pred2d = pred.reshape(B * h, w)
    label2d = label.reshape(B * h, w)

    pwcat_np, scales = _pool_cols(w)
    pwcat = jnp.asarray(pwcat_np)
    wtot = pwcat.shape[1]

    # ---- tile sizing -------------------------------------------------------
    itemsize = pred.dtype.itemsize
    bytes_per_image = 2 * h * w * itemsize              # pred + label, 1 image
    cap = min((4 << 20) // bytes_per_image, max(1, 4096 // h))
    if tb_max is not None:
        cap = min(cap, tb_max)
    sub_mult = max(8, 32 // itemsize)                    # f32:8  bf16:16  int8:32
    TB = _choose_tb(B, h, cap, sub_mult)

    nblocks = B // TB
    P = 2 if (nblocks >= 2 and nblocks % 2 == 0) else 1  # v7x: 2 TensorCores
    S = nblocks // P

    kernel = functools.partial(_pl_loss_kernel, h=h, scales=scales)

    grid_spec = pltpu.PrefetchScalarGridSpec(
        num_scalar_prefetch=0,
        grid=(P, S),
        in_specs=[
            pl.BlockSpec((TB * h, w), lambda p, s: (p * S + s, 0)),   # pred
            pl.BlockSpec((TB * h, w), lambda p, s: (p * S + s, 0)),   # label
            pl.BlockSpec((w, wtot), lambda p, s: (0, 0)),             # Pw concat
        ],
        out_specs=pl.BlockSpec((1, 1, 1), lambda p, s: (p, 0, 0)),
    )

    acc = pl.pallas_call(
        kernel,
        out_shape=jax.ShapeDtypeStruct((P, 1, 1), jnp.float32),
        grid_spec=grid_spec,
        compiler_params=pltpu.CompilerParams(
            dimension_semantics=("parallel", "arbitrary"),
            vmem_limit_bytes=40 * 1024 * 1024,
        ),
    )(pred2d, label2d, pwcat)

    # Final scalar normalization (glue): /N per scale, /4 over the 4 scales.
    return jnp.sum(acc) / (4.0 * N)


def pl_loss_ref(pred, label):
    """Pure-JAX reference matching the PyTorch module."""
    n, t, c, h, w = pred.shape
    N = n * t
    d = (pred.astype(jnp.float32) - label.astype(jnp.float32)).reshape(
        n * t, c, h, w)
    total = jnp.sum(jnp.abs(d))
    for k in _KS:
        hc, wc = (h // k) * k, (w // k) * k
        dc = d[:, :, :hc, :wc]
        pooled = dc.reshape(n * t, c, h // k, k, w // k, k).sum(axis=(3, 5))
        total = total + jnp.sum(jnp.abs(pooled))
    return total / (4.0 * N)


if __name__ == "__main__":
    key = jax.random.PRNGKey(0)
    k1, k2 = jax.random.split(key)
    n, t, c, h, w = 2, 2, 3, 16, 16
    pred = jax.random.normal(k1, (n, t, c, h, w), dtype=jnp.float32)
    label = jax.random.normal(k2, (n, t, c, h, w), dtype=jnp.float32)

    ref = jax.block_until_ready(pl_loss_ref(pred, label))

    # Single-block path (all 12 images in one grid step).
    out = jax.block_until_ready(pl_loss(pred, label))
    np.testing.assert_allclose(np.asarray(out), np.asarray(ref),
                               rtol=1e-5, atol=1e-5)

    # Multi-block + 2-way parallel accumulator path (TB=3 -> grid (2, 2)).
    out2 = jax.block_until_ready(pl_loss(pred, label, tb_max=3))
    np.testing.assert_allclose(np.asarray(out2), np.asarray(ref),
                               rtol=1e-5, atol=1e-5)

    # bf16-in-HBM path (cast to f32 inside the kernel).
    pred_bf = pred.astype(jnp.bfloat16)
    label_bf = label.astype(jnp.bfloat16)
    out3 = jax.block_until_ready(pl_loss(pred_bf, label_bf))
    ref3 = jax.block_until_ready(
        pl_loss_ref(pred_bf.astype(jnp.float32), label_bf.astype(jnp.float32)))
    np.testing.assert_allclose(np.asarray(out3), np.asarray(ref3),
                               rtol=1e-4, atol=1e-4)

    print("KERNEL_OK")
</pallas_src>

<mosaic_0001>
module attributes {stable_mosaic.version = 11 : i64} {
  func.func @_pl_loss_kernel(%arg0: i32, %arg1: i32, %arg2: memref<192x16xf32, #tpu.memory_space<vmem>>, %arg3: memref<192x16xf32, #tpu.memory_space<vmem>>, %arg4: memref<16x10xf32, #tpu.memory_space<vmem>>, %arg5: memref<1x1x1xf32, #tpu.memory_space<vmem>>) attributes {dimension_semantics = [#tpu.dimension_semantics<parallel>, #tpu.dimension_semantics<arbitrary>], iteration_bounds = array<i64: 1, 1>, scalar_prefetch = 0 : i64, scratch_operands = 0 : i64, tpu.core_type = #tpu.core_type<tc>, window_params = [{transform_indices = @transform_0, window_bounds = array<i64: 192, 16>}, {transform_indices = @transform_1, window_bounds = array<i64: 192, 16>}, {pipeline_mode = #tpu.pipeline_mode<synchronous>, transform_indices = @transform_2, window_bounds = array<i64: 16, 10>}, {transform_indices = @transform_3, window_bounds = array<i64: 1, 1, 1>}]} {
    %c0_i32 = arith.constant 0 : i32
    %0 = arith.cmpi eq, %arg1, %c0_i32 : i32
    %1 = arith.extui %0 : i1 to i32
    %c0_i32_0 = arith.constant 0 : i32
    %2 = arith.cmpi ne, %1, %c0_i32_0 : i32
    scf.if %2 {
      %cst_46 = arith.constant 0.000000e+00 : f32
      %154 = vector.broadcast %cst_46 : f32 to vector<1x1x1xf32>
      %c0_47 = arith.constant 0 : index
      %c0_48 = arith.constant 0 : index
      %c0_49 = arith.constant 0 : index
      %155 = vector.load %arg5[%c0_47, %c0_48, %c0_49] : memref<1x1x1xf32, #tpu.memory_space<vmem>>, vector<1x1x1xf32>
      tpu.vector_store %arg5[%c0_47, %c0_48, %c0_49], %154 {strides = array<i32>} : memref<1x1x1xf32, #tpu.memory_space<vmem>>, vector<1x1x1xf32>,
    } else {
    }
    %c0 = arith.constant 0 : index
    %c0_1 = arith.constant 0 : index
    %3 = vector.load %arg2[%c0, %c0_1] : memref<192x16xf32, #tpu.memory_space<vmem>>, vector<192x16xf32>
    %c0_2 = arith.constant 0 : index
    %c0_3 = arith.constant 0 : index
    %4 = vector.load %arg3[%c0_2, %c0_3] : memref<192x16xf32, #tpu.memory_space<vmem>>, vector<192x16xf32>
    %5 = arith.subf %3, %4 : vector<192x16xf32>
    %6 = math.absf %5 : vector<192x16xf32>
    %7 = vector.shape_cast %6 : vector<192x16xf32> to vector<1x192x16xf32>
    %cst = arith.constant dense<0.000000e+00> : vector<1xf32>
    %8 = vector.multi_reduction <add>, %7, %cst [1, 2] : vector<1x192x16xf32> to vector<1xf32>
    %9 = vector.shape_cast %8 : vector<1xf32> to vector<1x1x1xf32>
    %10 = vector.extract %9[0, 0, 0] : f32 from vector<1x1x1xf32>
    %c0_4 = arith.constant 0 : index
    %c0_5 = arith.constant 0 : index
    %11 = vector.load %arg4[%c0_4, %c0_5] : memref<16x10xf32, #tpu.memory_space<vmem>>, vector<16x10xf32>
    %cst_6 = arith.constant dense<0.000000e+00> : vector<192x10xf32>
    %12 = tpu.matmul %5, %11, %cst_6 {dimension_numbers = #tpu.dot_dimension_numbers<[1], [0], [0], [1], [0, 0, 1, 1], [], []>} : vector<192x16xf32>, vector<16x10xf32>, vector<192x10xf32> -> vector<192x10xf32>
    %cst_7 = arith.constant 0.000000e+00 : f32
    %13 = vector.broadcast %cst_7 : f32 to vector<8x10xf32>
    %14 = tpu.concatenate %12, %13 in 0 : vector<192x10xf32>, vector<8x10xf32> -> vector<200x10xf32>
    %15 = tpu.iota {dimensions = array<i32: 0>} : vector<192x10xi32>
    %c16_i32 = arith.constant 16 : i32
    %c0_i32_8 = arith.constant 0 : i32
    %16 = arith.cmpi eq, %c16_i32, %c0_i32_8 : i32
    %c1_i32 = arith.constant 1 : i32
    %17 = arith.select %16, %c1_i32, %c16_i32 : i32
    %18 = vector.broadcast %17 : i32 to vector<192x10xi32>
    %19 = arith.remsi %15, %18 : vector<192x10xi32>
    %c0_i32_9 = arith.constant 0 : i32
    %20 = vector.broadcast %c0_i32_9 : i32 to vector<192x10xi32>
    %21 = arith.cmpi ne, %19, %20 : vector<192x10xi32>
    %c0_i32_10 = arith.constant 0 : i32
    %22 = vector.broadcast %c0_i32_10 : i32 to vector<192x10xi32>
    %23 = arith.cmpi slt, %19, %22 : vector<192x10xi32>
    %c0_i32_11 = arith.constant 0 : i32
    %24 = arith.cmpi slt, %17, %c0_i32_11 : i32
    %25 = vector.broadcast %24 : i1 to vector<192x10xi1>
    %26 = vector.broadcast %25 : vector<192x10xi1> to vector<192x10xi1>
    %27 = arith.xori %23, %26 : vector<192x10xi1>
    %28 = arith.andi %27, %21 : vector<192x10xi1>
    %29 = vector.broadcast %17 : i32 to vector<192x10xi32>
    %30 = arith.addi %19, %29 : vector<192x10xi32>
    %31 = arith.select %28, %30, %19 : vector<192x10xi1>, vector<192x10xi32>
    %32 = tpu.iota {dimensions = array<i32: 1>} : vector<192x10xi32>
    %33 = vector.extract_strided_slice %14 {offsets = [1, 0], sizes = [192, 10], strides = [1, 1]} : vector<200x10xf32> to vector<192x10xf32>
    %34 = arith.addf %12, %33 : vector<192x10xf32>
    %35 = vector.extract_strided_slice %14 {offsets = [2, 0], sizes = [192, 10], strides = [1, 1]} : vector<200x10xf32> to vector<192x10xf32>
    %36 = arith.addf %34, %35 : vector<192x10xf32>
    %c3_i32 = arith.constant 3 : i32
    %c0_i32_12 = arith.constant 0 : i32
    %37 = arith.cmpi eq, %c3_i32, %c0_i32_12 : i32
    %c1_i32_13 = arith.constant 1 : i32
    %38 = arith.select %37, %c1_i32_13, %c3_i32 : i32
    %39 = vector.broadcast %38 : i32 to vector<192x10xi32>
    %40 = arith.remsi %31, %39 : vector<192x10xi32>
    %c0_i32_14 = arith.constant 0 : i32
    %41 = vector.broadcast %c0_i32_14 : i32 to vector<192x10xi32>
    %42 = arith.cmpi ne, %40, %41 : vector<192x10xi32>
    %c0_i32_15 = arith.constant 0 : i32
    %43 = vector.broadcast %c0_i32_15 : i32 to vector<192x10xi32>
    %44 = arith.cmpi slt, %40, %43 : vector<192x10xi32>
    %c0_i32_16 = arith.constant 0 : i32
    %45 = arith.cmpi slt, %38, %c0_i32_16 : i32
    %46 = vector.broadcast %45 : i1 to vector<192x10xi1>
    %47 = vector.broadcast %46 : vector<192x10xi1> to vector<192x10xi1>
    %48 = arith.xori %44, %47 : vector<192x10xi1>
    %49 = arith.andi %48, %42 : vector<192x10xi1>
    %50 = vector.broadcast %38 : i32 to vector<192x10xi32>
    %51 = arith.addi %40, %50 : vector<192x10xi32>
    %52 = arith.select %49, %51, %40 : vector<192x10xi1>, vector<192x10xi32>
    %c0_i32_17 = arith.constant 0 : i32
    %53 = vector.broadcast %c0_i32_17 : i32 to vector<192x10xi32>
    %54 = arith.cmpi eq, %52, %53 : vector<192x10xi32>
    %c13_i32 = arith.constant 13 : i32
    %55 = vector.broadcast %c13_i32 : i32 to vector<192x10xi32>
    %56 = arith.cmpi sle, %31, %55 : vector<192x10xi32>
    %57 = arith.andi %54, %56 : vector<192x10xi1>
    %c0_i32_18 = arith.constant 0 : i32
    %58 = vector.broadcast %c0_i32_18 : i32 to vector<192x10xi32>
    %59 = arith.cmpi sge, %32, %58 : vector<192x10xi32>
    %60 = arith.andi %57, %59 : vector<192x10xi1>
    %c5_i32 = arith.constant 5 : i32
    %61 = vector.broadcast %c5_i32 : i32 to vector<192x10xi32>
    %62 = arith.cmpi slt, %32, %61 : vector<192x10xi32>
    %63 = arith.andi %60, %62 : vector<192x10xi1>
    %64 = math.absf %36 : vector<192x10xf32>
    %cst_19 = arith.constant 0.000000e+00 : f32
    %65 = vector.broadcast %cst_19 : f32 to vector<192x10xf32>
    %66 = arith.select %63, %64, %65 : vector<192x10xi1>, vector<192x10xf32>
    %67 = vector.shape_cast %66 : vector<192x10xf32> to vector<1x192x10xf32>
    %cst_20 = arith.constant dense<0.000000e+00> : vector<1xf32>
    %68 = vector.multi_reduction <add>, %67, %cst_20 [1, 2] : vector<1x192x10xf32> to vector<1xf32>
    %69 = vector.shape_cast %68 : vector<1xf32> to vector<1x1x1xf32>
    %70 = vector.extract %69[0, 0, 0] : f32 from vector<1x1x1xf32>
    %71 = arith.addf %10, %70 : f32
    %72 = vector.extract_strided_slice %14 {offsets = [3, 0], sizes = [192, 10], strides = [1, 1]} : vector<200x10xf32> to vector<192x10xf32>
    %73 = arith.addf %36, %72 : vector<192x10xf32>
    %74 = vector.extract_strided_slice %14 {offsets = [4, 0], sizes = [192, 10], strides = [1, 1]} : vector<200x10xf32> to vector<192x10xf32>
    %75 = arith.addf %73, %74 : vector<192x10xf32>
    %c5_i32_21 = arith.constant 5 : i32
    %c0_i32_22 = arith.constant 0 : i32
    %76 = arith.cmpi eq, %c5_i32_21, %c0_i32_22 : i32
    %c1_i32_23 = arith.constant 1 : i32
    %77 = arith.select %76, %c1_i32_23, %c5_i32_21 : i32
    %78 = vector.broadcast %77 : i32 to vector<192x10xi32>
    %79 = arith.remsi %31, %78 : vector<192x10xi32>
    %c0_i32_24 = arith.constant 0 : i32
    %80 = vector.broadcast %c0_i32_24 : i32 to vector<192x10xi32>
    %81 = arith.cmpi ne, %79, %80 : vector<192x10xi32>
    %c0_i32_25 = arith.constant 0 : i32
    %82 = vector.broadcast %c0_i32_25 : i32 to vector<192x10xi32>
    %83 = arith.cmpi slt, %79, %82 : vector<192x10xi32>
    %c0_i32_26 = arith.constant 0 : i32
    %84 = arith.cmpi slt, %77, %c0_i32_26 : i32
    %85 = vector.broadcast %84 : i1 to vector<192x10xi1>
    %86 = vector.broadcast %85 : vector<192x10xi1> to vector<192x10xi1>
    %87 = arith.xori %83, %86 : vector<192x10xi1>
    %88 = arith.andi %87, %81 : vector<192x10xi1>
    %89 = vector.broadcast %77 : i32 to vector<192x10xi32>
    %90 = arith.addi %79, %89 : vector<192x10xi32>
    %91 = arith.select %88, %90, %79 : vector<192x10xi1>, vector<192x10xi32>
    %c0_i32_27 = arith.constant 0 : i32
    %92 = vector.broadcast %c0_i32_27 : i32 to vector<192x10xi32>
    %93 = arith.cmpi eq, %91, %92 : vector<192x10xi32>
    %c11_i32 = arith.constant 11 : i32
    %94 = vector.broadcast %c11_i32 : i32 to vector<192x10xi32>
    %95 = arith.cmpi sle, %31, %94 : vector<192x10xi32>
    %96 = arith.andi %93, %95 : vector<192x10xi1>
    %c5_i32_28 = arith.constant 5 : i32
    %97 = vector.broadcast %c5_i32_28 : i32 to vector<192x10xi32>
    %98 = arith.cmpi sge, %32, %97 : vector<192x10xi32>
    %99 = arith.andi %96, %98 : vector<192x10xi1>
    %c8_i32 = arith.constant 8 : i32
    %100 = vector.broadcast %c8_i32 : i32 to vector<192x10xi32>
    %101 = arith.cmpi slt, %32, %100 : vector<192x10xi32>
    %102 = arith.andi %99, %101 : vector<192x10xi1>
    %103 = math.absf %75 : vector<192x10xf32>
    %cst_29 = arith.constant 0.000000e+00 : f32
    %104 = vector.broadcast %cst_29 : f32 to vector<192x10xf32>
    %105 = arith.select %102, %103, %104 : vector<192x10xi1>, vector<192x10xf32>
    %106 = vector.shape_cast %105 : vector<192x10xf32> to vector<1x192x10xf32>
    %cst_30 = arith.constant dense<0.000000e+00> : vector<1xf32>
    %107 = vector.multi_reduction <add>, %106, %cst_30 [1, 2] : vector<1x192x10xf32> to vector<1xf32>
    %108 = vector.shape_cast %107 : vector<1xf32> to vector<1x1x1xf32>
    %109 = vector.extract %108[0, 0, 0] : f32 from vector<1x1x1xf32>
    %110 = arith.addf %71, %109 : f32
    %111 = vector.extract_strided_slice %14 {offsets = [5, 0], sizes = [192, 10], strides = [1, 1]} : vector<200x10xf32> to vector<192x10xf32>
    %112 = arith.addf %75, %111 : vector<192x10xf32>
    %113 = vector.extract_strided_slice %14 {offsets = [6, 0], sizes = [192, 10], strides = [1, 1]} : vector<200x10xf32> to vector<192x10xf32>
    %114 = arith.addf %112, %113 : vector<192x10xf32>
    %c7_i32 = arith.constant 7 : i32
    %c0_i32_31 = arith.constant 0 : i32
    %115 = arith.cmpi eq, %c7_i32, %c0_i32_31 : i32
    %c1_i32_32 = arith.constant 1 : i32
    %116 = arith.select %115, %c1_i32_32, %c7_i32 : i32
    %117 = vector.broadcast %116 : i32 to vector<192x10xi32>
    %118 = arith.remsi %31, %117 : vector<192x10xi32>
    %c0_i32_33 = arith.constant 0 : i32
    %119 = vector.broadcast %c0_i32_33 : i32 to vector<192x10xi32>
    %120 = arith.cmpi ne, %118, %119 : vector<192x10xi32>
    %c0_i32_34 = arith.constant 0 : i32
    %121 = vector.broadcast %c0_i32_34 : i32 to vector<192x10xi32>
    %122 = arith.cmpi slt, %118, %121 : vector<192x10xi32>
    %c0_i32_35 = arith.constant 0 : i32
    %123 = arith.cmpi slt, %116, %c0_i32_35 : i32
    %124 = vector.broadcast %123 : i1 to vector<192x10xi1>
    %125 = vector.broadcast %124 : vector<192x10xi1> to vector<192x10xi1>
    %126 = arith.xori %122, %125 : vector<192x10xi1>
    %127 = arith.andi %126, %120 : vector<192x10xi1>
    %128 = vector.broadcast %116 : i32 to vector<192x10xi32>
    %129 = arith.addi %118, %128 : vector<192x10xi32>
    %130 = arith.select %127, %129, %118 : vector<192x10xi1>, vector<192x10xi32>
    %c0_i32_36 = arith.constant 0 : i32
    %131 = vector.broadcast %c0_i32_36 : i32 to vector<192x10xi32>
    %132 = arith.cmpi eq, %130, %131 : vector<192x10xi32>
    %c9_i32 = arith.constant 9 : i32
    %133 = vector.broadcast %c9_i32 : i32 to vector<192x10xi32>
    %134 = arith.cmpi sle, %31, %133 : vector<192x10xi32>
    %135 = arith.andi %132, %134 : vector<192x10xi1>
    %c8_i32_37 = arith.constant 8 : i32
    %136 = vector.broadcast %c8_i32_37 : i32 to vector<192x10xi32>
    %137 = arith.cmpi sge, %32, %136 : vector<192x10xi32>
    %138 = arith.andi %135, %137 : vector<192x10xi1>
    %c10_i32 = arith.constant 10 : i32
    %139 = vector.broadcast %c10_i32 : i32 to vector<192x10xi32>
    %140 = arith.cmpi slt, %32, %139 : vector<192x10xi32>
    %141 = arith.andi %138, %140 : vector<192x10xi1>
    %142 = math.absf %114 : vector<192x10xf32>
    %cst_38 = arith.constant 0.000000e+00 : f32
    %143 = vector.broadcast %cst_38 : f32 to vector<192x10xf32>
    %144 = arith.select %141, %142, %143 : vector<192x10xi1>, vector<192x10xf32>
    %145 = vector.shape_cast %144 : vector<192x10xf32> to vector<1x192x10xf32>
    %cst_39 = arith.constant dense<0.000000e+00> : vector<1xf32>
    %146 = vector.multi_reduction <add>, %145, %cst_39 [1, 2] : vector<1x192x10xf32> to vector<1xf32>
    %147 = vector.shape_cast %146 : vector<1xf32> to vector<1x1x1xf32>
    %148 = vector.extract %147[0, 0, 0] : f32 from vector<1x1x1xf32>
    %149 = arith.addf %110, %148 : f32
    %c0_40 = arith.constant 0 : index
    %c0_41 = arith.constant 0 : index
    %c0_42 = arith.constant 0 : index
    %150 = vector.load %arg5[%c0_40, %c0_41, %c0_42] : memref<1x1x1xf32, #tpu.memory_space<vmem>>, vector<1x1x1xf32>
    %151 = vector.broadcast %149 : f32 to vector<1x1x1xf32>
    %152 = arith.addf %150, %151 : vector<1x1x1xf32>
    %c0_43 = arith.constant 0 : index
    %c0_44 = arith.constant 0 : index
    %c0_45 = arith.constant 0 : index
    %153 = vector.load %arg5[%c0_43, %c0_44, %c0_45] : memref<1x1x1xf32, #tpu.memory_space<vmem>>, vector<1x1x1xf32>
    tpu.vector_store %arg5[%c0_43, %c0_44, %c0_45], %152 {strides = array<i32>} : memref<1x1x1xf32, #tpu.memory_space<vmem>>, vector<1x1x1xf32>,
    return
  }
  func.func @transform_0(%arg0: i32, %arg1: i32) -> (i32, i32) {
    %c1_i32 = arith.constant 1 : i32
    %0 = arith.muli %arg0, %c1_i32 : i32
    %1 = arith.addi %0, %arg1 : i32
    %c0_i32 = arith.constant 0 : i32
    %c0_i32_0 = arith.constant 0 : i32
    return %1, %c0_i32 : i32, i32
  }
  func.func @transform_1(%arg0: i32, %arg1: i32) -> (i32, i32) {
    %c1_i32 = arith.constant 1 : i32
    %0 = arith.muli %arg0, %c1_i32 : i32
    %1 = arith.addi %0, %arg1 : i32
    %c0_i32 = arith.constant 0 : i32
    %c0_i32_0 = arith.constant 0 : i32
    return %1, %c0_i32 : i32, i32
  }
  func.func @transform_2(%arg0: i32, %arg1: i32) -> (i32, i32) {
    %c0_i32 = arith.constant 0 : i32
    %c0_i32_0 = arith.constant 0 : i32
    %c0_i32_1 = arith.constant 0 : i32
    return %c0_i32, %c0_i32_0 : i32, i32
  }
  func.func @transform_3(%arg0: i32, %arg1: i32) -> (i32, i32, i32) {
    %c0_i32 = arith.constant 0 : i32
    %c0_i32_0 = arith.constant 0 : i32
    %c0_i32_1 = arith.constant 0 : i32
    return %arg0, %c0_i32, %c0_i32_0 : i32, i32, i32
  }
}

</mosaic_0001>

<llo_original>
// kernel: tpu_custom_call.1
$region0: #{tpu_custom_call.1}
  #allocation0 [shape = 'u32[]', space=smem, size = 0x4, offset = 0x4, fixed_abs, tag = 'smem constant byte address 0x4 - core index']
  #allocation1 [shape = 'u32[72,128]{1,0:T(1,128)}', space=vmem, size = 0x9000, scoped, tag = 'internal scratch']
  %s0 = inlined_call_operand.vmem [shape: f32[192,16], index: 0, kind: input, shape index: {}]
  %s1 = inlined_call_operand.vmem [shape: f32[192,16], index: 1, kind: input, shape index: {}]
  %s2 = inlined_call_operand.vmem [shape: f32[16,10], index: 2, kind: input, shape index: {}]
  %s3 = inlined_call_operand.hbm [shape: f32[1,1,1], index: 3, kind: output, shape index: {}]
  %s4 = sld [smem:[#allocation0]]
  $region26: #{tpu_custom_call.1} parent=0
    _
  %s6 = ssub.s32 1, %s4
  %s7 = scalar_select 0, %s6, %s4
  $region1: #{tpu_custom_call.1} parent=0
    #allocation2 [shape = 'u8[512]{0}', space=vmem, size = 0x400, scoped, tag = 'output window, operand 0, single buffered']
    #allocation3 [shape = 's32[1]{0}', space=sflag, size = 0x4, scoped, tag = 'scoped memory for tpu_custom_call.1']
    %8 = vsyncpa [#allocation3], 0
    // Predicated region
    $region2: #{tpu_custom_call.1} parent=1 // pred_check
      _
    $region3: #{tpu_custom_call.1} parent=1 // pred_check_branch
      %10 = sbr.rel (0) target = $region5
    $region4: #{tpu_custom_call.1} parent=1 // pred_region
      %s11 = sadd.s32 0, 0
      %s12 = smul.u32 24, %s11
      %p13 = scmp.lt.s32.totalorder %s12, 23
      %s14 = scalar_select %p13, %s12, 23
      %s15 = smul.addr %s14, 8
      %s16 = scalar_lea.vmem %s0, %s15
      %s17 = sadd.s32 0, 0
      %s18 = smul.u32 24, %s17
    $region5: #{tpu_custom_call.1} parent=1 // pred_fallthru
      _
    // Predicated region
    $region6: #{tpu_custom_call.1} parent=1 // pred_check
      _
    $region7: #{tpu_custom_call.1} parent=1 // pred_check_branch
      %20 = sbr.rel (0) target = $region9
    $region8: #{tpu_custom_call.1} parent=1 // pred_region
      %s21 = sadd.s32 0, 0
      %s22 = smul.u32 24, %s21
      %p23 = scmp.lt.s32.totalorder %s22, 23
      %s24 = scalar_select %p23, %s22, 23
      %s25 = smul.addr %s24, 8
      %s26 = scalar_lea.vmem %s1, %s25
      %s27 = sadd.s32 0, 0
      %s28 = smul.u32 24, %s27
    $region9: #{tpu_custom_call.1} parent=1 // pred_fallthru
      _
    // Predicated region
    $region10: #{tpu_custom_call.1} parent=1 // pred_check
      _
    $region11: #{tpu_custom_call.1} parent=1 // pred_check_branch
      %30 = sbr.rel (0) target = $region13
    $region12: #{tpu_custom_call.1} parent=1 // pred_region
      _
    $region13: #{tpu_custom_call.1} parent=1 // pred_fallthru
      _
    %s31 = sadd.s32 0, 0
    %s32 = smul.u32 24, %s31
    %p33 = scmp.lt.s32.totalorder %s32, 23
    %s34 = scalar_select %p33, %s32, 23
    %s35 = smul.addr %s34, 8
    %s36 = scalar_lea.vmem %s0, %s35
    %s37 = sadd.s32 0, 0
    %s38 = smul.u32 24, %s37
    %p39 = scmp.lt.s32.totalorder %s38, 23
    %s40 = scalar_select %p39, %s38, 23
    %s41 = smul.addr %s40, 8
    %s42 = scalar_lea.vmem %s1, %s41
    %s43 = sadd.s32 0, 0
    %s44 = smul.u32 24, %s43
    %p45 = scmp.lt.s32.totalorder %s44, 23
    %s46 = scalar_select %p45, %s44, 23
    %s47 = smul.addr %s46, 8
    %s48 = scalar_lea.vmem %s0, %s47
    %s49 = sadd.s32 0, 0
    %s50 = smul.u32 24, %s49
    %s51 = sadd.s32 0, 0
    %s52 = smul.u32 24, %s51
    %p53 = scmp.lt.s32.totalorder %s52, 23
    %s54 = scalar_select %p53, %s52, 23
    %s55 = smul.addr %s54, 8
    %s56 = scalar_lea.vmem %s1, %s55
    %s57 = sadd.s32 0, 0
    %s58 = smul.u32 24, %s57
    %p59 = scmp.eq.s32.totalorder 0, 0
    // Predicated region
    $region14: #{tpu_custom_call.1} parent=1 // pred_check
      %p60 = pneg %p59
    $region15: #{tpu_custom_call.1} parent=1 // pred_check_branch
      %62 = sbr.rel (%p60) target = $region17
    $region16: #{tpu_custom_call.1} parent=1 // pred_region
      %vm63 = vcmask 0
      %64 = vst.msk [vmem:[#allocation2] sm:$0x1] %vm63, 0.0
    $region17: #{tpu_custom_call.1} parent=1 // pred_fallthru
      _
    %v65 = vld [vmem:[%s48] sm:$0xff]
    %v66 = vld [vmem:[%s48 + $0x8] sm:$0xff]
    %v67 = vld [vmem:[%s48 + $0x10] sm:$0xff]
    %v68 = vld [vmem:[%s48 + $0x18] sm:$0xff]
    %v69 = vld [vmem:[%s48 + $0x20] sm:$0xff]
    %v70 = vld [vmem:[%s48 + $0x28] sm:$0xff]
    %v71 = vld [vmem:[%s48 + $0x30] sm:$0xff]
    %v72 = vld [vmem:[%s48 + $0x38] sm:$0xff]
    %v73 = vld [vmem:[%s48 + $0x40] sm:$0xff]
    %v74 = vld [vmem:[%s48 + $0x48] sm:$0xff]
    %v75 = vld [vmem:[%s48 + $0x50] sm:$0xff]
    %v76 = vld [vmem:[%s48 + $0x58] sm:$0xff]
    %v77 = vld [vmem:[%s48 + $0x60] sm:$0xff]
    %v78 = vld [vmem:[%s48 + $0x68] sm:$0xff]
    %v79 = vld [vmem:[%s48 + $0x70] sm:$0xff]
    %v80 = vld [vmem:[%s48 + $0x78] sm:$0xff]
    %v81 = vld [vmem:[%s48 + $0x80] sm:$0xff]
    %v82 = vld [vmem:[%s48 + $0x88] sm:$0xff]
    %v83 = vld [vmem:[%s48 + $0x90] sm:$0xff]
    %v84 = vld [vmem:[%s48 + $0x98] sm:$0xff]
    %v85 = vld [vmem:[%s48 + $0xa0] sm:$0xff]
    %v86 = vld [vmem:[%s48 + $0xa8] sm:$0xff]
    %v87 = vld [vmem:[%s48 + $0xb0] sm:$0xff]
    %v88 = vld [vmem:[%s48 + $0xb8] sm:$0xff]
    %v89 = vld [vmem:[%s56] sm:$0xff]
    %v90 = vld [vmem:[%s56 + $0x8] sm:$0xff]
    %v91 = vld [vmem:[%s56 + $0x10] sm:$0xff]
    %v92 = vld [vmem:[%s56 + $0x18] sm:$0xff]
    %v93 = vld [vmem:[%s56 + $0x20] sm:$0xff]
    %v94 = vld [vmem:[%s56 + $0x28] sm:$0xff]
    %v95 = vld [vmem:[%s56 + $0x30] sm:$0xff]
    %v96 = vld [vmem:[%s56 + $0x38] sm:$0xff]
    %v97 = vld [vmem:[%s56 + $0x40] sm:$0xff]
    %v98 = vld [vmem:[%s56 + $0x48] sm:$0xff]
    %v99 = vld [vmem:[%s56 + $0x50] sm:$0xff]
    %v100 = vld [vmem:[%s56 + $0x58] sm:$0xff]
    %v101 = vld [vmem:[%s56 + $0x60] sm:$0xff]
    %v102 = vld [vmem:[%s56 + $0x68] sm:$0xff]
    %v103 = vld [vmem:[%s56 + $0x70] sm:$0xff]
    %v104 = vld [vmem:[%s56 + $0x78] sm:$0xff]
    %v105 = vld [vmem:[%s56 + $0x80] sm:$0xff]
    %v106 = vld [vmem:[%s56 + $0x88] sm:$0xff]
    %v107 = vld [vmem:[%s56 + $0x90] sm:$0xff]
    %v108 = vld [vmem:[%s56 + $0x98] sm:$0xff]
    %v109 = vld [vmem:[%s56 + $0xa0] sm:$0xff]
    %v110 = vld [vmem:[%s56 + $0xa8] sm:$0xff]
    %v111 = vld [vmem:[%s56 + $0xb0] sm:$0xff]
    %v112 = vld [vmem:[%s56 + $0xb8] sm:$0xff]
    %v113 = vsub.f32 %v65, %v89
    %v114 = vsub.f32 %v66, %v90
    %v115 = vsub.f32 %v67, %v91
    %v116 = vsub.f32 %v68, %v92
    %v117 = vsub.f32 %v69, %v93
    %v118 = vsub.f32 %v70, %v94
    %v119 = vsub.f32 %v71, %v95
    %v120 = vsub.f32 %v72, %v96
    %v121 = vsub.f32 %v73, %v97
    %v122 = vsub.f32 %v74, %v98
    %v123 = vsub.f32 %v75, %v99
    %v124 = vsub.f32 %v76, %v100
    %v125 = vsub.f32 %v77, %v101
    %v126 = vsub.f32 %v78, %v102
    %v127 = vsub.f32 %v79, %v103
    %v128 = vsub.f32 %v80, %v104
    %v129 = vsub.f32 %v81, %v105
    %v130 = vsub.f32 %v82, %v106
    %v131 = vsub.f32 %v83, %v107
    %v132 = vsub.f32 %v84, %v108
    %v133 = vsub.f32 %v85, %v109
    %v134 = vsub.f32 %v86, %v110
    %v135 = vsub.f32 %v87, %v111
    %v136 = vsub.f32 %v88, %v112
    %v137 = vand.u32 2147483647, %v113
    %v138 = vand.u32 2147483647, %v114
    %v139 = vand.u32 2147483647, %v115
    %v140 = vand.u32 2147483647, %v116
    %v141 = vand.u32 2147483647, %v117
    %v142 = vand.u32 2147483647, %v118
    %v143 = vand.u32 2147483647, %v119
    %v144 = vand.u32 2147483647, %v120
    %v145 = vand.u32 2147483647, %v121
    %v146 = vand.u32 2147483647, %v122
    %v147 = vand.u32 2147483647, %v123
    %v148 = vand.u32 2147483647, %v124
    %v149 = vand.u32 2147483647, %v125
    %v150 = vand.u32 2147483647, %v126
    %v151 = vand.u32 2147483647, %v127
    %v152 = vand.u32 2147483647, %v128
    %v153 = vand.u32 2147483647, %v129
    %v154 = vand.u32 2147483647, %v130
    %v155 = vand.u32 2147483647, %v131
    %v156 = vand.u32 2147483647, %v132
    %v157 = vand.u32 2147483647, %v133
    %v158 = vand.u32 2147483647, %v134
    %v159 = vand.u32 2147483647, %v135
    %v160 = vand.u32 2147483647, %v136
    %vm161 = vcmask 130048
    %v162 = vsel %vm161, %v137, 0.0
    %v163 = vsel %vm161, %v138, 0.0
    %v164 = vadd.f32 %v162, %v163
    %v165 = vsel %vm161, %v139, 0.0
    %v166 = vadd.f32 %v164, %v165
    %v167 = vsel %vm161, %v140, 0.0
    %v168 = vadd.f32 %v166, %v167
    %v169 = vsel %vm161, %v141, 0.0
    %v170 = vadd.f32 %v168, %v169
    %v171 = vsel %vm161, %v142, 0.0
    %v172 = vadd.f32 %v170, %v171
    %v173 = vsel %vm161, %v143, 0.0
    %v174 = vadd.f32 %v172, %v173
    %v175 = vsel %vm161, %v144, 0.0
    %v176 = vadd.f32 %v174, %v175
    %v177 = vsel %vm161, %v145, 0.0
    %v178 = vadd.f32 %v176, %v177
    %v179 = vsel %vm161, %v146, 0.0
    %v180 = vadd.f32 %v178, %v179
    %v181 = vsel %vm161, %v147, 0.0
    %v182 = vadd.f32 %v180, %v181
    %v183 = vsel %vm161, %v148, 0.0
    %v184 = vadd.f32 %v182, %v183
    %v185 = vsel %vm161, %v149, 0.0
    %v186 = vadd.f32 %v184, %v185
    %v187 = vsel %vm161, %v150, 0.0
    %v188 = vadd.f32 %v186, %v187
    %v189 = vsel %vm161, %v151, 0.0
    %v190 = vadd.f32 %v188, %v189
    %v191 = vsel %vm161, %v152, 0.0
    %v192 = vadd.f32 %v190, %v191
    %v193 = vsel %vm161, %v153, 0.0
    %v194 = vadd.f32 %v192, %v193
    %v195 = vsel %vm161, %v154, 0.0
    %v196 = vadd.f32 %v194, %v195
    %v197 = vsel %vm161, %v155, 0.0
    %v198 = vadd.f32 %v196, %v197
    %v199 = vsel %vm161, %v156, 0.0
    %v200 = vadd.f32 %v198, %v199
    %v201 = vsel %vm161, %v157, 0.0
    %v202 = vadd.f32 %v200, %v201
    %v203 = vsel %vm161, %v158, 0.0
    %v204 = vadd.f32 %v202, %v203
    %v205 = vsel %vm161, %v159, 0.0
    %v206 = vadd.f32 %v204, %v205
    %v207 = vsel %vm161, %v160, 0.0
    %v208 = vadd.f32 %v206, %v207
    %209 = vadd.xlane.f32.xlu0 %v208
    %v210 = vpop.xlane.xlu0 %209
    %v211 = vrot.slane %v210, 4
    %v212 = vadd.f32 %v210, %v211
    %v213 = vrot.slane %v212, 2
    %v214 = vadd.f32 %v212, %v213
    %v215 = vrot.slane %v214, 1
    %v216 = vadd.f32 %v214, %v215
    %s217 = vtos %v216
    %v218 = vld [vmem:[%s2] sm:$0xff]
    %v219 = vld [vmem:[%s2 + $0x8] sm:$0xff]
    %v221 = vsel %vm161, %v113, 0
    %v224 = vsel %vm161, %v114, 0
    %v227 = vsel %vm161, %v115, 0
    %v230 = vsel %vm161, %v116, 0
    %v233 = vsel %vm161, %v117, 0
    %v236 = vsel %vm161, %v118, 0
    %v239 = vsel %vm161, %v119, 0
    %v242 = vsel %vm161, %v120, 0
    %v245 = vsel %vm161, %v121, 0
    %v248 = vsel %vm161, %v122, 0
    %v251 = vsel %vm161, %v123, 0
    %v254 = vsel %vm161, %v124, 0
    %v257 = vsel %vm161, %v125, 0
    %v260 = vsel %vm161, %v126, 0
    %v263 = vsel %vm161, %v127, 0
    %v266 = vsel %vm161, %v128, 0
    %v269 = vsel %vm161, %v129, 0
    %v272 = vsel %vm161, %v130, 0
    %v275 = vsel %vm161, %v131, 0
    %v278 = vsel %vm161, %v132, 0
    %v281 = vsel %vm161, %v133, 0
    %v284 = vsel %vm161, %v134, 0
    %v287 = vsel %vm161, %v135, 0
    %v290 = vsel %vm161, %v136, 0
    %292 = vmatpush.msra.mxu0 0.0
    %293 = vmatpush.msra.mxu0 0.0
    %294 = vmatpush.msra.mxu0 0.0
    %295 = vmatpush.msra.mxu0 0.0
    %296 = vmatpush.msra.mxu0 0.0
    %297 = vmatpush.msra.mxu0 0.0
    %298 = vmatpush.msra.mxu0 0.0
    %299 = vmatpush.msra.mxu0 0.0
    %300 = vmatpush.msra.mxu0 0.0
    %301 = vmatpush.msra.mxu0 0.0
    %302 = vmatpush.msra.mxu0 0.0
    %303 = vmatpush.msra.mxu0 0.0
    %304 = vmatpush.msra.mxu0 0.0
    %305 = vmatpush.msra.mxu0 0.0
    %306 = vmatpush.msra.mxu0 %v219
    %307 = vmatpush.msra.mxu0 %v218
    %308 = vmatmul.f32.gmra.mxu0 %v221
    %v309 = vpop.f32.mrf.mxu0
    %v310 = vadd.f32 0.0, %v309
    %311 = vmatmul.f32.gmra.mxu0 %v224
    %v312 = vpop.f32.mrf.mxu0
    %v313 = vadd.f32 0.0, %v312
    %314 = vmatmul.f32.gmra.mxu0 %v227
    %v315 = vpop.f32.mrf.mxu0
    %v316 = vadd.f32 0.0, %v315
    %317 = vmatmul.f32.gmra.mxu0 %v230
    %v318 = vpop.f32.mrf.mxu0
    %v319 = vadd.f32 0.0, %v318
    %320 = vmatmul.f32.gmra.mxu0 %v233
    %v321 = vpop.f32.mrf.mxu0
    %v322 = vadd.f32 0.0, %v321
    %323 = vmatmul.f32.gmra.mxu0 %v236
    %v324 = vpop.f32.mrf.mxu0
    %v325 = vadd.f32 0.0, %v324
    %326 = vmatmul.f32.gmra.mxu0 %v239
    %v327 = vpop.f32.mrf.mxu0
    %v328 = vadd.f32 0.0, %v327
    %329 = vmatmul.f32.gmra.mxu0 %v242
    %v330 = vpop.f32.mrf.mxu0
    %v331 = vadd.f32 0.0, %v330
    %332 = vmatmul.f32.gmra.mxu0 %v245
    %v333 = vpop.f32.mrf.mxu0
    %v334 = vadd.f32 0.0, %v333
    %335 = vmatmul.f32.gmra.mxu0 %v248
    %v336 = vpop.f32.mrf.mxu0
    %v337 = vadd.f32 0.0, %v336
    %338 = vmatmul.f32.gmra.mxu0 %v251
    %v339 = vpop.f32.mrf.mxu0
    %v340 = vadd.f32 0.0, %v339
    %341 = vmatmul.f32.gmra.mxu0 %v254
    %v342 = vpop.f32.mrf.mxu0
    %v343 = vadd.f32 0.0, %v342
    %344 = vmatmul.f32.gmra.mxu0 %v257
    %v345 = vpop.f32.mrf.mxu0
    %v346 = vadd.f32 0.0, %v345
    %347 = vmatmul.f32.gmra.mxu0 %v260
    %v348 = vpop.f32.mrf.mxu0
    %v349 = vadd.f32 0.0, %v348
    %350 = vmatmul.f32.gmra.mxu0 %v263
    %v351 = vpop.f32.mrf.mxu0
    %v352 = vadd.f32 0.0, %v351
    %353 = vmatmul.f32.gmra.mxu0 %v266
    %v354 = vpop.f32.mrf.mxu0
    %v355 = vadd.f32 0.0, %v354
    %356 = vmatmul.f32.gmra.mxu0 %v269
    %v357 = vpop.f32.mrf.mxu0
    %v358 = vadd.f32 0.0, %v357
    %359 = vmatmul.f32.gmra.mxu0 %v272
    %v360 = vpop.f32.mrf.mxu0
    %v361 = vadd.f32 0.0, %v360
    %362 = vmatmul.f32.gmra.mxu0 %v275
    %v363 = vpop.f32.mrf.mxu0
    %v364 = vadd.f32 0.0, %v363
    %365 = vmatmul.f32.gmra.mxu0 %v278
    %v366 = vpop.f32.mrf.mxu0
    %v367 = vadd.f32 0.0, %v366
    %368 = vmatmul.f32.gmra.mxu0 %v281
    %v369 = vpop.f32.mrf.mxu0
    %v370 = vadd.f32 0.0, %v369
    %371 = vmatmul.f32.gmra.mxu0 %v284
    %v372 = vpop.f32.mrf.mxu0
    %v373 = vadd.f32 0.0, %v372
    %374 = vmatmul.f32.gmra.mxu0 %v287
    %v375 = vpop.f32.mrf.mxu0
    %v376 = vadd.f32 0.0, %v375
    %377 = vmatmul.f32.gmra.mxu0 %v290
    %v378 = vpop.f32.mrf.mxu0
    %v379 = vadd.f32 0.0, %v378
    %380 = vdwg.mxu0
    %v381 = vlaneseq
    %v382 = vshrl.u32 %v381, 7
    %v383 = vadd.s32 %v382, 8
    %v384 = vadd.s32 %v382, 16
    %v385 = vadd.s32 %v382, 24
    %v386 = vadd.s32 %v382, 32
    %v387 = vadd.s32 %v382, 40
    %v388 = vadd.s32 %v382, 48
    %v389 = vadd.s32 %v382, 56
    %v390 = vadd.s32 %v382, 64
    %v391 = vadd.s32 %v382, 72
    %v392 = vadd.s32 %v382, 80
    %v393 = vadd.s32 %v382, 88
    %v394 = vadd.s32 %v382, 96
    %v395 = vadd.s32 %v382, 104
    %v396 = vadd.s32 %v382, 112
    %v397 = vadd.s32 %v382, 120
    %v398 = vadd.s32 %v382, 128
    %v399 = vadd.s32 %v382, 136
    %v400 = vadd.s32 %v382, 144
    %v401 = vadd.s32 %v382, 152
    %v402 = vadd.s32 %v382, 160
    %v403 = vadd.s32 %v382, 168
    %v404 = vadd.s32 %v382, 176
    %v405 = vadd.s32 %v382, 184
    %vm406 = vcmp.lt.s32.totalorder %v382, 0
    %v407 = vsub.s32 0, %v382
    %v408 = vsel %vm406, %v407, %v382
    %v409 = vshrl.u32 %v408, 4
    %v410 = vand.u32 %v408, 15
    %v411 = vsub.s32 0, %v410
    %v412 = vsel %vm406, %v411, %v410
    %vm413 = vcmp.lt.s32.totalorder %v383, 0
    %v414 = vsub.s32 0, %v383
    %v415 = vsel %vm413, %v414, %v383
    %v416 = vshrl.u32 %v415, 4
    %v417 = vand.u32 %v415, 15
    %v418 = vsub.s32 0, %v417
    %v419 = vsel %vm413, %v418, %v417
    %vm420 = vcmp.lt.s32.totalorder %v384, 0
    %v421 = vsub.s32 0, %v384
    %v422 = vsel %vm420, %v421, %v384
    %v423 = vshrl.u32 %v422, 4
    %v424 = vand.u32 %v422, 15
    %v425 = vsub.s32 0, %v424
    %v426 = vsel %vm420, %v425, %v424
    %vm427 = vcmp.lt.s32.totalorder %v385, 0
    %v428 = vsub.s32 0, %v385
    %v429 = vsel %vm427, %v428, %v385
    %v430 = vshrl.u32 %v429, 4
    %v431 = vand.u32 %v429, 15
    %v432 = vsub.s32 0, %v431
    %v433 = vsel %vm427, %v432, %v431
    %vm434 = vcmp.lt.s32.totalorder %v386, 0
    %v435 = vsub.s32 0, %v386
    %v436 = vsel %vm434, %v435, %v386
    %v437 = vshrl.u32 %v436, 4
    %v438 = vand.u32 %v436, 15
    %v439 = vsub.s32 0, %v438
    %v440 = vsel %vm434, %v439, %v438
    %vm441 = vcmp.lt.s32.totalorder %v387, 0
    %v442 = vsub.s32 0, %v387
    %v443 = vsel %vm441, %v442, %v387
    %v444 = vshrl.u32 %v443, 4
    %v445 = vand.u32 %v443, 15
    %v446 = vsub.s32 0, %v445
    %v447 = vsel %vm441, %v446, %v445
    %vm448 = vcmp.lt.s32.totalorder %v388, 0
    %v449 = vsub.s32 0, %v388
    %v450 = vsel %vm448, %v449, %v388
    %v451 = vshrl.u32 %v450, 4
    %v452 = vand.u32 %v450, 15
    %v453 = vsub.s32 0, %v452
    %v454 = vsel %vm448, %v453, %v452
    %vm455 = vcmp.lt.s32.totalorder %v389, 0
    %v456 = vsub.s32 0, %v389
    %v457 = vsel %vm455, %v456, %v389
    %v458 = vshrl.u32 %v457, 4
    %v459 = vand.u32 %v457, 15
    %v460 = vsub.s32 0, %v459
    %v461 = vsel %vm455, %v460, %v459
    %vm462 = vcmp.lt.s32.totalorder %v390, 0
    %v463 = vsub.s32 0, %v390
    %v464 = vsel %vm462, %v463, %v390
    %v465 = vshrl.u32 %v464, 4
    %v466 = vand.u32 %v464, 15
    %v467 = vsub.s32 0, %v466
    %v468 = vsel %vm462, %v467, %v466
    %vm469 = vcmp.lt.s32.totalorder %v391, 0
    %v470 = vsub.s32 0, %v391
    %v471 = vsel %vm469, %v470, %v391
    %v472 = vshrl.u32 %v471, 4
    %v473 = vand.u32 %v471, 15
    %v474 = vsub.s32 0, %v473
    %v475 = vsel %vm469, %v474, %v473
    %vm476 = vcmp.lt.s32.totalorder %v392, 0
    %v477 = vsub.s32 0, %v392
    %v478 = vsel %vm476, %v477, %v392
    %v479 = vshrl.u32 %v478, 4
    %v480 = vand.u32 %v478, 15
    %v481 = vsub.s32 0, %v480
    %v482 = vsel %vm476, %v481, %v480
    %vm483 = vcmp.lt.s32.totalorder %v393, 0
    %v484 = vsub.s32 0, %v393
    %v485 = vsel %vm483, %v484, %v393
    %v486 = vshrl.u32 %v485, 4
    %v487 = vand.u32 %v485, 15
    %v488 = vsub.s32 0, %v487
    %v489 = vsel %vm483, %v488, %v487
    %vm490 = vcmp.lt.s32.totalorder %v394, 0
    %v491 = vsub.s32 0, %v394
    %v492 = vsel %vm490, %v491, %v394
    %v493 = vshrl.u32 %v492, 4
    %v494 = vand.u32 %v492, 15
    %v495 = vsub.s32 0, %v494
    %v496 = vsel %vm490, %v495, %v494
    %vm497 = vcmp.lt.s32.totalorder %v395, 0
    %v498 = vsub.s32 0, %v395
    %v499 = vsel %vm497, %v498, %v395
    %v500 = vshrl.u32 %v499, 4
    %v501 = vand.u32 %v499, 15
    %v502 = vsub.s32 0, %v501
    %v503 = vsel %vm497, %v502, %v501
    %vm504 = vcmp.lt.s32.totalorder %v396, 0
    %v505 = vsub.s32 0, %v396
    %v506 = vsel %vm504, %v505, %v396
    %v507 = vshrl.u32 %v506, 4
    %v508 = vand.u32 %v506, 15
    %v509 = vsub.s32 0, %v508
    %v510 = vsel %vm504, %v509, %v508
    %vm511 = vcmp.lt.s32.totalorder %v397, 0
    %v512 = vsub.s32 0, %v397
    %v513 = vsel %vm511, %v512, %v397
    %v514 = vshrl.u32 %v513, 4
    %v515 = vand.u32 %v513, 15
    %v516 = vsub.s32 0, %v515
    %v517 = vsel %vm511, %v516, %v515
    %vm518 = vcmp.lt.s32.totalorder %v398, 0
    %v519 = vsub.s32 0, %v398
    %v520 = vsel %vm518, %v519, %v398
    %v521 = vshrl.u32 %v520, 4
    %v522 = vand.u32 %v520, 15
    %v523 = vsub.s32 0, %v522
    %v524 = vsel %vm518, %v523, %v522
    %vm525 = vcmp.lt.s32.totalorder %v399, 0
    %v526 = vsub.s32 0, %v399
    %v527 = vsel %vm525, %v526, %v399
    %v528 = vshrl.u32 %v527, 4
    %v529 = vand.u32 %v527, 15
    %v530 = vsub.s32 0, %v529
    %v531 = vsel %vm525, %v530, %v529
    %vm532 = vcmp.lt.s32.totalorder %v400, 0
    %v533 = vsub.s32 0, %v400
    %v534 = vsel %vm532, %v533, %v400
    %v535 = vshrl.u32 %v534, 4
    %v536 = vand.u32 %v534, 15
    %v537 = vsub.s32 0, %v536
    %v538 = vsel %vm532, %v537, %v536
    %vm539 = vcmp.lt.s32.totalorder %v401, 0
    %v540 = vsub.s32 0, %v401
    %v541 = vsel %vm539, %v540, %v401
    %v542 = vshrl.u32 %v541, 4
    %v543 = vand.u32 %v541, 15
    %v544 = vsub.s32 0, %v543
    %v545 = vsel %vm539, %v544, %v543
    %vm546 = vcmp.lt.s32.totalorder %v402, 0
    %v547 = vsub.s32 0, %v402
    %v548 = vsel %vm546, %v547, %v402
    %v549 = vshrl.u32 %v548, 4
    %v550 = vand.u32 %v548, 15
    %v551 = vsub.s32 0, %v550
    %v552 = vsel %vm546, %v551, %v550
    %vm553 = vcmp.lt.s32.totalorder %v403, 0
    %v554 = vsub.s32 0, %v403
    %v555 = vsel %vm553, %v554, %v403
    %v556 = vshrl.u32 %v555, 4
    %v557 = vand.u32 %v555, 15
    %v558 = vsub.s32 0, %v557
    %v559 = vsel %vm553, %v558, %v557
    %vm560 = vcmp.lt.s32.totalorder %v404, 0
    %v561 = vsub.s32 0, %v404
    %v562 = vsel %vm560, %v561, %v404
    %v563 = vshrl.u32 %v562, 4
    %v564 = vand.u32 %v562, 15
    %v565 = vsub.s32 0, %v564
    %v566 = vsel %vm560, %v565, %v564
    %vm567 = vcmp.lt.s32.totalorder %v405, 0
    %v568 = vsub.s32 0, %v405
    %v569 = vsel %vm567, %v568, %v405
    %v570 = vshrl.u32 %v569, 4
    %v571 = vand.u32 %v569, 15
    %v572 = vsub.s32 0, %v571
    %v573 = vsel %vm567, %v572, %v571
    %vm574 = vcmp.ne.s32.totalorder %v412, 0
    %vm575 = vcmp.ne.s32.totalorder %v419, 0
    %vm576 = vcmp.ne.s32.totalorder %v426, 0
    %vm577 = vcmp.ne.s32.totalorder %v433, 0
    %vm578 = vcmp.ne.s32.totalorder %v440, 0
    %vm579 = vcmp.ne.s32.totalorder %v447, 0
    %vm580 = vcmp.ne.s32.totalorder %v454, 0
    %vm581 = vcmp.ne.s32.totalorder %v461, 0
    %vm582 = vcmp.ne.s32.totalorder %v468, 0
    %vm583 = vcmp.ne.s32.totalorder %v475, 0
    %vm584 = vcmp.ne.s32.totalorder %v482, 0
    %vm585 = vcmp.ne.s32.totalorder %v489, 0
    %vm586 = vcmp.ne.s32.totalorder %v496, 0
    %vm587 = vcmp.ne.s32.totalorder %v503, 0
    %vm588 = vcmp.ne.s32.totalorder %v510, 0
    %vm589 = vcmp.ne.s32.totalorder %v517, 0
    %vm590 = vcmp.ne.s32.totalorder %v524, 0
    %vm591 = vcmp.ne.s32.totalorder %v531, 0
    %vm592 = vcmp.ne.s32.totalorder %v538, 0
    %vm593 = vcmp.ne.s32.totalorder %v545, 0
    %vm594 = vcmp.ne.s32.totalorder %v552, 0
    %vm595 = vcmp.ne.s32.totalorder %v559, 0
    %vm596 = vcmp.ne.s32.totalorder %v566, 0
    %vm597 = vcmp.ne.s32.totalorder %v573, 0
    %vm598 = vcmp.lt.s32.totalorder %v412, 0
    %vm599 = vcmp.lt.s32.totalorder %v419, 0
    %vm600 = vcmp.lt.s32.totalorder %v426, 0
    %vm601 = vcmp.lt.s32.totalorder %v433, 0
    %vm602 = vcmp.lt.s32.totalorder %v440, 0
    %vm603 = vcmp.lt.s32.totalorder %v447, 0
    %vm604 = vcmp.lt.s32.totalorder %v454, 0
    %vm605 = vcmp.lt.s32.totalorder %v461, 0
    %vm606 = vcmp.lt.s32.totalorder %v468, 0
    %vm607 = vcmp.lt.s32.totalorder %v475, 0
    %vm608 = vcmp.lt.s32.totalorder %v482, 0
    %vm609 = vcmp.lt.s32.totalorder %v489, 0
    %vm610 = vcmp.lt.s32.totalorder %v496, 0
    %vm611 = vcmp.lt.s32.totalorder %v503, 0
    %vm612 = vcmp.lt.s32.totalorder %v510, 0
    %vm613 = vcmp.lt.s32.totalorder %v517, 0
    %vm614 = vcmp.lt.s32.totalorder %v524, 0
    %vm615 = vcmp.lt.s32.totalorder %v531, 0
    %vm616 = vcmp.lt.s32.totalorder %v538, 0
    %vm617 = vcmp.lt.s32.totalorder %v545, 0
    %vm618 = vcmp.lt.s32.totalorder %v552, 0
    %vm619 = vcmp.lt.s32.totalorder %v559, 0
    %vm620 = vcmp.lt.s32.totalorder %v566, 0
    %vm621 = vcmp.lt.s32.totalorder %v573, 0
    %vm622 = vmand %vm598, %vm574
    %vm623 = vmand %vm599, %vm575
    %vm624 = vmand %vm600, %vm576
    %vm625 = vmand %vm601, %vm577
    %vm626 = vmand %vm602, %vm578
    %vm627 = vmand %vm603, %vm579
    %vm628 = vmand %vm604, %vm580
    %vm629 = vmand %vm605, %vm581
    %vm630 = vmand %vm606, %vm582
    %vm631 = vmand %vm607, %vm583
    %vm632 = vmand %vm608, %vm584
    %vm633 = vmand %vm609, %vm585
    %vm634 = vmand %vm610, %vm586
    %vm635 = vmand %vm611, %vm587
    %vm636 = vmand %vm612, %vm588
    %vm637 = vmand %vm613, %vm589
    %vm638 = vmand %vm614, %vm590
    %vm639 = vmand %vm615, %vm591
    %vm640 = vmand %vm616, %vm592
    %vm641 = vmand %vm617, %vm593
    %vm642 = vmand %vm618, %vm594
    %vm643 = vmand %vm619, %vm595
    %vm644 = vmand %vm620, %vm596
    %vm645 = vmand %vm621, %vm597
    %v646 = vadd.s32 %v412, 16
    %v647 = vadd.s32 %v419, 16
    %v648 = vadd.s32 %v426, 16
    %v649 = vadd.s32 %v433, 16
    %v650 = vadd.s32 %v440, 16
    %v651 = vadd.s32 %v447, 16
    %v652 = vadd.s32 %v454, 16
    %v653 = vadd.s32 %v461, 16
    %v654 = vadd.s32 %v468, 16
    %v655 = vadd.s32 %v475, 16
    %v656 = vadd.s32 %v482, 16
    %v657 = vadd.s32 %v489, 16
    %v658 = vadd.s32 %v496, 16
    %v659 = vadd.s32 %v503, 16
    %v660 = vadd.s32 %v510, 16
    %v661 = vadd.s32 %v517, 16
    %v662 = vadd.s32 %v524, 16
    %v663 = vadd.s32 %v531, 16
    %v664 = vadd.s32 %v538, 16
    %v665 = vadd.s32 %v545, 16
    %v666 = vadd.s32 %v552, 16
    %v667 = vadd.s32 %v559, 16
    %v668 = vadd.s32 %v566, 16
    %v669 = vadd.s32 %v573, 16
    %v670 = vsel %vm622, %v646, %v412
    %v671 = vsel %vm623, %v647, %v419
    %v672 = vsel %vm624, %v648, %v426
    %v673 = vsel %vm625, %v649, %v433
    %v674 = vsel %vm626, %v650, %v440
    %v675 = vsel %vm627, %v651, %v447
    %v676 = vsel %vm628, %v652, %v454
    %v677 = vsel %vm629, %v653, %v461
    %v678 = vsel %vm630, %v654, %v468
    %v679 = vsel %vm631, %v655, %v475
    %v680 = vsel %vm632, %v656, %v482
    %v681 = vsel %vm633, %v657, %v489
    %v682 = vsel %vm634, %v658, %v496
    %v683 = vsel %vm635, %v659, %v503
    %v684 = vsel %vm636, %v660, %v510
    %v685 = vsel %vm637, %v661, %v517
    %v686 = vsel %vm638, %v662, %v524
    %v687 = vsel %vm639, %v663, %v531
    %v688 = vsel %vm640, %v664, %v538
    %v689 = vsel %vm641, %v665, %v545
    %v690 = vsel %vm642, %v666, %v552
    %v691 = vsel %vm643, %v667, %v559
    %v692 = vsel %vm644, %v668, %v566
    %v693 = vsel %vm645, %v669, %v573
    %v694 = vlaneseq
    %v695 = vand.u32 %v694, 127
    %vm721 = vcmask 1046528
    %v722 = vrot.slane %v310, 1
    %v723 = vrot.slane %v313, 1
    %v724 = vsel %vm721, %v722, %v723
    %v725 = vrot.slane %v316, 1
    %v726 = vsel %vm721, %v723, %v725
    %v727 = vrot.slane %v319, 1
    %v728 = vsel %vm721, %v725, %v727
    %v729 = vrot.slane %v322, 1
    %v730 = vsel %vm721, %v727, %v729
    %v731 = vrot.slane %v325, 1
    %v732 = vsel %vm721, %v729, %v731
    %v733 = vrot.slane %v328, 1
    %v734 = vsel %vm721, %v731, %v733
    %v735 = vrot.slane %v331, 1
    %v736 = vsel %vm721, %v733, %v735
    %v737 = vrot.slane %v334, 1
    %v738 = vsel %vm721, %v735, %v737
    %v739 = vrot.slane %v337, 1
    %v740 = vsel %vm721, %v737, %v739
    %v741 = vrot.slane %v340, 1
    %v742 = vsel %vm721, %v739, %v741
    %v743 = vrot.slane %v343, 1
    %v744 = vsel %vm721, %v741, %v743
    %v745 = vrot.slane %v346, 1
    %v746 = vsel %vm721, %v743, %v745
    %v747 = vrot.slane %v349, 1
    %v748 = vsel %vm721, %v745, %v747
    %v749 = vrot.slane %v352, 1
    %v750 = vsel %vm721, %v747, %v749
    %v751 = vrot.slane %v355, 1
    %v752 = vsel %vm721, %v749, %v751
    %v753 = vrot.slane %v358, 1
    %v754 = vsel %vm721, %v751, %v753
    %v755 = vrot.slane %v361, 1
    %v756 = vsel %vm721, %v753, %v755
    %v757 = vrot.slane %v364, 1
    %v758 = vsel %vm721, %v755, %v757
    %v759 = vrot.slane %v367, 1
    %v760 = vsel %vm721, %v757, %v759
    %v761 = vrot.slane %v370, 1
    %v762 = vsel %vm721, %v759, %v761
    %v763 = vrot.slane %v373, 1
    %v764 = vsel %vm721, %v761, %v763
    %v765 = vrot.slane %v376, 1
    %v766 = vsel %vm721, %v763, %v765
    %v767 = vrot.slane %v379, 1
    %v768 = vsel %vm721, %v765, %v767
    %v769 = vrot.slane 0.0, 1
    %v770 = vsel %vm721, %v767, %v769
    %v795 = vadd.f32 %v310, %v724
    %v796 = vadd.f32 %v313, %v726
    %v797 = vadd.f32 %v316, %v728
    %v798 = vadd.f32 %v319, %v730
    %v799 = vadd.f32 %v322, %v732
    %v800 = vadd.f32 %v325, %v734
    %v801 = vadd.f32 %v328, %v736
    %v802 = vadd.f32 %v331, %v738
    %v803 = vadd.f32 %v334, %v740
    %v804 = vadd.f32 %v337, %v742
    %v805 = vadd.f32 %v340, %v744
    %v806 = vadd.f32 %v343, %v746
    %v807 = vadd.f32 %v346, %v748
    %v808 = vadd.f32 %v349, %v750
    %v809 = vadd.f32 %v352, %v752
    %v810 = vadd.f32 %v355, %v754
    %v811 = vadd.f32 %v358, %v756
    %v812 = vadd.f32 %v361, %v758
    %v813 = vadd.f32 %v364, %v760
    %v814 = vadd.f32 %v367, %v762
    %v815 = vadd.f32 %v370, %v764
    %v816 = vadd.f32 %v373, %v766
    %v817 = vadd.f32 %v376, %v768
    %v818 = vadd.f32 %v379, %v770
    %vm819 = vcmask 1045504
    %v820 = vrot.slane %v310, 2
    %v821 = vrot.slane %v313, 2
    %v822 = vsel %vm819, %v820, %v821
    %v823 = vrot.slane %v316, 2
    %v824 = vsel %vm819, %v821, %v823
    %v825 = vrot.slane %v319, 2
    %v826 = vsel %vm819, %v823, %v825
    %v827 = vrot.slane %v322, 2
    %v828 = vsel %vm819, %v825, %v827
    %v829 = vrot.slane %v325, 2
    %v830 = vsel %vm819, %v827, %v829
    %v831 = vrot.slane %v328, 2
    %v832 = vsel %vm819, %v829, %v831
    %v833 = vrot.slane %v331, 2
    %v834 = vsel %vm819, %v831, %v833
    %v835 = vrot.slane %v334, 2
    %v836 = vsel %vm819, %v833, %v835
    %v837 = vrot.slane %v337, 2
    %v838 = vsel %vm819, %v835, %v837
    %v839 = vrot.slane %v340, 2
    %v840 = vsel %vm819, %v837, %v839
    %v841 = vrot.slane %v343, 2
    %v842 = vsel %vm819, %v839, %v841
    %v843 = vrot.slane %v346, 2
    %v844 = vsel %vm819, %v841, %v843
    %v845 = vrot.slane %v349, 2
    %v846 = vsel %vm819, %v843, %v845
    %v847 = vrot.slane %v352, 2
    %v848 = vsel %vm819, %v845, %v847
    %v849 = vrot.slane %v355, 2
    %v850 = vsel %vm819, %v847, %v849
    %v851 = vrot.slane %v358, 2
    %v852 = vsel %vm819, %v849, %v851
    %v853 = vrot.slane %v361, 2
    %v854 = vsel %vm819, %v851, %v853
    %v855 = vrot.slane %v364, 2
    %v856 = vsel %vm819, %v853, %v855
    %v857 = vrot.slane %v367, 2
    %v858 = vsel %vm819, %v855, %v857
    %v859 = vrot.slane %v370, 2
    %v860 = vsel %vm819, %v857, %v859
    %v861 = vrot.slane %v373, 2
    %v862 = vsel %vm819, %v859, %v861
    %v863 = vrot.slane %v376, 2
    %v864 = vsel %vm819, %v861, %v863
    %v865 = vrot.slane %v379, 2
    %v866 = vsel %vm819, %v863, %v865
    %v867 = vrot.slane 0.0, 2
    %v868 = vsel %vm819, %v865, %v867
    %v893 = vadd.f32 %v795, %v822
    %v894 = vadd.f32 %v796, %v824
    %v895 = vadd.f32 %v797, %v826
    %v896 = vadd.f32 %v798, %v828
    %v897 = vadd.f32 %v799, %v830
    %v898 = vadd.f32 %v800, %v832
    %v899 = vadd.f32 %v801, %v834
    %v900 = vadd.f32 %v802, %v836
    %v901 = vadd.f32 %v803, %v838
    %v902 = vadd.f32 %v804, %v840
    %v903 = vadd.f32 %v805, %v842
    %v904 = vadd.f32 %v806, %v844
    %v905 = vadd.f32 %v807, %v846
    %v906 = vadd.f32 %v808, %v848
    %v907 = vadd.f32 %v809, %v850
    %v908 = vadd.f32 %v810, %v852
    %v909 = vadd.f32 %v811, %v854
    %v910 = vadd.f32 %v812, %v856
    %v911 = vadd.f32 %v813, %v858
    %v912 = vadd.f32 %v814, %v860
    %v913 = vadd.f32 %v815, %v862
    %v914 = vadd.f32 %v816, %v864
    %v915 = vadd.f32 %v817, %v866
    %v916 = vadd.f32 %v818, %v868
    %vm917 = vcmp.lt.s32.totalorder %v670, 0
    %v918 = vsub.s32 0, %v670
    %v919 = vsel %vm917, %v918, %v670
    %v920 = vand.u32 %v919, 65535
    %v921 = vshrl.u32 %v919, 16
    %v923 = vmul.u32 %v920, 43691
    %v924 = vmul.u32 %v920, 43690
    %v925 = vmul.u32 %v921, 43691
    %v926 = vmul.u32 %v921, 43690
    %v927 = vshll.u32 %v924, 16
    %v928 = vshrl.u32 %v924, 16
    %v929 = vshll.u32 %v925, 16
    %v930 = vshrl.u32 %v925, 16
    %vm931 = vc.u32 %v923, %v927
    %v932 = vsel %vm931, 1, 0
    %v933 = vadd.s32 %v923, %v927
    %v934 = vadd.s32 %v926, %v932
    %vm935 = vc.u32 %v933, %v929
    %v936 = vsel %vm935, 1, 0
    %v937 = vadd.s32 %v933, %v929
    %v938 = vadd.s32 %v934, %v936
    %v939 = vadd.s32 %v938, %v928
    %v940 = vadd.s32 %v939, %v930
    %v941 = vshrl.u32 %v940, 1
    %v942 = vmul.u32 %v941, 3
    %v943 = vsub.s32 %v919, %v942
    %v944 = vsub.s32 0, %v943
    %v945 = vsel %vm917, %v944, %v943
    %vm946 = vcmp.lt.s32.totalorder %v671, 0
    %v947 = vsub.s32 0, %v671
    %v948 = vsel %vm946, %v947, %v671
    %v949 = vand.u32 %v948, 65535
    %v950 = vshrl.u32 %v948, 16
    %v952 = vmul.u32 %v949, 43691
    %v953 = vmul.u32 %v949, 43690
    %v954 = vmul.u32 %v950, 43691
    %v955 = vmul.u32 %v950, 43690
    %v956 = vshll.u32 %v953, 16
    %v957 = vshrl.u32 %v953, 16
    %v958 = vshll.u32 %v954, 16
    %v959 = vshrl.u32 %v954, 16
    %vm960 = vc.u32 %v952, %v956
    %v961 = vsel %vm960, 1, 0
    %v962 = vadd.s32 %v952, %v956
    %v963 = vadd.s32 %v955, %v961
    %vm964 = vc.u32 %v962, %v958
    %v965 = vsel %vm964, 1, 0
    %v966 = vadd.s32 %v962, %v958
    %v967 = vadd.s32 %v963, %v965
    %v968 = vadd.s32 %v967, %v957
    %v969 = vadd.s32 %v968, %v959
    %v970 = vshrl.u32 %v969, 1
    %v971 = vmul.u32 %v970, 3
    %v972 = vsub.s32 %v948, %v971
    %v973 = vsub.s32 0, %v972
    %v974 = vsel %vm946, %v973, %v972
    %vm975 = vcmp.lt.s32.totalorder %v672, 0
    %v976 = vsub.s32 0, %v672
    %v977 = vsel %vm975, %v976, %v672
    %v978 = vand.u32 %v977, 65535
    %v979 = vshrl.u32 %v977, 16
    %v981 = vmul.u32 %v978, 43691
    %v982 = vmul.u32 %v978, 43690
    %v983 = vmul.u32 %v979, 43691
    %v984 = vmul.u32 %v979, 43690
    %v985 = vshll.u32 %v982, 16
    %v986 = vshrl.u32 %v982, 16
    %v987 = vshll.u32 %v983, 16
    %v988 = vshrl.u32 %v983, 16
    %vm989 = vc.u32 %v981, %v985
    %v990 = vsel %vm989, 1, 0
    %v991 = vadd.s32 %v981, %v985
    %v992 = vadd.s32 %v984, %v990
    %vm993 = vc.u32 %v991, %v987
    %v994 = vsel %vm993, 1, 0
    %v995 = vadd.s32 %v991, %v987
    %v996 = vadd.s32 %v992, %v994
    %v997 = vadd.s32 %v996, %v986
    %v998 = vadd.s32 %v997, %v988
    %v999 = vshrl.u32 %v998, 1
    %v1000 = vmul.u32 %v999, 3
    %v1001 = vsub.s32 %v977, %v1000
    %v1002 = vsub.s32 0, %v1001
    %v1003 = vsel %vm975, %v1002, %v1001
    %vm1004 = vcmp.lt.s32.totalorder %v673, 0
    %v1005 = vsub.s32 0, %v673
    %v1006 = vsel %vm1004, %v1005, %v673
    %v1007 = vand.u32 %v1006, 65535
    %v1008 = vshrl.u32 %v1006, 16
    %v1010 = vmul.u32 %v1007, 43691
    %v1011 = vmul.u32 %v1007, 43690
    %v1012 = vmul.u32 %v1008, 43691
    %v1013 = vmul.u32 %v1008, 43690
    %v1014 = vshll.u32 %v1011, 16
    %v1015 = vshrl.u32 %v1011, 16
    %v1016 = vshll.u32 %v1012, 16
    %v1017 = vshrl.u32 %v1012, 16
    %vm1018 = vc.u32 %v1010, %v1014
    %v1019 = vsel %vm1018, 1, 0
    %v1020 = vadd.s32 %v1010, %v1014
    %v1021 = vadd.s32 %v1013, %v1019
    %vm1022 = vc.u32 %v1020, %v1016
    %v1023 = vsel %vm1022, 1, 0
    %v1024 = vadd.s32 %v1020, %v1016
    %v1025 = vadd.s32 %v1021, %v1023
    %v1026 = vadd.s32 %v1025, %v1015
    %v1027 = vadd.s32 %v1026, %v1017
    %v1028 = vshrl.u32 %v1027, 1
    %v1029 = vmul.u32 %v1028, 3
    %v1030 = vsub.s32 %v1006, %v1029
    %v1031 = vsub.s32 0, %v1030
    %v1032 = vsel %vm1004, %v1031, %v1030
    %vm1033 = vcmp.lt.s32.totalorder %v674, 0
    %v1034 = vsub.s32 0, %v674
    %v1035 = vsel %vm1033, %v1034, %v674
    %v1036 = vand.u32 %v1035, 65535
    %v1037 = vshrl.u32 %v1035, 16
    %v1039 = vmul.u32 %v1036, 43691
    %v1040 = vmul.u32 %v1036, 43690
    %v1041 = vmul.u32 %v1037, 43691
    %v1042 = vmul.u32 %v1037, 43690
    %v1043 = vshll.u32 %v1040, 16
    %v1044 = vshrl.u32 %v1040, 16
    %v1045 = vshll.u32 %v1041, 16
    %v1046 = vshrl.u32 %v1041, 16
    %vm1047 = vc.u32 %v1039, %v1043
    %v1048 = vsel %vm1047, 1, 0
    %v1049 = vadd.s32 %v1039, %v1043
    %v1050 = vadd.s32 %v1042, %v1048
    %vm1051 = vc.u32 %v1049, %v1045
    %v1052 = vsel %vm1051, 1, 0
    %v1053 = vadd.s32 %v1049, %v1045
    %v1054 = vadd.s32 %v1050, %v1052
    %v1055 = vadd.s32 %v1054, %v1044
    %v1056 = vadd.s32 %v1055, %v1046
    %v1057 = vshrl.u32 %v1056, 1
    %v1058 = vmul.u32 %v1057, 3
    %v1059 = vsub.s32 %v1035, %v1058
    %v1060 = vsub.s32 0, %v1059
    %v1061 = vsel %vm1033, %v1060, %v1059
    %vm1062 = vcmp.lt.s32.totalorder %v675, 0
    %v1063 = vsub.s32 0, %v675
    %v1064 = vsel %vm1062, %v1063, %v675
    %v1065 = vand.u32 %v1064, 65535
    %v1066 = vshrl.u32 %v1064, 16
    %v1068 = vmul.u32 %v1065, 43691
    %v1069 = vmul.u32 %v1065, 43690
    %v1070 = vmul.u32 %v1066, 43691
    %v1071 = vmul.u32 %v1066, 43690
    %v1072 = vshll.u32 %v1069, 16
    %v1073 = vshrl.u32 %v1069, 16
    %v1074 = vshll.u32 %v1070, 16
    %v1075 = vshrl.u32 %v1070, 16
    %vm1076 = vc.u32 %v1068, %v1072
    %v1077 = vsel %vm1076, 1, 0
    %v1078 = vadd.s32 %v1068, %v1072
    %v1079 = vadd.s32 %v1071, %v1077
    %vm1080 = vc.u32 %v1078, %v1074
    %v1081 = vsel %vm1080, 1, 0
    %v1082 = vadd.s32 %v1078, %v1074
    %v1083 = vadd.s32 %v1079, %v1081
    %v1084 = vadd.s32 %v1083, %v1073
    %v1085 = vadd.s32 %v1084, %v1075
    %v1086 = vshrl.u32 %v1085, 1
    %v1087 = vmul.u32 %v1086, 3
    %v1088 = vsub.s32 %v1064, %v1087
    %v1089 = vsub.s32 0, %v1088
    %v1090 = vsel %vm1062, %v1089, %v1088
    %vm1091 = vcmp.lt.s32.totalorder %v676, 0
    %v1092 = vsub.s32 0, %v676
    %v1093 = vsel %vm1091, %v1092, %v676
    %v1094 = vand.u32 %v1093, 65535
    %v1095 = vshrl.u32 %v1093, 16
    %v1097 = vmul.u32 %v1094, 43691
    %v1098 = vmul.u32 %v1094, 43690
    %v1099 = vmul.u32 %v1095, 43691
    %v1100 = vmul.u32 %v1095, 43690
    %v1101 = vshll.u32 %v1098, 16
    %v1102 = vshrl.u32 %v1098, 16
    %v1103 = vshll.u32 %v1099, 16
    %v1104 = vshrl.u32 %v1099, 16
    %vm1105 = vc.u32 %v1097, %v1101
    %v1106 = vsel %vm1105, 1, 0
    %v1107 = vadd.s32 %v1097, %v1101
    %v1108 = vadd.s32 %v1100, %v1106
    %vm1109 = vc.u32 %v1107, %v1103
    %v1110 = vsel %vm1109, 1, 0
    %v1111 = vadd.s32 %v1107, %v1103
    %v1112 = vadd.s32 %v1108, %v1110
    %v1113 = vadd.s32 %v1112, %v1102
    %v1114 = vadd.s32 %v1113, %v1104
    %v1115 = vshrl.u32 %v1114, 1
    %v1116 = vmul.u32 %v1115, 3
    %v1117 = vsub.s32 %v1093, %v1116
    %v1118 = vsub.s32 0, %v1117
    %v1119 = vsel %vm1091, %v1118, %v1117
    %vm1120 = vcmp.lt.s32.totalorder %v677, 0
    %v1121 = vsub.s32 0, %v677
    %v1122 = vsel %vm1120, %v1121, %v677
    %v1123 = vand.u32 %v1122, 65535
    %v1124 = vshrl.u32 %v1122, 16
    %v1126 = vmul.u32 %v1123, 43691
    %v1127 = vmul.u32 %v1123, 43690
    %v1128 = vmul.u32 %v1124, 43691
    %v1129 = vmul.u32 %v1124, 43690
    %v1130 = vshll.u32 %v1127, 16
    %v1131 = vshrl.u32 %v1127, 16
    %v1132 = vshll.u32 %v1128, 16
    %v1133 = vshrl.u32 %v1128, 16
    %vm1134 = vc.u32 %v1126, %v1130
    %v1135 = vsel %vm1134, 1, 0
    %v1136 = vadd.s32 %v1126, %v1130
    %v1137 = vadd.s32 %v1129, %v1135
    %vm1138 = vc.u32 %v1136, %v1132
    %v1139 = vsel %vm1138, 1, 0
    %v1140 = vadd.s32 %v1136, %v1132
    %v1141 = vadd.s32 %v1137, %v1139
    %v1142 = vadd.s32 %v1141, %v1131
    %v1143 = vadd.s32 %v1142, %v1133
    %v1144 = vshrl.u32 %v1143, 1
    %v1145 = vmul.u32 %v1144, 3
    %v1146 = vsub.s32 %v1122, %v1145
    %v1147 = vsub.s32 0, %v1146
    %v1148 = vsel %vm1120, %v1147, %v1146
    %vm1149 = vcmp.lt.s32.totalorder %v678, 0
    %v1150 = vsub.s32 0, %v678
    %v1151 = vsel %vm1149, %v1150, %v678
    %v1152 = vand.u32 %v1151, 65535
    %v1153 = vshrl.u32 %v1151, 16
    %v1155 = vmul.u32 %v1152, 43691
    %v1156 = vmul.u32 %v1152, 43690
    %v1157 = vmul.u32 %v1153, 43691
    %v1158 = vmul.u32 %v1153, 43690
    %v1159 = vshll.u32 %v1156, 16
    %v1160 = vshrl.u32 %v1156, 16
    %v1161 = vshll.u32 %v1157, 16
    %v1162 = vshrl.u32 %v1157, 16
    %vm1163 = vc.u32 %v1155, %v1159
    %v1164 = vsel %vm1163, 1, 0
    %v1165 = vadd.s32 %v1155, %v1159
    %v1166 = vadd.s32 %v1158, %v1164
    %vm1167 = vc.u32 %v1165, %v1161
    %v1168 = vsel %vm1167, 1, 0
    %v1169 = vadd.s32 %v1165, %v1161
    %v1170 = vadd.s32 %v1166, %v1168
    %v1171 = vadd.s32 %v1170, %v1160
    %v1172 = vadd.s32 %v1171, %v1162
    %v1173 = vshrl.u32 %v1172, 1
    %v1174 = vmul.u32 %v1173, 3
    %v1175 = vsub.s32 %v1151, %v1174
    %v1176 = vsub.s32 0, %v1175
    %v1177 = vsel %vm1149, %v1176, %v1175
    %vm1178 = vcmp.lt.s32.totalorder %v679, 0
    %v1179 = vsub.s32 0, %v679
    %v1180 = vsel %vm1178, %v1179, %v679
    %v1181 = vand.u32 %v1180, 65535
    %v1182 = vshrl.u32 %v1180, 16
    %v1184 = vmul.u32 %v1181, 43691
    %v1185 = vmul.u32 %v1181, 43690
    %v1186 = vmul.u32 %v1182, 43691
    %v1187 = vmul.u32 %v1182, 43690
    %v1188 = vshll.u32 %v1185, 16
    %v1189 = vshrl.u32 %v1185, 16
    %v1190 = vshll.u32 %v1186, 16
    %v1191 = vshrl.u32 %v1186, 16
    %vm1192 = vc.u32 %v1184, %v1188
    %v1193 = vsel %vm1192, 1, 0
    %v1194 = vadd.s32 %v1184, %v1188
    %v1195 = vadd.s32 %v1187, %v1193
    %vm1196 = vc.u32 %v1194, %v1190
    %v1197 = vsel %vm1196, 1, 0
    %v1198 = vadd.s32 %v1194, %v1190
    %v1199 = vadd.s32 %v1195, %v1197
    %v1200 = vadd.s32 %v1199, %v1189
    %v1201 = vadd.s32 %v1200, %v1191
    %v1202 = vshrl.u32 %v1201, 1
    %v1203 = vmul.u32 %v1202, 3
    %v1204 = vsub.s32 %v1180, %v1203
    %v1205 = vsub.s32 0, %v1204
    %v1206 = vsel %vm1178, %v1205, %v1204
    %vm1207 = vcmp.lt.s32.totalorder %v680, 0
    %v1208 = vsub.s32 0, %v680
    %v1209 = vsel %vm1207, %v1208, %v680
    %v1210 = vand.u32 %v1209, 65535
    %v1211 = vshrl.u32 %v1209, 16
    %v1213 = vmul.u32 %v1210, 43691
    %v1214 = vmul.u32 %v1210, 43690
    %v1215 = vmul.u32 %v1211, 43691
    %v1216 = vmul.u32 %v1211, 43690
    %v1217 = vshll.u32 %v1214, 16
    %v1218 = vshrl.u32 %v1214, 16
    %v1219 = vshll.u32 %v1215, 16
    %v1220 = vshrl.u32 %v1215, 16
    %vm1221 = vc.u32 %v1213, %v1217
    %v1222 = vsel %vm1221, 1, 0
    %v1223 = vadd.s32 %v1213, %v1217
    %v1224 = vadd.s32 %v1216, %v1222
    %vm1225 = vc.u32 %v1223, %v1219
    %v1226 = vsel %vm1225, 1, 0
    %v1227 = vadd.s32 %v1223, %v1219
    %v1228 = vadd.s32 %v1224, %v1226
    %v1229 = vadd.s32 %v1228, %v1218
    %v1230 = vadd.s32 %v1229, %v1220
    %v1231 = vshrl.u32 %v1230, 1
    %v1232 = vmul.u32 %v1231, 3
    %v1233 = vsub.s32 %v1209, %v1232
    %v1234 = vsub.s32 0, %v1233
    %v1235 = vsel %vm1207, %v1234, %v1233
    %vm1236 = vcmp.lt.s32.totalorder %v681, 0
    %v1237 = vsub.s32 0, %v681
    %v1238 = vsel %vm1236, %v1237, %v681
    %v1239 = vand.u32 %v1238, 65535
    %v1240 = vshrl.u32 %v1238, 16
    %v1242 = vmul.u32 %v1239, 43691
    %v1243 = vmul.u32 %v1239, 43690
    %v1244 = vmul.u32 %v1240, 43691
    %v1245 = vmul.u32 %v1240, 43690
    %v1246 = vshll.u32 %v1243, 16
    %v1247 = vshrl.u32 %v1243, 16
    %v1248 = vshll.u32 %v1244, 16
    %v1249 = vshrl.u32 %v1244, 16
    %vm1250 = vc.u32 %v1242, %v1246
    %v1251 = vsel %vm1250, 1, 0
    %v1252 = vadd.s32 %v1242, %v1246
    %v1253 = vadd.s32 %v1245, %v1251
    %vm1254 = vc.u32 %v1252, %v1248
    %v1255 = vsel %vm1254, 1, 0
    %v1256 = vadd.s32 %v1252, %v1248
    %v1257 = vadd.s32 %v1253, %v1255
    %v1258 = vadd.s32 %v1257, %v1247
    %v1259 = vadd.s32 %v1258, %v1249
    %v1260 = vshrl.u32 %v1259, 1
    %v1261 = vmul.u32 %v1260, 3
    %v1262 = vsub.s32 %v1238, %v1261
    %v1263 = vsub.s32 0, %v1262
    %v1264 = vsel %vm1236, %v1263, %v1262
    %vm1265 = vcmp.lt.s32.totalorder %v682, 0
    %v1266 = vsub.s32 0, %v682
    %v1267 = vsel %vm1265, %v1266, %v682
    %v1268 = vand.u32 %v1267, 65535
    %v1269 = vshrl.u32 %v1267, 16
    %v1271 = vmul.u32 %v1268, 43691
    %v1272 = vmul.u32 %v1268, 43690
    %v1273 = vmul.u32 %v1269, 43691
    %v1274 = vmul.u32 %v1269, 43690
    %v1275 = vshll.u32 %v1272, 16
    %v1276 = vshrl.u32 %v1272, 16
    %v1277 = vshll.u32 %v1273, 16
    %v1278 = vshrl.u32 %v1273, 16
    %vm1279 = vc.u32 %v1271, %v1275
    %v1280 = vsel %vm1279, 1, 0
    %v1281 = vadd.s32 %v1271, %v1275
    %v1282 = vadd.s32 %v1274, %v1280
    %vm1283 = vc.u32 %v1281, %v1277
    %v1284 = vsel %vm1283, 1, 0
    %v1285 = vadd.s32 %v1281, %v1277
    %v1286 = vadd.s32 %v1282, %v1284
    %v1287 = vadd.s32 %v1286, %v1276
    %v1288 = vadd.s32 %v1287, %v1278
    %v1289 = vshrl.u32 %v1288, 1
    %v1290 = vmul.u32 %v1289, 3
    %v1291 = vsub.s32 %v1267, %v1290
    %v1292 = vsub.s32 0, %v1291
    %v1293 = vsel %vm1265, %v1292, %v1291
    %vm1294 = vcmp.lt.s32.totalorder %v683, 0
    %v1295 = vsub.s32 0, %v683
    %v1296 = vsel %vm1294, %v1295, %v683
    %v1297 = vand.u32 %v1296, 65535
    %v1298 = vshrl.u32 %v1296, 16
    %v1300 = vmul.u32 %v1297, 43691
    %v1301 = vmul.u32 %v1297, 43690
    %v1302 = vmul.u32 %v1298, 43691
    %v1303 = vmul.u32 %v1298, 43690
    %v1304 = vshll.u32 %v1301, 16
    %v1305 = vshrl.u32 %v1301, 16
    %v1306 = vshll.u32 %v1302, 16
    %v1307 = vshrl.u32 %v1302, 16
    %vm1308 = vc.u32 %v1300, %v1304
    %v1309 = vsel %vm1308, 1, 0
    %v1310 = vadd.s32 %v1300, %v1304
    %v1311 = vadd.s32 %v1303, %v1309
    %vm1312 = vc.u32 %v1310, %v1306
    %v1313 = vsel %vm1312, 1, 0
    %v1314 = vadd.s32 %v1310, %v1306
    %v1315 = vadd.s32 %v1311, %v1313
    %v1316 = vadd.s32 %v1315, %v1305
    %v1317 = vadd.s32 %v1316, %v1307
    %v1318 = vshrl.u32 %v1317, 1
    %v1319 = vmul.u32 %v1318, 3
    %v1320 = vsub.s32 %v1296, %v1319
    %v1321 = vsub.s32 0, %v1320
    %v1322 = vsel %vm1294, %v1321, %v1320
    %vm1323 = vcmp.lt.s32.totalorder %v684, 0
    %v1324 = vsub.s32 0, %v684
    %v1325 = vsel %vm1323, %v1324, %v684
    %v1326 = vand.u32 %v1325, 65535
    %v1327 = vshrl.u32 %v1325, 16
    %v1329 = vmul.u32 %v1326, 43691
    %v1330 = vmul.u32 %v1326, 43690
    %v1331 = vmul.u32 %v1327, 43691
    %v1332 = vmul.u32 %v1327, 43690
    %v1333 = vshll.u32 %v1330, 16
    %v1334 = vshrl.u32 %v1330, 16
    %v1335 = vshll.u32 %v1331, 16
    %v1336 = vshrl.u32 %v1331, 16
    %vm1337 = vc.u32 %v1329, %v1333
    %v1338 = vsel %vm1337, 1, 0
    %v1339 = vadd.s32 %v1329, %v1333
    %v1340 = vadd.s32 %v1332, %v1338
    %vm1341 = vc.u32 %v1339, %v1335
    %v1342 = vsel %vm1341, 1, 0
    %v1343 = vadd.s32 %v1339, %v1335
    %v1344 = vadd.s32 %v1340, %v1342
    %v1345 = vadd.s32 %v1344, %v1334
    %v1346 = vadd.s32 %v1345, %v1336
    %v1347 = vshrl.u32 %v1346, 1
    %v1348 = vmul.u32 %v1347, 3
    %v1349 = vsub.s32 %v1325, %v1348
    %v1350 = vsub.s32 0, %v1349
    %v1351 = vsel %vm1323, %v1350, %v1349
    %vm1352 = vcmp.lt.s32.totalorder %v685, 0
    %v1353 = vsub.s32 0, %v685
    %v1354 = vsel %vm1352, %v1353, %v685
    %v1355 = vand.u32 %v1354, 65535
    %v1356 = vshrl.u32 %v1354, 16
    %v1358 = vmul.u32 %v1355, 43691
    %v1359 = vmul.u32 %v1355, 43690
    %v1360 = vmul.u32 %v1356, 43691
    %v1361 = vmul.u32 %v1356, 43690
    %v1362 = vshll.u32 %v1359, 16
    %v1363 = vshrl.u32 %v1359, 16
    %v1364 = vshll.u32 %v1360, 16
    %v1365 = vshrl.u32 %v1360, 16
    %vm1366 = vc.u32 %v1358, %v1362
    %v1367 = vsel %vm1366, 1, 0
    %v1368 = vadd.s32 %v1358, %v1362
    %v1369 = vadd.s32 %v1361, %v1367
    %vm1370 = vc.u32 %v1368, %v1364
    %v1371 = vsel %vm1370, 1, 0
    %v1372 = vadd.s32 %v1368, %v1364
    %v1373 = vadd.s32 %v1369, %v1371
    %v1374 = vadd.s32 %v1373, %v1363
    %v1375 = vadd.s32 %v1374, %v1365
    %v1376 = vshrl.u32 %v1375, 1
    %v1377 = vmul.u32 %v1376, 3
    %v1378 = vsub.s32 %v1354, %v1377
    %v1379 = vsub.s32 0, %v1378
    %v1380 = vsel %vm1352, %v1379, %v1378
    %vm1381 = vcmp.lt.s32.totalorder %v686, 0
    %v1382 = vsub.s32 0, %v686
    %v1383 = vsel %vm1381, %v1382, %v686
    %v1384 = vand.u32 %v1383, 65535
    %v1385 = vshrl.u32 %v1383, 16
    %v1387 = vmul.u32 %v1384, 43691
    %v1388 = vmul.u32 %v1384, 43690
    %v1389 = vmul.u32 %v1385, 43691
    %v1390 = vmul.u32 %v1385, 43690
    %v1391 = vshll.u32 %v1388, 16
    %v1392 = vshrl.u32 %v1388, 16
    %v1393 = vshll.u32 %v1389, 16
    %v1394 = vshrl.u32 %v1389, 16
    %vm1395 = vc.u32 %v1387, %v1391
    %v1396 = vsel %vm1395, 1, 0
    %v1397 = vadd.s32 %v1387, %v1391
    %v1398 = vadd.s32 %v1390, %v1396
    %vm1399 = vc.u32 %v1397, %v1393
    %v1400 = vsel %vm1399, 1, 0
    %v1401 = vadd.s32 %v1397, %v1393
    %v1402 = vadd.s32 %v1398, %v1400
    %v1403 = vadd.s32 %v1402, %v1392
    %v1404 = vadd.s32 %v1403, %v1394
    %v1405 = vshrl.u32 %v1404, 1
    %v1406 = vmul.u32 %v1405, 3
    %v1407 = vsub.s32 %v1383, %v1406
    %v1408 = vsub.s32 0, %v1407
    %v1409 = vsel %vm1381, %v1408, %v1407
    %vm1410 = vcmp.lt.s32.totalorder %v687, 0
    %v1411 = vsub.s32 0, %v687
    %v1412 = vsel %vm1410, %v1411, %v687
    %v1413 = vand.u32 %v1412, 65535
    %v1414 = vshrl.u32 %v1412, 16
    %v1416 = vmul.u32 %v1413, 43691
    %v1417 = vmul.u32 %v1413, 43690
    %v1418 = vmul.u32 %v1414, 43691
    %v1419 = vmul.u32 %v1414, 43690
    %v1420 = vshll.u32 %v1417, 16
    %v1421 = vshrl.u32 %v1417, 16
    %v1422 = vshll.u32 %v1418, 16
    %v1423 = vshrl.u32 %v1418, 16
    %vm1424 = vc.u32 %v1416, %v1420
    %v1425 = vsel %vm1424, 1, 0
    %v1426 = vadd.s32 %v1416, %v1420
    %v1427 = vadd.s32 %v1419, %v1425
    %vm1428 = vc.u32 %v1426, %v1422
    %v1429 = vsel %vm1428, 1, 0
    %v1430 = vadd.s32 %v1426, %v1422
    %v1431 = vadd.s32 %v1427, %v1429
    %v1432 = vadd.s32 %v1431, %v1421
    %v1433 = vadd.s32 %v1432, %v1423
    %v1434 = vshrl.u32 %v1433, 1
    %v1435 = vmul.u32 %v1434, 3
    %v1436 = vsub.s32 %v1412, %v1435
    %v1437 = vsub.s32 0, %v1436
    %v1438 = vsel %vm1410, %v1437, %v1436
    %vm1439 = vcmp.lt.s32.totalorder %v688, 0
    %v1440 = vsub.s32 0, %v688
    %v1441 = vsel %vm1439, %v1440, %v688
    %v1442 = vand.u32 %v1441, 65535
    %v1443 = vshrl.u32 %v1441, 16
    %v1445 = vmul.u32 %v1442, 43691
    %v1446 = vmul.u32 %v1442, 43690
    %v1447 = vmul.u32 %v1443, 43691
    %v1448 = vmul.u32 %v1443, 43690
    %v1449 = vshll.u32 %v1446, 16
    %v1450 = vshrl.u32 %v1446, 16
    %v1451 = vshll.u32 %v1447, 16
    %v1452 = vshrl.u32 %v1447, 16
    %vm1453 = vc.u32 %v1445, %v1449
    %v1454 = vsel %vm1453, 1, 0
    %v1455 = vadd.s32 %v1445, %v1449
    %v1456 = vadd.s32 %v1448, %v1454
    %vm1457 = vc.u32 %v1455, %v1451
    %v1458 = vsel %vm1457, 1, 0
    %v1459 = vadd.s32 %v1455, %v1451
    %v1460 = vadd.s32 %v1456, %v1458
    %v1461 = vadd.s32 %v1460, %v1450
    %v1462 = vadd.s32 %v1461, %v1452
    %v1463 = vshrl.u32 %v1462, 1
    %v1464 = vmul.u32 %v1463, 3
    %v1465 = vsub.s32 %v1441, %v1464
    %v1466 = vsub.s32 0, %v1465
    %v1467 = vsel %vm1439, %v1466, %v1465
    %vm1468 = vcmp.lt.s32.totalorder %v689, 0
    %v1469 = vsub.s32 0, %v689
    %v1470 = vsel %vm1468, %v1469, %v689
    %v1471 = vand.u32 %v1470, 65535
    %v1472 = vshrl.u32 %v1470, 16
    %v1474 = vmul.u32 %v1471, 43691
    %v1475 = vmul.u32 %v1471, 43690
    %v1476 = vmul.u32 %v1472, 43691
    %v1477 = vmul.u32 %v1472, 43690
    %v1478 = vshll.u32 %v1475, 16
    %v1479 = vshrl.u32 %v1475, 16
    %v1480 = vshll.u32 %v1476, 16
    %v1481 = vshrl.u32 %v1476, 16
    %vm1482 = vc.u32 %v1474, %v1478
    %v1483 = vsel %vm1482, 1, 0
    %v1484 = vadd.s32 %v1474, %v1478
    %v1485 = vadd.s32 %v1477, %v1483
    %vm1486 = vc.u32 %v1484, %v1480
    %v1487 = vsel %vm1486, 1, 0
    %v1488 = vadd.s32 %v1484, %v1480
    %v1489 = vadd.s32 %v1485, %v1487
    %v1490 = vadd.s32 %v1489, %v1479
    %v1491 = vadd.s32 %v1490, %v1481
    %v1492 = vshrl.u32 %v1491, 1
    %v1493 = vmul.u32 %v1492, 3
    %v1494 = vsub.s32 %v1470, %v1493
    %v1495 = vsub.s32 0, %v1494
    %v1496 = vsel %vm1468, %v1495, %v1494
    %vm1497 = vcmp.lt.s32.totalorder %v690, 0
    %v1498 = vsub.s32 0, %v690
    %v1499 = vsel %vm1497, %v1498, %v690
    %v1500 = vand.u32 %v1499, 65535
    %v1501 = vshrl.u32 %v1499, 16
    %v1503 = vmul.u32 %v1500, 43691
    %v1504 = vmul.u32 %v1500, 43690
    %v1505 = vmul.u32 %v1501, 43691
    %v1506 = vmul.u32 %v1501, 43690
    %v1507 = vshll.u32 %v1504, 16
    %v1508 = vshrl.u32 %v1504, 16
    %v1509 = vshll.u32 %v1505, 16
    %v1510 = vshrl.u32 %v1505, 16
    %vm1511 = vc.u32 %v1503, %v1507
    %v1512 = vsel %vm1511, 1, 0
    %v1513 = vadd.s32 %v1503, %v1507
    %v1514 = vadd.s32 %v1506, %v1512
    %vm1515 = vc.u32 %v1513, %v1509
    %v1516 = vsel %vm1515, 1, 0
    %v1517 = vadd.s32 %v1513, %v1509
    %v1518 = vadd.s32 %v1514, %v1516
    %v1519 = vadd.s32 %v1518, %v1508
    %v1520 = vadd.s32 %v1519, %v1510
    %v1521 = vshrl.u32 %v1520, 1
    %v1522 = vmul.u32 %v1521, 3
    %v1523 = vsub.s32 %v1499, %v1522
    %v1524 = vsub.s32 0, %v1523
    %v1525 = vsel %vm1497, %v1524, %v1523
    %vm1526 = vcmp.lt.s32.totalorder %v691, 0
    %v1527 = vsub.s32 0, %v691
    %v1528 = vsel %vm1526, %v1527, %v691
    %v1529 = vand.u32 %v1528, 65535
    %v1530 = vshrl.u32 %v1528, 16
    %v1532 = vmul.u32 %v1529, 43691
    %v1533 = vmul.u32 %v1529, 43690
    %v1534 = vmul.u32 %v1530, 43691
    %v1535 = vmul.u32 %v1530, 43690
    %v1536 = vshll.u32 %v1533, 16
    %v1537 = vshrl.u32 %v1533, 16
    %v1538 = vshll.u32 %v1534, 16
    %v1539 = vshrl.u32 %v1534, 16
    %vm1540 = vc.u32 %v1532, %v1536
    %v1541 = vsel %vm1540, 1, 0
    %v1542 = vadd.s32 %v1532, %v1536
    %v1543 = vadd.s32 %v1535, %v1541
    %vm1544 = vc.u32 %v1542, %v1538
    %v1545 = vsel %vm1544, 1, 0
    %v1546 = vadd.s32 %v1542, %v1538
    %v1547 = vadd.s32 %v1543, %v1545
    %v1548 = vadd.s32 %v1547, %v1537
    %v1549 = vadd.s32 %v1548, %v1539
    %v1550 = vshrl.u32 %v1549, 1
    %v1551 = vmul.u32 %v1550, 3
    %v1552 = vsub.s32 %v1528, %v1551
    %v1553 = vsub.s32 0, %v1552
    %v1554 = vsel %vm1526, %v1553, %v1552
    %vm1555 = vcmp.lt.s32.totalorder %v692, 0
    %v1556 = vsub.s32 0, %v692
    %v1557 = vsel %vm1555, %v1556, %v692
    %v1558 = vand.u32 %v1557, 65535
    %v1559 = vshrl.u32 %v1557, 16
    %v1561 = vmul.u32 %v1558, 43691
    %v1562 = vmul.u32 %v1558, 43690
    %v1563 = vmul.u32 %v1559, 43691
    %v1564 = vmul.u32 %v1559, 43690
    %v1565 = vshll.u32 %v1562, 16
    %v1566 = vshrl.u32 %v1562, 16
    %v1567 = vshll.u32 %v1563, 16
    %v1568 = vshrl.u32 %v1563, 16
    %vm1569 = vc.u32 %v1561, %v1565
    %v1570 = vsel %vm1569, 1, 0
    %v1571 = vadd.s32 %v1561, %v1565
    %v1572 = vadd.s32 %v1564, %v1570
    %vm1573 = vc.u32 %v1571, %v1567
    %v1574 = vsel %vm1573, 1, 0
    %v1575 = vadd.s32 %v1571, %v1567
    %v1576 = vadd.s32 %v1572, %v1574
    %v1577 = vadd.s32 %v1576, %v1566
    %v1578 = vadd.s32 %v1577, %v1568
    %v1579 = vshrl.u32 %v1578, 1
    %v1580 = vmul.u32 %v1579, 3
    %v1581 = vsub.s32 %v1557, %v1580
    %v1582 = vsub.s32 0, %v1581
    %v1583 = vsel %vm1555, %v1582, %v1581
    %vm1584 = vcmp.lt.s32.totalorder %v693, 0
    %v1585 = vsub.s32 0, %v693
    %v1586 = vsel %vm1584, %v1585, %v693
    %v1587 = vand.u32 %v1586, 65535
    %v1588 = vshrl.u32 %v1586, 16
    %v1590 = vmul.u32 %v1587, 43691
    %v1591 = vmul.u32 %v1587, 43690
    %v1592 = vmul.u32 %v1588, 43691
    %v1593 = vmul.u32 %v1588, 43690
    %v1594 = vshll.u32 %v1591, 16
    %v1595 = vshrl.u32 %v1591, 16
    %v1596 = vshll.u32 %v1592, 16
    %v1597 = vshrl.u32 %v1592, 16
    %vm1598 = vc.u32 %v1590, %v1594
    %v1599 = vsel %vm1598, 1, 0
    %v1600 = vadd.s32 %v1590, %v1594
    %v1601 = vadd.s32 %v1593, %v1599
    %vm1602 = vc.u32 %v1600, %v1596
    %v1603 = vsel %vm1602, 1, 0
    %v1604 = vadd.s32 %v1600, %v1596
    %v1605 = vadd.s32 %v1601, %v1603
    %v1606 = vadd.s32 %v1605, %v1595
    %v1607 = vadd.s32 %v1606, %v1597
    %v1608 = vshrl.u32 %v1607, 1
    %v1609 = vmul.u32 %v1608, 3
    %v1610 = vsub.s32 %v1586, %v1609
    %v1611 = vsub.s32 0, %v1610
    %v1612 = vsel %vm1584, %v1611, %v1610
    %vm1613 = vcmp.ne.s32.totalorder %v945, 0
    %vm1614 = vcmp.ne.s32.totalorder %v974, 0
    %vm1615 = vcmp.ne.s32.totalorder %v1003, 0
    %vm1616 = vcmp.ne.s32.totalorder %v1032, 0
    %vm1617 = vcmp.ne.s32.totalorder %v1061, 0
    %vm1618 = vcmp.ne.s32.totalorder %v1090, 0
    %vm1619 = vcmp.ne.s32.totalorder %v1119, 0
    %vm1620 = vcmp.ne.s32.totalorder %v1148, 0
    %vm1621 = vcmp.ne.s32.totalorder %v1177, 0
    %vm1622 = vcmp.ne.s32.totalorder %v1206, 0
    %vm1623 = vcmp.ne.s32.totalorder %v1235, 0
    %vm1624 = vcmp.ne.s32.totalorder %v1264, 0
    %vm1625 = vcmp.ne.s32.totalorder %v1293, 0
    %vm1626 = vcmp.ne.s32.totalorder %v1322, 0
    %vm1627 = vcmp.ne.s32.totalorder %v1351, 0
    %vm1628 = vcmp.ne.s32.totalorder %v1380, 0
    %vm1629 = vcmp.ne.s32.totalorder %v1409, 0
    %vm1630 = vcmp.ne.s32.totalorder %v1438, 0
    %vm1631 = vcmp.ne.s32.totalorder %v1467, 0
    %vm1632 = vcmp.ne.s32.totalorder %v1496, 0
    %vm1633 = vcmp.ne.s32.totalorder %v1525, 0
    %vm1634 = vcmp.ne.s32.totalorder %v1554, 0
    %vm1635 = vcmp.ne.s32.totalorder %v1583, 0
    %vm1636 = vcmp.ne.s32.totalorder %v1612, 0
    %vm1637 = vcmp.lt.s32.totalorder %v945, 0
    %vm1638 = vcmp.lt.s32.totalorder %v974, 0
    %vm1639 = vcmp.lt.s32.totalorder %v1003, 0
    %vm1640 = vcmp.lt.s32.totalorder %v1032, 0
    %vm1641 = vcmp.lt.s32.totalorder %v1061, 0
    %vm1642 = vcmp.lt.s32.totalorder %v1090, 0
    %vm1643 = vcmp.lt.s32.totalorder %v1119, 0
    %vm1644 = vcmp.lt.s32.totalorder %v1148, 0
    %vm1645 = vcmp.lt.s32.totalorder %v1177, 0
    %vm1646 = vcmp.lt.s32.totalorder %v1206, 0
    %vm1647 = vcmp.lt.s32.totalorder %v1235, 0
    %vm1648 = vcmp.lt.s32.totalorder %v1264, 0
    %vm1649 = vcmp.lt.s32.totalorder %v1293, 0
    %vm1650 = vcmp.lt.s32.totalorder %v1322, 0
    %vm1651 = vcmp.lt.s32.totalorder %v1351, 0
    %vm1652 = vcmp.lt.s32.totalorder %v1380, 0
    %vm1653 = vcmp.lt.s32.totalorder %v1409, 0
    %vm1654 = vcmp.lt.s32.totalorder %v1438, 0
    %vm1655 = vcmp.lt.s32.totalorder %v1467, 0
    %vm1656 = vcmp.lt.s32.totalorder %v1496, 0
    %vm1657 = vcmp.lt.s32.totalorder %v1525, 0
    %vm1658 = vcmp.lt.s32.totalorder %v1554, 0
    %vm1659 = vcmp.lt.s32.totalorder %v1583, 0
    %vm1660 = vcmp.lt.s32.totalorder %v1612, 0
    %vm1661 = vmand %vm1637, %vm1613
    %vm1662 = vmand %vm1638, %vm1614
    %vm1663 = vmand %vm1639, %vm1615
    %vm1664 = vmand %vm1640, %vm1616
    %vm1665 = vmand %vm1641, %vm1617
    %vm1666 = vmand %vm1642, %vm1618
    %vm1667 = vmand %vm1643, %vm1619
    %vm1668 = vmand %vm1644, %vm1620
    %vm1669 = vmand %vm1645, %vm1621
    %vm1670 = vmand %vm1646, %vm1622
    %vm1671 = vmand %vm1647, %vm1623
    %vm1672 = vmand %vm1648, %vm1624
    %vm1673 = vmand %vm1649, %vm1625
    %vm1674 = vmand %vm1650, %vm1626
    %vm1675 = vmand %vm1651, %vm1627
    %vm1676 = vmand %vm1652, %vm1628
    %vm1677 = vmand %vm1653, %vm1629
    %vm1678 = vmand %vm1654, %vm1630
    %vm1679 = vmand %vm1655, %vm1631
    %vm1680 = vmand %vm1656, %vm1632
    %vm1681 = vmand %vm1657, %vm1633
    %vm1682 = vmand %vm1658, %vm1634
    %vm1683 = vmand %vm1659, %vm1635
    %vm1684 = vmand %vm1660, %vm1636
    %v1685 = vadd.s32 %v945, 3
    %v1686 = vadd.s32 %v974, 3
    %v1687 = vadd.s32 %v1003, 3
    %v1688 = vadd.s32 %v1032, 3
    %v1689 = vadd.s32 %v1061, 3
    %v1690 = vadd.s32 %v1090, 3
    %v1691 = vadd.s32 %v1119, 3
    %v1692 = vadd.s32 %v1148, 3
    %v1693 = vadd.s32 %v1177, 3
    %v1694 = vadd.s32 %v1206, 3
    %v1695 = vadd.s32 %v1235, 3
    %v1696 = vadd.s32 %v1264, 3
    %v1697 = vadd.s32 %v1293, 3
    %v1698 = vadd.s32 %v1322, 3
    %v1699 = vadd.s32 %v1351, 3
    %v1700 = vadd.s32 %v1380, 3
    %v1701 = vadd.s32 %v1409, 3
    %v1702 = vadd.s32 %v1438, 3
    %v1703 = vadd.s32 %v1467, 3
    %v1704 = vadd.s32 %v1496, 3
    %v1705 = vadd.s32 %v1525, 3
    %v1706 = vadd.s32 %v1554, 3
    %v1707 = vadd.s32 %v1583, 3
    %v1708 = vadd.s32 %v1612, 3
    %v1709 = vsel %vm1661, %v1685, %v945
    %v1710 = vsel %vm1662, %v1686, %v974
    %v1711 = vsel %vm1663, %v1687, %v1003
    %v1712 = vsel %vm1664, %v1688, %v1032
    %v1713 = vsel %vm1665, %v1689, %v1061
    %v1714 = vsel %vm1666, %v1690, %v1090
    %v1715 = vsel %vm1667, %v1691, %v1119
    %v1716 = vsel %vm1668, %v1692, %v1148
    %v1717 = vsel %vm1669, %v1693, %v1177
    %v1718 = vsel %vm1670, %v1694, %v1206
    %v1719 = vsel %vm1671, %v1695, %v1235
    %v1720 = vsel %vm1672, %v1696, %v1264
    %v1721 = vsel %vm1673, %v1697, %v1293
    %v1722 = vsel %vm1674, %v1698, %v1322
    %v1723 = vsel %vm1675, %v1699, %v1351
    %v1724 = vsel %vm1676, %v1700, %v1380
    %v1725 = vsel %vm1677, %v1701, %v1409
    %v1726 = vsel %vm1678, %v1702, %v1438
    %v1727 = vsel %vm1679, %v1703, %v1467
    %v1728 = vsel %vm1680, %v1704, %v1496
    %v1729 = vsel %vm1681, %v1705, %v1525
    %v1730 = vsel %vm1682, %v1706, %v1554
    %v1731 = vsel %vm1683, %v1707, %v1583
    %v1732 = vsel %vm1684, %v1708, %v1612
    %vm1733 = vcmp.eq.s32.totalorder %v1709, 0
    %vm1734 = vcmp.eq.s32.totalorder %v1710, 0
    %vm1735 = vcmp.eq.s32.totalorder %v1711, 0
    %vm1736 = vcmp.eq.s32.totalorder %v1712, 0
    %vm1737 = vcmp.eq.s32.totalorder %v1713, 0
    %vm1738 = vcmp.eq.s32.totalorder %v1714, 0
    %vm1739 = vcmp.eq.s32.totalorder %v1715, 0
    %vm1740 = vcmp.eq.s32.totalorder %v1716, 0
    %vm1741 = vcmp.eq.s32.totalorder %v1717, 0
    %vm1742 = vcmp.eq.s32.totalorder %v1718, 0
    %vm1743 = vcmp.eq.s32.totalorder %v1719, 0
    %vm1744 = vcmp.eq.s32.totalorder %v1720, 0
    %vm1745 = vcmp.eq.s32.totalorder %v1721, 0
    %vm1746 = vcmp.eq.s32.totalorder %v1722, 0
    %vm1747 = vcmp.eq.s32.totalorder %v1723, 0
    %vm1748 = vcmp.eq.s32.totalorder %v1724, 0
    %vm1749 = vcmp.eq.s32.totalorder %v1725, 0
    %vm1750 = vcmp.eq.s32.totalorder %v1726, 0
    %vm1751 = vcmp.eq.s32.totalorder %v1727, 0
    %vm1752 = vcmp.eq.s32.totalorder %v1728, 0
    %vm1753 = vcmp.eq.s32.totalorder %v1729, 0
    %vm1754 = vcmp.eq.s32.totalorder %v1730, 0
    %vm1755 = vcmp.eq.s32.totalorder %v1731, 0
    %vm1756 = vcmp.eq.s32.totalorder %v1732, 0
    %vm1757 = vcmp.le.s32.totalorder %v670, 13
    %vm1758 = vcmp.le.s32.totalorder %v671, 13
    %vm1759 = vcmp.le.s32.totalorder %v672, 13
    %vm1760 = vcmp.le.s32.totalorder %v673, 13
    %vm1761 = vcmp.le.s32.totalorder %v674, 13
    %vm1762 = vcmp.le.s32.totalorder %v675, 13
    %vm1763 = vcmp.le.s32.totalorder %v676, 13
    %vm1764 = vcmp.le.s32.totalorder %v677, 13
    %vm1765 = vcmp.le.s32.totalorder %v678, 13
    %vm1766 = vcmp.le.s32.totalorder %v679, 13
    %vm1767 = vcmp.le.s32.totalorder %v680, 13
    %vm1768 = vcmp.le.s32.totalorder %v681, 13
    %vm1769 = vcmp.le.s32.totalorder %v682, 13
    %vm1770 = vcmp.le.s32.totalorder %v683, 13
    %vm1771 = vcmp.le.s32.totalorder %v684, 13
    %vm1772 = vcmp.le.s32.totalorder %v685, 13
    %vm1773 = vcmp.le.s32.totalorder %v686, 13
    %vm1774 = vcmp.le.s32.totalorder %v687, 13
    %vm1775 = vcmp.le.s32.totalorder %v688, 13
    %vm1776 = vcmp.le.s32.totalorder %v689, 13
    %vm1777 = vcmp.le.s32.totalorder %v690, 13
    %vm1778 = vcmp.le.s32.totalorder %v691, 13
    %vm1779 = vcmp.le.s32.totalorder %v692, 13
    %vm1780 = vcmp.le.s32.totalorder %v693, 13
    %vm1781 = vmand %vm1733, %vm1757
    %vm1782 = vmand %vm1734, %vm1758
    %vm1783 = vmand %vm1735, %vm1759
    %vm1784 = vmand %vm1736, %vm1760
    %vm1785 = vmand %vm1737, %vm1761
    %vm1786 = vmand %vm1738, %vm1762
    %vm1787 = vmand %vm1739, %vm1763
    %vm1788 = vmand %vm1740, %vm1764
    %vm1789 = vmand %vm1741, %vm1765
    %vm1790 = vmand %vm1742, %vm1766
    %vm1791 = vmand %vm1743, %vm1767
    %vm1792 = vmand %vm1744, %vm1768
    %vm1793 = vmand %vm1745, %vm1769
    %vm1794 = vmand %vm1746, %vm1770
    %vm1795 = vmand %vm1747, %vm1771
    %vm1796 = vmand %vm1748, %vm1772
    %vm1797 = vmand %vm1749, %vm1773
    %vm1798 = vmand %vm1750, %vm1774
    %vm1799 = vmand %vm1751, %vm1775
    %vm1800 = vmand %vm1752, %vm1776
    %vm1801 = vmand %vm1753, %vm1777
    %vm1802 = vmand %vm1754, %vm1778
    %vm1803 = vmand %vm1755, %vm1779
    %vm1804 = vmand %vm1756, %vm1780
    %vm1805 = vcmp.ge.s32.totalorder %v695, 0
    %vm1806 = vmand %vm1781, %vm1805
    %vm1807 = vmand %vm1782, %vm1805
    %vm1808 = vmand %vm1783, %vm1805
    %vm1809 = vmand %vm1784, %vm1805
    %vm1810 = vmand %vm1785, %vm1805
    %vm1811 = vmand %vm1786, %vm1805
    %vm1812 = vmand %vm1787, %vm1805
    %vm1813 = vmand %vm1788, %vm1805
    %vm1814 = vmand %vm1789, %vm1805
    %vm1815 = vmand %vm1790, %vm1805
    %vm1816 = vmand %vm1791, %vm1805
    %vm1817 = vmand %vm1792, %vm1805
    %vm1818 = vmand %vm1793, %vm1805
    %vm1819 = vmand %vm1794, %vm1805
    %vm1820 = vmand %vm1795, %vm1805
    %vm1821 = vmand %vm1796, %vm1805
    %vm1822 = vmand %vm1797, %vm1805
    %vm1823 = vmand %vm1798, %vm1805
    %vm1824 = vmand %vm1799, %vm1805
    %vm1825 = vmand %vm1800, %vm1805
    %vm1826 = vmand %vm1801, %vm1805
    %vm1827 = vmand %vm1802, %vm1805
    %vm1828 = vmand %vm1803, %vm1805
    %vm1829 = vmand %vm1804, %vm1805
    %vm1830 = vcmp.lt.s32.totalorder %v695, 5
    %vm1831 = vmand %vm1806, %vm1830
    %vm1832 = vmand %vm1807, %vm1830
    %vm1833 = vmand %vm1808, %vm1830
    %vm1834 = vmand %vm1809, %vm1830
    %vm1835 = vmand %vm1810, %vm1830
    %vm1836 = vmand %vm1811, %vm1830
    %vm1837 = vmand %vm1812, %vm1830
    %vm1838 = vmand %vm1813, %vm1830
    %vm1839 = vmand %vm1814, %vm1830
    %vm1840 = vmand %vm1815, %vm1830
    %vm1841 = vmand %vm1816, %vm1830
    %vm1842 = vmand %vm1817, %vm1830
    %vm1843 = vmand %vm1818, %vm1830
    %vm1844 = vmand %vm1819, %vm1830
    %vm1845 = vmand %vm1820, %vm1830
    %vm1846 = vmand %vm1821, %vm1830
    %vm1847 = vmand %vm1822, %vm1830
    %vm1848 = vmand %vm1823, %vm1830
    %vm1849 = vmand %vm1824, %vm1830
    %vm1850 = vmand %vm1825, %vm1830
    %vm1851 = vmand %vm1826, %vm1830
    %vm1852 = vmand %vm1827, %vm1830
    %vm1853 = vmand %vm1828, %vm1830
    %vm1854 = vmand %vm1829, %vm1830
    %v1855 = vand.u32 2147483647, %v893
    %v1856 = vand.u32 2147483647, %v894
    %v1857 = vand.u32 2147483647, %v895
    %v1858 = vand.u32 2147483647, %v896
    %v1859 = vand.u32 2147483647, %v897
    %v1860 = vand.u32 2147483647, %v898
    %v1861 = vand.u32 2147483647, %v899
    %v1862 = vand.u32 2147483647, %v900
    %v1863 = vand.u32 2147483647, %v901
    %v1864 = vand.u32 2147483647, %v902
    %v1865 = vand.u32 2147483647, %v903
    %v1866 = vand.u32 2147483647, %v904
    %v1867 = vand.u32 2147483647, %v905
    %v1868 = vand.u32 2147483647, %v906
    %v1869 = vand.u32 2147483647, %v907
    %v1870 = vand.u32 2147483647, %v908
    %v1871 = vand.u32 2147483647, %v909
    %v1872 = vand.u32 2147483647, %v910
    %v1873 = vand.u32 2147483647, %v911
    %v1874 = vand.u32 2147483647, %v912
    %v1875 = vand.u32 2147483647, %v913
    %v1876 = vand.u32 2147483647, %v914
    %v1877 = vand.u32 2147483647, %v915
    %v1878 = vand.u32 2147483647, %v916
    %v1879 = vsel %vm1831, %v1855, 0.0
    %v1880 = vsel %vm1832, %v1856, 0.0
    %v1881 = vsel %vm1833, %v1857, 0.0
    %v1882 = vsel %vm1834, %v1858, 0.0
    %v1883 = vsel %vm1835, %v1859, 0.0
    %v1884 = vsel %vm1836, %v1860, 0.0
    %v1885 = vsel %vm1837, %v1861, 0.0
    %v1886 = vsel %vm1838, %v1862, 0.0
    %v1887 = vsel %vm1839, %v1863, 0.0
    %v1888 = vsel %vm1840, %v1864, 0.0
    %v1889 = vsel %vm1841, %v1865, 0.0
    %v1890 = vsel %vm1842, %v1866, 0.0
    %v1891 = vsel %vm1843, %v1867, 0.0
    %v1892 = vsel %vm1844, %v1868, 0.0
    %v1893 = vsel %vm1845, %v1869, 0.0
    %v1894 = vsel %vm1846, %v1870, 0.0
    %v1895 = vsel %vm1847, %v1871, 0.0
    %v1896 = vsel %vm1848, %v1872, 0.0
    %v1897 = vsel %vm1849, %v1873, 0.0
    %v1898 = vsel %vm1850, %v1874, 0.0
    %v1899 = vsel %vm1851, %v1875, 0.0
    %v1900 = vsel %vm1852, %v1876, 0.0
    %v1901 = vsel %vm1853, %v1877, 0.0
    %v1902 = vsel %vm1854, %v1878, 0.0
    %vm1903 = vcmask 80896
    %v1904 = vsel %vm1903, %v1879, 0.0
    %v1905 = vsel %vm1903, %v1880, 0.0
    %v1906 = vadd.f32 %v1904, %v1905
    %v1907 = vsel %vm1903, %v1881, 0.0
    %v1908 = vadd.f32 %v1906, %v1907
    %v1909 = vsel %vm1903, %v1882, 0.0
    %v1910 = vadd.f32 %v1908, %v1909
    %v1911 = vsel %vm1903, %v1883, 0.0
    %v1912 = vadd.f32 %v1910, %v1911
    %v1913 = vsel %vm1903, %v1884, 0.0
    %v1914 = vadd.f32 %v1912, %v1913
    %v1915 = vsel %vm1903, %v1885, 0.0
    %v1916 = vadd.f32 %v1914, %v1915
    %v1917 = vsel %vm1903, %v1886, 0.0
    %v1918 = vadd.f32 %v1916, %v1917
    %v1919 = vsel %vm1903, %v1887, 0.0
    %v1920 = vadd.f32 %v1918, %v1919
    %v1921 = vsel %vm1903, %v1888, 0.0
    %v1922 = vadd.f32 %v1920, %v1921
    %v1923 = vsel %vm1903, %v1889, 0.0
    %v1924 = vadd.f32 %v1922, %v1923
    %v1925 = vsel %vm1903, %v1890, 0.0
    %v1926 = vadd.f32 %v1924, %v1925
    %v1927 = vsel %vm1903, %v1891, 0.0
    %v1928 = vadd.f32 %v1926, %v1927
    %v1929 = vsel %vm1903, %v1892, 0.0
    %v1930 = vadd.f32 %v1928, %v1929
    %v1931 = vsel %vm1903, %v1893, 0.0
    %v1932 = vadd.f32 %v1930, %v1931
    %v1933 = vsel %vm1903, %v1894, 0.0
    %v1934 = vadd.f32 %v1932, %v1933
    %v1935 = vsel %vm1903, %v1895, 0.0
    %v1936 = vadd.f32 %v1934, %v1935
    %v1937 = vsel %vm1903, %v1896, 0.0
    %v1938 = vadd.f32 %v1936, %v1937
    %v1939 = vsel %vm1903, %v1897, 0.0
    %v1940 = vadd.f32 %v1938, %v1939
    %v1941 = vsel %vm1903, %v1898, 0.0
    %v1942 = vadd.f32 %v1940, %v1941
    %v1943 = vsel %vm1903, %v1899, 0.0
    %v1944 = vadd.f32 %v1942, %v1943
    %v1945 = vsel %vm1903, %v1900, 0.0
    %v1946 = vadd.f32 %v1944, %v1945
    %v1947 = vsel %vm1903, %v1901, 0.0
    %v1948 = vadd.f32 %v1946, %v1947
    %v1949 = vsel %vm1903, %v1902, 0.0
    %v1950 = vadd.f32 %v1948, %v1949
    %1951 = vadd.xlane.f32.xlu0 %v1950
    %v1952 = vpop.xlane.xlu0 %1951
    %v1953 = vrot.slane %v1952, 4
    %v1954 = vadd.f32 %v1952, %v1953
    %v1955 = vrot.slane %v1954, 2
    %v1956 = vadd.f32 %v1954, %v1955
    %v1957 = vrot.slane %v1956, 1
    %v1958 = vadd.f32 %v1956, %v1957
    %s1959 = vtos %v1958
    %s1960 = sadd.f32 %s217, %s1959
    %vm1961 = vcmask 1044480
    %v1962 = vrot.slane %v310, 3
    %v1963 = vrot.slane %v313, 3
    %v1964 = vsel %vm1961, %v1962, %v1963
    %v1965 = vrot.slane %v316, 3
    %v1966 = vsel %vm1961, %v1963, %v1965
    %v1967 = vrot.slane %v319, 3
    %v1968 = vsel %vm1961, %v1965, %v1967
    %v1969 = vrot.slane %v322, 3
    %v1970 = vsel %vm1961, %v1967, %v1969
    %v1971 = vrot.slane %v325, 3
    %v1972 = vsel %vm1961, %v1969, %v1971
    %v1973 = vrot.slane %v328, 3
    %v1974 = vsel %vm1961, %v1971, %v1973
    %v1975 = vrot.slane %v331, 3
    %v1976 = vsel %vm1961, %v1973, %v1975
    %v1977 = vrot.slane %v334, 3
    %v1978 = vsel %vm1961, %v1975, %v1977
    %v1979 = vrot.slane %v337, 3
    %v1980 = vsel %vm1961, %v1977, %v1979
    %v1981 = vrot.slane %v340, 3
    %v1982 = vsel %vm1961, %v1979, %v1981
    %v1983 = vrot.slane %v343, 3
    %v1984 = vsel %vm1961, %v1981, %v1983
    %v1985 = vrot.slane %v346, 3
    %v1986 = vsel %vm1961, %v1983, %v1985
    %v1987 = vrot.slane %v349, 3
    %v1988 = vsel %vm1961, %v1985, %v1987
    %v1989 = vrot.slane %v352, 3
    %v1990 = vsel %vm1961, %v1987, %v1989
    %v1991 = vrot.slane %v355, 3
    %v1992 = vsel %vm1961, %v1989, %v1991
    %v1993 = vrot.slane %v358, 3
    %v1994 = vsel %vm1961, %v1991, %v1993
    %v1995 = vrot.slane %v361, 3
    %v1996 = vsel %vm1961, %v1993, %v1995
    %v1997 = vrot.slane %v364, 3
    %v1998 = vsel %vm1961, %v1995, %v1997
    %v1999 = vrot.slane %v367, 3
    %v2000 = vsel %vm1961, %v1997, %v1999
    %v2001 = vrot.slane %v370, 3
    %v2002 = vsel %vm1961, %v1999, %v2001
    %v2003 = vrot.slane %v373, 3
    %v2004 = vsel %vm1961, %v2001, %v2003
    %v2005 = vrot.slane %v376, 3
    %v2006 = vsel %vm1961, %v2003, %v2005
    %v2007 = vrot.slane %v379, 3
    %v2008 = vsel %vm1961, %v2005, %v2007
    %v2009 = vrot.slane 0.0, 3
    %v2010 = vsel %vm1961, %v2007, %v2009
    %v2035 = vadd.f32 %v893, %v1964
    %v2036 = vadd.f32 %v894, %v1966
    %v2037 = vadd.f32 %v895, %v1968
    %v2038 = vadd.f32 %v896, %v1970
    %v2039 = vadd.f32 %v897, %v1972
    %v2040 = vadd.f32 %v898, %v1974
    %v2041 = vadd.f32 %v899, %v1976
    %v2042 = vadd.f32 %v900, %v1978
    %v2043 = vadd.f32 %v901, %v1980
    %v2044 = vadd.f32 %v902, %v1982
    %v2045 = vadd.f32 %v903, %v1984
    %v2046 = vadd.f32 %v904, %v1986
    %v2047 = vadd.f32 %v905, %v1988
    %v2048 = vadd.f32 %v906, %v1990
    %v2049 = vadd.f32 %v907, %v1992
    %v2050 = vadd.f32 %v908, %v1994
    %v2051 = vadd.f32 %v909, %v1996
    %v2052 = vadd.f32 %v910, %v1998
    %v2053 = vadd.f32 %v911, %v2000
    %v2054 = vadd.f32 %v912, %v2002
    %v2055 = vadd.f32 %v913, %v2004
    %v2056 = vadd.f32 %v914, %v2006
    %v2057 = vadd.f32 %v915, %v2008
    %v2058 = vadd.f32 %v916, %v2010
    %vm2059 = vcmask 1043456
    %v2060 = vrot.slane %v310, 4
    %v2061 = vrot.slane %v313, 4
    %v2062 = vsel %vm2059, %v2060, %v2061
    %v2063 = vrot.slane %v316, 4
    %v2064 = vsel %vm2059, %v2061, %v2063
    %v2065 = vrot.slane %v319, 4
    %v2066 = vsel %vm2059, %v2063, %v2065
    %v2067 = vrot.slane %v322, 4
    %v2068 = vsel %vm2059, %v2065, %v2067
    %v2069 = vrot.slane %v325, 4
    %v2070 = vsel %vm2059, %v2067, %v2069
    %v2071 = vrot.slane %v328, 4
    %v2072 = vsel %vm2059, %v2069, %v2071
    %v2073 = vrot.slane %v331, 4
    %v2074 = vsel %vm2059, %v2071, %v2073
    %v2075 = vrot.slane %v334, 4
    %v2076 = vsel %vm2059, %v2073, %v2075
    %v2077 = vrot.slane %v337, 4
    %v2078 = vsel %vm2059, %v2075, %v2077
    %v2079 = vrot.slane %v340, 4
    %v2080 = vsel %vm2059, %v2077, %v2079
    %v2081 = vrot.slane %v343, 4
    %v2082 = vsel %vm2059, %v2079, %v2081
    %v2083 = vrot.slane %v346, 4
    %v2084 = vsel %vm2059, %v2081, %v2083
    %v2085 = vrot.slane %v349, 4
    %v2086 = vsel %vm2059, %v2083, %v2085
    %v2087 = vrot.slane %v352, 4
    %v2088 = vsel %vm2059, %v2085, %v2087
    %v2089 = vrot.slane %v355, 4
    %v2090 = vsel %vm2059, %v2087, %v2089
    %v2091 = vrot.slane %v358, 4
    %v2092 = vsel %vm2059, %v2089, %v2091
    %v2093 = vrot.slane %v361, 4
    %v2094 = vsel %vm2059, %v2091, %v2093
    %v2095 = vrot.slane %v364, 4
    %v2096 = vsel %vm2059, %v2093, %v2095
    %v2097 = vrot.slane %v367, 4
    %v2098 = vsel %vm2059, %v2095, %v2097
    %v2099 = vrot.slane %v370, 4
    %v2100 = vsel %vm2059, %v2097, %v2099
    %v2101 = vrot.slane %v373, 4
    %v2102 = vsel %vm2059, %v2099, %v2101
    %v2103 = vrot.slane %v376, 4
    %v2104 = vsel %vm2059, %v2101, %v2103
    %v2105 = vrot.slane %v379, 4
    %v2106 = vsel %vm2059, %v2103, %v2105
    %v2107 = vrot.slane 0.0, 4
    %v2108 = vsel %vm2059, %v2105, %v2107
    %v2133 = vadd.f32 %v2035, %v2062
    %v2134 = vadd.f32 %v2036, %v2064
    %v2135 = vadd.f32 %v2037, %v2066
    %v2136 = vadd.f32 %v2038, %v2068
    %v2137 = vadd.f32 %v2039, %v2070
    %v2138 = vadd.f32 %v2040, %v2072
    %v2139 = vadd.f32 %v2041, %v2074
    %v2140 = vadd.f32 %v2042, %v2076
    %v2141 = vadd.f32 %v2043, %v2078
    %v2142 = vadd.f32 %v2044, %v2080
    %v2143 = vadd.f32 %v2045, %v2082
    %v2144 = vadd.f32 %v2046, %v2084
    %v2145 = vadd.f32 %v2047, %v2086
    %v2146 = vadd.f32 %v2048, %v2088
    %v2147 = vadd.f32 %v2049, %v2090
    %v2148 = vadd.f32 %v2050, %v2092
    %v2149 = vadd.f32 %v2051, %v2094
    %v2150 = vadd.f32 %v2052, %v2096
    %v2151 = vadd.f32 %v2053, %v2098
    %v2152 = vadd.f32 %v2054, %v2100
    %v2153 = vadd.f32 %v2055, %v2102
    %v2154 = vadd.f32 %v2056, %v2104
    %v2155 = vadd.f32 %v2057, %v2106
    %v2156 = vadd.f32 %v2058, %v2108
    %vm2157 = vcmp.lt.s32.totalorder %v670, 0
    %v2158 = vsub.s32 0, %v670
    %v2159 = vsel %vm2157, %v2158, %v670
    %v2160 = vand.u32 %v2159, 65535
    %v2161 = vshrl.u32 %v2159, 16
    %v2163 = vmul.u32 %v2160, 52429
    %v2164 = vmul.u32 %v2160, 52428
    %v2165 = vmul.u32 %v2161, 52429
    %v2166 = vmul.u32 %v2161, 52428
    %v2167 = vshll.u32 %v2164, 16
    %v2168 = vshrl.u32 %v2164, 16
    %v2169 = vshll.u32 %v2165, 16
    %v2170 = vshrl.u32 %v2165, 16
    %vm2171 = vc.u32 %v2163, %v2167
    %v2172 = vsel %vm2171, 1, 0
    %v2173 = vadd.s32 %v2163, %v2167
    %v2174 = vadd.s32 %v2166, %v2172
    %vm2175 = vc.u32 %v2173, %v2169
    %v2176 = vsel %vm2175, 1, 0
    %v2177 = vadd.s32 %v2173, %v2169
    %v2178 = vadd.s32 %v2174, %v2176
    %v2179 = vadd.s32 %v2178, %v2168
    %v2180 = vadd.s32 %v2179, %v2170
    %v2181 = vshrl.u32 %v2180, 2
    %v2182 = vmul.u32 %v2181, 5
    %v2183 = vsub.s32 %v2159, %v2182
    %v2184 = vsub.s32 0, %v2183
    %v2185 = vsel %vm2157, %v2184, %v2183
    %vm2186 = vcmp.lt.s32.totalorder %v671, 0
    %v2187 = vsub.s32 0, %v671
    %v2188 = vsel %vm2186, %v2187, %v671
    %v2189 = vand.u32 %v2188, 65535
    %v2190 = vshrl.u32 %v2188, 16
    %v2192 = vmul.u32 %v2189, 52429
    %v2193 = vmul.u32 %v2189, 52428
    %v2194 = vmul.u32 %v2190, 52429
    %v2195 = vmul.u32 %v2190, 52428
    %v2196 = vshll.u32 %v2193, 16
    %v2197 = vshrl.u32 %v2193, 16
    %v2198 = vshll.u32 %v2194, 16
    %v2199 = vshrl.u32 %v2194, 16
    %vm2200 = vc.u32 %v2192, %v2196
    %v2201 = vsel %vm2200, 1, 0
    %v2202 = vadd.s32 %v2192, %v2196
    %v2203 = vadd.s32 %v2195, %v2201
    %vm2204 = vc.u32 %v2202, %v2198
    %v2205 = vsel %vm2204, 1, 0
    %v2206 = vadd.s32 %v2202, %v2198
    %v2207 = vadd.s32 %v2203, %v2205
    %v2208 = vadd.s32 %v2207, %v2197
    %v2209 = vadd.s32 %v2208, %v2199
    %v2210 = vshrl.u32 %v2209, 2
    %v2211 = vmul.u32 %v2210, 5
    %v2212 = vsub.s32 %v2188, %v2211
    %v2213 = vsub.s32 0, %v2212
    %v2214 = vsel %vm2186, %v2213, %v2212
    %vm2215 = vcmp.lt.s32.totalorder %v672, 0
    %v2216 = vsub.s32 0, %v672
    %v2217 = vsel %vm2215, %v2216, %v672
    %v2218 = vand.u32 %v2217, 65535
    %v2219 = vshrl.u32 %v2217, 16
    %v2221 = vmul.u32 %v2218, 52429
    %v2222 = vmul.u32 %v2218, 52428
    %v2223 = vmul.u32 %v2219, 52429
    %v2224 = vmul.u32 %v2219, 52428
    %v2225 = vshll.u32 %v2222, 16
    %v2226 = vshrl.u32 %v2222, 16
    %v2227 = vshll.u32 %v2223, 16
    %v2228 = vshrl.u32 %v2223, 16
    %vm2229 = vc.u32 %v2221, %v2225
    %v2230 = vsel %vm2229, 1, 0
    %v2231 = vadd.s32 %v2221, %v2225
    %v2232 = vadd.s32 %v2224, %v2230
    %vm2233 = vc.u32 %v2231, %v2227
    %v2234 = vsel %vm2233, 1, 0
    %v2235 = vadd.s32 %v2231, %v2227
    %v2236 = vadd.s32 %v2232, %v2234
    %v2237 = vadd.s32 %v2236, %v2226
    %v2238 = vadd.s32 %v2237, %v2228
    %v2239 = vshrl.u32 %v2238, 2
    %v2240 = vmul.u32 %v2239, 5
    %v2241 = vsub.s32 %v2217, %v2240
    %v2242 = vsub.s32 0, %v2241
    %v2243 = vsel %vm2215, %v2242, %v2241
    %vm2244 = vcmp.lt.s32.totalorder %v673, 0
    %v2245 = vsub.s32 0, %v673
    %v2246 = vsel %vm2244, %v2245, %v673
    %v2247 = vand.u32 %v2246, 65535
    %v2248 = vshrl.u32 %v2246, 16
    %v2250 = vmul.u32 %v2247, 52429
    %v2251 = vmul.u32 %v2247, 52428
    %v2252 = vmul.u32 %v2248, 52429
    %v2253 = vmul.u32 %v2248, 52428
    %v2254 = vshll.u32 %v2251, 16
    %v2255 = vshrl.u32 %v2251, 16
    %v2256 = vshll.u32 %v2252, 16
    %v2257 = vshrl.u32 %v2252, 16
    %vm2258 = vc.u32 %v2250, %v2254
    %v2259 = vsel %vm2258, 1, 0
    %v2260 = vadd.s32 %v2250, %v2254
    %v2261 = vadd.s32 %v2253, %v2259
    %vm2262 = vc.u32 %v2260, %v2256
    %v2263 = vsel %vm2262, 1, 0
    %v2264 = vadd.s32 %v2260, %v2256
    %v2265 = vadd.s32 %v2261, %v2263
    %v2266 = vadd.s32 %v2265, %v2255
    %v2267 = vadd.s32 %v2266, %v2257
    %v2268 = vshrl.u32 %v2267, 2
    %v2269 = vmul.u32 %v2268, 5
    %v2270 = vsub.s32 %v2246, %v2269
    %v2271 = vsub.s32 0, %v2270
    %v2272 = vsel %vm2244, %v2271, %v2270
    %vm2273 = vcmp.lt.s32.totalorder %v674, 0
    %v2274 = vsub.s32 0, %v674
    %v2275 = vsel %vm2273, %v2274, %v674
    %v2276 = vand.u32 %v2275, 65535
    %v2277 = vshrl.u32 %v2275, 16
    %v2279 = vmul.u32 %v2276, 52429
    %v2280 = vmul.u32 %v2276, 52428
    %v2281 = vmul.u32 %v2277, 52429
    %v2282 = vmul.u32 %v2277, 52428
    %v2283 = vshll.u32 %v2280, 16
    %v2284 = vshrl.u32 %v2280, 16
    %v2285 = vshll.u32 %v2281, 16
    %v2286 = vshrl.u32 %v2281, 16
    %vm2287 = vc.u32 %v2279, %v2283
    %v2288 = vsel %vm2287, 1, 0
    %v2289 = vadd.s32 %v2279, %v2283
    %v2290 = vadd.s32 %v2282, %v2288
    %vm2291 = vc.u32 %v2289, %v2285
    %v2292 = vsel %vm2291, 1, 0
    %v2293 = vadd.s32 %v2289, %v2285
    %v2294 = vadd.s32 %v2290, %v2292
    %v2295 = vadd.s32 %v2294, %v2284
    %v2296 = vadd.s32 %v2295, %v2286
    %v2297 = vshrl.u32 %v2296, 2
    %v2298 = vmul.u32 %v2297, 5
    %v2299 = vsub.s32 %v2275, %v2298
    %v2300 = vsub.s32 0, %v2299
    %v2301 = vsel %vm2273, %v2300, %v2299
    %vm2302 = vcmp.lt.s32.totalorder %v675, 0
    %v2303 = vsub.s32 0, %v675
    %v2304 = vsel %vm2302, %v2303, %v675
    %v2305 = vand.u32 %v2304, 65535
    %v2306 = vshrl.u32 %v2304, 16
    %v2308 = vmul.u32 %v2305, 52429
    %v2309 = vmul.u32 %v2305, 52428
    %v2310 = vmul.u32 %v2306, 52429
    %v2311 = vmul.u32 %v2306, 52428
    %v2312 = vshll.u32 %v2309, 16
    %v2313 = vshrl.u32 %v2309, 16
    %v2314 = vshll.u32 %v2310, 16
    %v2315 = vshrl.u32 %v2310, 16
    %vm2316 = vc.u32 %v2308, %v2312
    %v2317 = vsel %vm2316, 1, 0
    %v2318 = vadd.s32 %v2308, %v2312
    %v2319 = vadd.s32 %v2311, %v2317
    %vm2320 = vc.u32 %v2318, %v2314
    %v2321 = vsel %vm2320, 1, 0
    %v2322 = vadd.s32 %v2318, %v2314
    %v2323 = vadd.s32 %v2319, %v2321
    %v2324 = vadd.s32 %v2323, %v2313
    %v2325 = vadd.s32 %v2324, %v2315
    %v2326 = vshrl.u32 %v2325, 2
    %v2327 = vmul.u32 %v2326, 5
    %v2328 = vsub.s32 %v2304, %v2327
    %v2329 = vsub.s32 0, %v2328
    %v2330 = vsel %vm2302, %v2329, %v2328
    %vm2331 = vcmp.lt.s32.totalorder %v676, 0
    %v2332 = vsub.s32 0, %v676
    %v2333 = vsel %vm2331, %v2332, %v676
    %v2334 = vand.u32 %v2333, 65535
    %v2335 = vshrl.u32 %v2333, 16
    %v2337 = vmul.u32 %v2334, 52429
    %v2338 = vmul.u32 %v2334, 52428
    %v2339 = vmul.u32 %v2335, 52429
    %v2340 = vmul.u32 %v2335, 52428
    %v2341 = vshll.u32 %v2338, 16
    %v2342 = vshrl.u32 %v2338, 16
    %v2343 = vshll.u32 %v2339, 16
    %v2344 = vshrl.u32 %v2339, 16
    %vm2345 = vc.u32 %v2337, %v2341
    %v2346 = vsel %vm2345, 1, 0
    %v2347 = vadd.s32 %v2337, %v2341
    %v2348 = vadd.s32 %v2340, %v2346
    %vm2349 = vc.u32 %v2347, %v2343
    %v2350 = vsel %vm2349, 1, 0
    %v2351 = vadd.s32 %v2347, %v2343
    %v2352 = vadd.s32 %v2348, %v2350
    %v2353 = vadd.s32 %v2352, %v2342
    %v2354 = vadd.s32 %v2353, %v2344
    %v2355 = vshrl.u32 %v2354, 2
    %v2356 = vmul.u32 %v2355, 5
    %v2357 = vsub.s32 %v2333, %v2356
    %v2358 = vsub.s32 0, %v2357
    %v2359 = vsel %vm2331, %v2358, %v2357
    %vm2360 = vcmp.lt.s32.totalorder %v677, 0
    %v2361 = vsub.s32 0, %v677
    %v2362 = vsel %vm2360, %v2361, %v677
    %v2363 = vand.u32 %v2362, 65535
    %v2364 = vshrl.u32 %v2362, 16
    %v2366 = vmul.u32 %v2363, 52429
    %v2367 = vmul.u32 %v2363, 52428
    %v2368 = vmul.u32 %v2364, 52429
    %v2369 = vmul.u32 %v2364, 52428
    %v2370 = vshll.u32 %v2367, 16
    %v2371 = vshrl.u32 %v2367, 16
    %v2372 = vshll.u32 %v2368, 16
    %v2373 = vshrl.u32 %v2368, 16
    %vm2374 = vc.u32 %v2366, %v2370
    %v2375 = vsel %vm2374, 1, 0
    %v2376 = vadd.s32 %v2366, %v2370
    %v2377 = vadd.s32 %v2369, %v2375
    %vm2378 = vc.u32 %v2376, %v2372
    %v2379 = vsel %vm2378, 1, 0
    %v2380 = vadd.s32 %v2376, %v2372
    %v2381 = vadd.s32 %v2377, %v2379
    %v2382 = vadd.s32 %v2381, %v2371
    %v2383 = vadd.s32 %v2382, %v2373
    %v2384 = vshrl.u32 %v2383, 2
    %v2385 = vmul.u32 %v2384, 5
    %v2386 = vsub.s32 %v2362, %v2385
    %v2387 = vsub.s32 0, %v2386
    %v2388 = vsel %vm2360, %v2387, %v2386
    %vm2389 = vcmp.lt.s32.totalorder %v678, 0
    %v2390 = vsub.s32 0, %v678
    %v2391 = vsel %vm2389, %v2390, %v678
    %v2392 = vand.u32 %v2391, 65535
    %v2393 = vshrl.u32 %v2391, 16
    %v2395 = vmul.u32 %v2392, 52429
    %v2396 = vmul.u32 %v2392, 52428
    %v2397 = vmul.u32 %v2393, 52429
    %v2398 = vmul.u32 %v2393, 52428
    %v2399 = vshll.u32 %v2396, 16
    %v2400 = vshrl.u32 %v2396, 16
    %v2401 = vshll.u32 %v2397, 16
    %v2402 = vshrl.u32 %v2397, 16
    %vm2403 = vc.u32 %v2395, %v2399
    %v2404 = vsel %vm2403, 1, 0
    %v2405 = vadd.s32 %v2395, %v2399
    %v2406 = vadd.s32 %v2398, %v2404
    %vm2407 = vc.u32 %v2405, %v2401
    %v2408 = vsel %vm2407, 1, 0
    %v2409 = vadd.s32 %v2405, %v2401
    %v2410 = vadd.s32 %v2406, %v2408
    %v2411 = vadd.s32 %v2410, %v2400
    %v2412 = vadd.s32 %v2411, %v2402
    %v2413 = vshrl.u32 %v2412, 2
    %v2414 = vmul.u32 %v2413, 5
    %v2415 = vsub.s32 %v2391, %v2414
    %v2416 = vsub.s32 0, %v2415
    %v2417 = vsel %vm2389, %v2416, %v2415
    %vm2418 = vcmp.lt.s32.totalorder %v679, 0
    %v2419 = vsub.s32 0, %v679
    %v2420 = vsel %vm2418, %v2419, %v679
    %v2421 = vand.u32 %v2420, 65535
    %v2422 = vshrl.u32 %v2420, 16
    %v2424 = vmul.u32 %v2421, 52429
    %v2425 = vmul.u32 %v2421, 52428
    %v2426 = vmul.u32 %v2422, 52429
    %v2427 = vmul.u32 %v2422, 52428
    %v2428 = vshll.u32 %v2425, 16
    %v2429 = vshrl.u32 %v2425, 16
    %v2430 = vshll.u32 %v2426, 16
    %v2431 = vshrl.u32 %v2426, 16
    %vm2432 = vc.u32 %v2424, %v2428
    %v2433 = vsel %vm2432, 1, 0
    %v2434 = vadd.s32 %v2424, %v2428
    %v2435 = vadd.s32 %v2427, %v2433
    %vm2436 = vc.u32 %v2434, %v2430
    %v2437 = vsel %vm2436, 1, 0
    %v2438 = vadd.s32 %v2434, %v2430
    %v2439 = vadd.s32 %v2435, %v2437
    %v2440 = vadd.s32 %v2439, %v2429
    %v2441 = vadd.s32 %v2440, %v2431
    %v2442 = vshrl.u32 %v2441, 2
    %v2443 = vmul.u32 %v2442, 5
    %v2444 = vsub.s32 %v2420, %v2443
    %v2445 = vsub.s32 0, %v2444
    %v2446 = vsel %vm2418, %v2445, %v2444
    %vm2447 = vcmp.lt.s32.totalorder %v680, 0
    %v2448 = vsub.s32 0, %v680
    %v2449 = vsel %vm2447, %v2448, %v680
    %v2450 = vand.u32 %v2449, 65535
    %v2451 = vshrl.u32 %v2449, 16
    %v2453 = vmul.u32 %v2450, 52429
    %v2454 = vmul.u32 %v2450, 52428
    %v2455 = vmul.u32 %v2451, 52429
    %v2456 = vmul.u32 %v2451, 52428
    %v2457 = vshll.u32 %v2454, 16
    %v2458 = vshrl.u32 %v2454, 16
    %v2459 = vshll.u32 %v2455, 16
    %v2460 = vshrl.u32 %v2455, 16
    %vm2461 = vc.u32 %v2453, %v2457
    %v2462 = vsel %vm2461, 1, 0
    %v2463 = vadd.s32 %v2453, %v2457
    %v2464 = vadd.s32 %v2456, %v2462
    %vm2465 = vc.u32 %v2463, %v2459
    %v2466 = vsel %vm2465, 1, 0
    %v2467 = vadd.s32 %v2463, %v2459
    %v2468 = vadd.s32 %v2464, %v2466
    %v2469 = vadd.s32 %v2468, %v2458
    %v2470 = vadd.s32 %v2469, %v2460
    %v2471 = vshrl.u32 %v2470, 2
    %v2472 = vmul.u32 %v2471, 5
    %v2473 = vsub.s32 %v2449, %v2472
    %v2474 = vsub.s32 0, %v2473
    %v2475 = vsel %vm2447, %v2474, %v2473
    %vm2476 = vcmp.lt.s32.totalorder %v681, 0
    %v2477 = vsub.s32 0, %v681
    %v2478 = vsel %vm2476, %v2477, %v681
    %v2479 = vand.u32 %v2478, 65535
    %v2480 = vshrl.u32 %v2478, 16
    %v2482 = vmul.u32 %v2479, 52429
    %v2483 = vmul.u32 %v2479, 52428
    %v2484 = vmul.u32 %v2480, 52429
    %v2485 = vmul.u32 %v2480, 52428
    %v2486 = vshll.u32 %v2483, 16
    %v2487 = vshrl.u32 %v2483, 16
    %v2488 = vshll.u32 %v2484, 16
    %v2489 = vshrl.u32 %v2484, 16
    %vm2490 = vc.u32 %v2482, %v2486
    %v2491 = vsel %vm2490, 1, 0
    %v2492 = vadd.s32 %v2482, %v2486
    %v2493 = vadd.s32 %v2485, %v2491
    %vm2494 = vc.u32 %v2492, %v2488
    %v2495 = vsel %vm2494, 1, 0
    %v2496 = vadd.s32 %v2492, %v2488
    %v2497 = vadd.s32 %v2493, %v2495
    %v2498 = vadd.s32 %v2497, %v2487
    %v2499 = vadd.s32 %v2498, %v2489
    %v2500 = vshrl.u32 %v2499, 2
    %v2501 = vmul.u32 %v2500, 5
    %v2502 = vsub.s32 %v2478, %v2501
    %v2503 = vsub.s32 0, %v2502
    %v2504 = vsel %vm2476, %v2503, %v2502
    %vm2505 = vcmp.lt.s32.totalorder %v682, 0
    %v2506 = vsub.s32 0, %v682
    %v2507 = vsel %vm2505, %v2506, %v682
    %v2508 = vand.u32 %v2507, 65535
    %v2509 = vshrl.u32 %v2507, 16
    %v2511 = vmul.u32 %v2508, 52429
    %v2512 = vmul.u32 %v2508, 52428
    %v2513 = vmul.u32 %v2509, 52429
    %v2514 = vmul.u32 %v2509, 52428
    %v2515 = vshll.u32 %v2512, 16
    %v2516 = vshrl.u32 %v2512, 16
    %v2517 = vshll.u32 %v2513, 16
    %v2518 = vshrl.u32 %v2513, 16
    %vm2519 = vc.u32 %v2511, %v2515
    %v2520 = vsel %vm2519, 1, 0
    %v2521 = vadd.s32 %v2511, %v2515
    %v2522 = vadd.s32 %v2514, %v2520
    %vm2523 = vc.u32 %v2521, %v2517
    %v2524 = vsel %vm2523, 1, 0
    %v2525 = vadd.s32 %v2521, %v2517
    %v2526 = vadd.s32 %v2522, %v2524
    %v2527 = vadd.s32 %v2526, %v2516
    %v2528 = vadd.s32 %v2527, %v2518
    %v2529 = vshrl.u32 %v2528, 2
    %v2530 = vmul.u32 %v2529, 5
    %v2531 = vsub.s32 %v2507, %v2530
    %v2532 = vsub.s32 0, %v2531
    %v2533 = vsel %vm2505, %v2532, %v2531
    %vm2534 = vcmp.lt.s32.totalorder %v683, 0
    %v2535 = vsub.s32 0, %v683
    %v2536 = vsel %vm2534, %v2535, %v683
    %v2537 = vand.u32 %v2536, 65535
    %v2538 = vshrl.u32 %v2536, 16
    %v2540 = vmul.u32 %v2537, 52429
    %v2541 = vmul.u32 %v2537, 52428
    %v2542 = vmul.u32 %v2538, 52429
    %v2543 = vmul.u32 %v2538, 52428
    %v2544 = vshll.u32 %v2541, 16
    %v2545 = vshrl.u32 %v2541, 16
    %v2546 = vshll.u32 %v2542, 16
    %v2547 = vshrl.u32 %v2542, 16
    %vm2548 = vc.u32 %v2540, %v2544
    %v2549 = vsel %vm2548, 1, 0
    %v2550 = vadd.s32 %v2540, %v2544
    %v2551 = vadd.s32 %v2543, %v2549
    %vm2552 = vc.u32 %v2550, %v2546
    %v2553 = vsel %vm2552, 1, 0
    %v2554 = vadd.s32 %v2550, %v2546
    %v2555 = vadd.s32 %v2551, %v2553
    %v2556 = vadd.s32 %v2555, %v2545
    %v2557 = vadd.s32 %v2556, %v2547
    %v2558 = vshrl.u32 %v2557, 2
    %v2559 = vmul.u32 %v2558, 5
    %v2560 = vsub.s32 %v2536, %v2559
    %v2561 = vsub.s32 0, %v2560
    %v2562 = vsel %vm2534, %v2561, %v2560
    %vm2563 = vcmp.lt.s32.totalorder %v684, 0
    %v2564 = vsub.s32 0, %v684
    %v2565 = vsel %vm2563, %v2564, %v684
    %v2566 = vand.u32 %v2565, 65535
    %v2567 = vshrl.u32 %v2565, 16
    %v2569 = vmul.u32 %v2566, 52429
    %v2570 = vmul.u32 %v2566, 52428
    %v2571 = vmul.u32 %v2567, 52429
    %v2572 = vmul.u32 %v2567, 52428
    %v2573 = vshll.u32 %v2570, 16
    %v2574 = vshrl.u32 %v2570, 16
    %v2575 = vshll.u32 %v2571, 16
    %v2576 = vshrl.u32 %v2571, 16
    %vm2577 = vc.u32 %v2569, %v2573
    %v2578 = vsel %vm2577, 1, 0
    %v2579 = vadd.s32 %v2569, %v2573
    %v2580 = vadd.s32 %v2572, %v2578
    %vm2581 = vc.u32 %v2579, %v2575
    %v2582 = vsel %vm2581, 1, 0
    %v2583 = vadd.s32 %v2579, %v2575
    %v2584 = vadd.s32 %v2580, %v2582
    %v2585 = vadd.s32 %v2584, %v2574
    %v2586 = vadd.s32 %v2585, %v2576
    %v2587 = vshrl.u32 %v2586, 2
    %v2588 = vmul.u32 %v2587, 5
    %v2589 = vsub.s32 %v2565, %v2588
    %v2590 = vsub.s32 0, %v2589
    %v2591 = vsel %vm2563, %v2590, %v2589
    %vm2592 = vcmp.lt.s32.totalorder %v685, 0
    %v2593 = vsub.s32 0, %v685
    %v2594 = vsel %vm2592, %v2593, %v685
    %v2595 = vand.u32 %v2594, 65535
    %v2596 = vshrl.u32 %v2594, 16
    %v2598 = vmul.u32 %v2595, 52429
    %v2599 = vmul.u32 %v2595, 52428
    %v2600 = vmul.u32 %v2596, 52429
    %v2601 = vmul.u32 %v2596, 52428
    %v2602 = vshll.u32 %v2599, 16
    %v2603 = vshrl.u32 %v2599, 16
    %v2604 = vshll.u32 %v2600, 16
    %v2605 = vshrl.u32 %v2600, 16
    %vm2606 = vc.u32 %v2598, %v2602
    %v2607 = vsel %vm2606, 1, 0
    %v2608 = vadd.s32 %v2598, %v2602
    %v2609 = vadd.s32 %v2601, %v2607
    %vm2610 = vc.u32 %v2608, %v2604
    %v2611 = vsel %vm2610, 1, 0
    %v2612 = vadd.s32 %v2608, %v2604
    %v2613 = vadd.s32 %v2609, %v2611
    %v2614 = vadd.s32 %v2613, %v2603
    %v2615 = vadd.s32 %v2614, %v2605
    %v2616 = vshrl.u32 %v2615, 2
    %v2617 = vmul.u32 %v2616, 5
    %v2618 = vsub.s32 %v2594, %v2617
    %v2619 = vsub.s32 0, %v2618
    %v2620 = vsel %vm2592, %v2619, %v2618
    %vm2621 = vcmp.lt.s32.totalorder %v686, 0
    %v2622 = vsub.s32 0, %v686
    %v2623 = vsel %vm2621, %v2622, %v686
    %v2624 = vand.u32 %v2623, 65535
    %v2625 = vshrl.u32 %v2623, 16
    %v2627 = vmul.u32 %v2624, 52429
    %v2628 = vmul.u32 %v2624, 52428
    %v2629 = vmul.u32 %v2625, 52429
    %v2630 = vmul.u32 %v2625, 52428
    %v2631 = vshll.u32 %v2628, 16
    %v2632 = vshrl.u32 %v2628, 16
    %v2633 = vshll.u32 %v2629, 16
    %v2634 = vshrl.u32 %v2629, 16
    %vm2635 = vc.u32 %v2627, %v2631
    %v2636 = vsel %vm2635, 1, 0
    %v2637 = vadd.s32 %v2627, %v2631
    %v2638 = vadd.s32 %v2630, %v2636
    %vm2639 = vc.u32 %v2637, %v2633
    %v2640 = vsel %vm2639, 1, 0
    %v2641 = vadd.s32 %v2637, %v2633
    %v2642 = vadd.s32 %v2638, %v2640
    %v2643 = vadd.s32 %v2642, %v2632
    %v2644 = vadd.s32 %v2643, %v2634
    %v2645 = vshrl.u32 %v2644, 2
    %v2646 = vmul.u32 %v2645, 5
    %v2647 = vsub.s32 %v2623, %v2646
    %v2648 = vsub.s32 0, %v2647
    %v2649 = vsel %vm2621, %v2648, %v2647
    %vm2650 = vcmp.lt.s32.totalorder %v687, 0
    %v2651 = vsub.s32 0, %v687
    %v2652 = vsel %vm2650, %v2651, %v687
    %v2653 = vand.u32 %v2652, 65535
    %v2654 = vshrl.u32 %v2652, 16
    %v2656 = vmul.u32 %v2653, 52429
    %v2657 = vmul.u32 %v2653, 52428
    %v2658 = vmul.u32 %v2654, 52429
    %v2659 = vmul.u32 %v2654, 52428
    %v2660 = vshll.u32 %v2657, 16
    %v2661 = vshrl.u32 %v2657, 16
    %v2662 = vshll.u32 %v2658, 16
    %v2663 = vshrl.u32 %v2658, 16
    %vm2664 = vc.u32 %v2656, %v2660
    %v2665 = vsel %vm2664, 1, 0
    %v2666 = vadd.s32 %v2656, %v2660
    %v2667 = vadd.s32 %v2659, %v2665
    %vm2668 = vc.u32 %v2666, %v2662
    %v2669 = vsel %vm2668, 1, 0
    %v2670 = vadd.s32 %v2666, %v2662
    %v2671 = vadd.s32 %v2667, %v2669
    %v2672 = vadd.s32 %v2671, %v2661
    %v2673 = vadd.s32 %v2672, %v2663
    %v2674 = vshrl.u32 %v2673, 2
    %v2675 = vmul.u32 %v2674, 5
    %v2676 = vsub.s32 %v2652, %v2675
    %v2677 = vsub.s32 0, %v2676
    %v2678 = vsel %vm2650, %v2677, %v2676
    %vm2679 = vcmp.lt.s32.totalorder %v688, 0
    %v2680 = vsub.s32 0, %v688
    %v2681 = vsel %vm2679, %v2680, %v688
    %v2682 = vand.u32 %v2681, 65535
    %v2683 = vshrl.u32 %v2681, 16
    %v2685 = vmul.u32 %v2682, 52429
    %v2686 = vmul.u32 %v2682, 52428
    %v2687 = vmul.u32 %v2683, 52429
    %v2688 = vmul.u32 %v2683, 52428
    %v2689 = vshll.u32 %v2686, 16
    %v2690 = vshrl.u32 %v2686, 16
    %v2691 = vshll.u32 %v2687, 16
    %v2692 = vshrl.u32 %v2687, 16
    %vm2693 = vc.u32 %v2685, %v2689
    %v2694 = vsel %vm2693, 1, 0
    %v2695 = vadd.s32 %v2685, %v2689
    %v2696 = vadd.s32 %v2688, %v2694
    %vm2697 = vc.u32 %v2695, %v2691
    %v2698 = vsel %vm2697, 1, 0
    %v2699 = vadd.s32 %v2695, %v2691
    %v2700 = vadd.s32 %v2696, %v2698
    %v2701 = vadd.s32 %v2700, %v2690
    %v2702 = vadd.s32 %v2701, %v2692
    %v2703 = vshrl.u32 %v2702, 2
    %v2704 = vmul.u32 %v2703, 5
    %v2705 = vsub.s32 %v2681, %v2704
    %v2706 = vsub.s32 0, %v2705
    %v2707 = vsel %vm2679, %v2706, %v2705
    %vm2708 = vcmp.lt.s32.totalorder %v689, 0
    %v2709 = vsub.s32 0, %v689
    %v2710 = vsel %vm2708, %v2709, %v689
    %v2711 = vand.u32 %v2710, 65535
    %v2712 = vshrl.u32 %v2710, 16
    %v2714 = vmul.u32 %v2711, 52429
    %v2715 = vmul.u32 %v2711, 52428
    %v2716 = vmul.u32 %v2712, 52429
    %v2717 = vmul.u32 %v2712, 52428
    %v2718 = vshll.u32 %v2715, 16
    %v2719 = vshrl.u32 %v2715, 16
    %v2720 = vshll.u32 %v2716, 16
    %v2721 = vshrl.u32 %v2716, 16
    %vm2722 = vc.u32 %v2714, %v2718
    %v2723 = vsel %vm2722, 1, 0
    %v2724 = vadd.s32 %v2714, %v2718
    %v2725 = vadd.s32 %v2717, %v2723
    %vm2726 = vc.u32 %v2724, %v2720
    %v2727 = vsel %vm2726, 1, 0
    %v2728 = vadd.s32 %v2724, %v2720
    %v2729 = vadd.s32 %v2725, %v2727
    %v2730 = vadd.s32 %v2729, %v2719
    %v2731 = vadd.s32 %v2730, %v2721
    %v2732 = vshrl.u32 %v2731, 2
    %v2733 = vmul.u32 %v2732, 5
    %v2734 = vsub.s32 %v2710, %v2733
    %v2735 = vsub.s32 0, %v2734
    %v2736 = vsel %vm2708, %v2735, %v2734
    %vm2737 = vcmp.lt.s32.totalorder %v690, 0
    %v2738 = vsub.s32 0, %v690
    %v2739 = vsel %vm2737, %v2738, %v690
    %v2740 = vand.u32 %v2739, 65535
    %v2741 = vshrl.u32 %v2739, 16
    %v2743 = vmul.u32 %v2740, 52429
    %v2744 = vmul.u32 %v2740, 52428
    %v2745 = vmul.u32 %v2741, 52429
    %v2746 = vmul.u32 %v2741, 52428
    %v2747 = vshll.u32 %v2744, 16
    %v2748 = vshrl.u32 %v2744, 16
    %v2749 = vshll.u32 %v2745, 16
    %v2750 = vshrl.u32 %v2745, 16
    %vm2751 = vc.u32 %v2743, %v2747
    %v2752 = vsel %vm2751, 1, 0
    %v2753 = vadd.s32 %v2743, %v2747
    %v2754 = vadd.s32 %v2746, %v2752
    %vm2755 = vc.u32 %v2753, %v2749
    %v2756 = vsel %vm2755, 1, 0
    %v2757 = vadd.s32 %v2753, %v2749
    %v2758 = vadd.s32 %v2754, %v2756
    %v2759 = vadd.s32 %v2758, %v2748
    %v2760 = vadd.s32 %v2759, %v2750
    %v2761 = vshrl.u32 %v2760, 2
    %v2762 = vmul.u32 %v2761, 5
    %v2763 = vsub.s32 %v2739, %v2762
    %v2764 = vsub.s32 0, %v2763
    %v2765 = vsel %vm2737, %v2764, %v2763
    %vm2766 = vcmp.lt.s32.totalorder %v691, 0
    %v2767 = vsub.s32 0, %v691
    %v2768 = vsel %vm2766, %v2767, %v691
    %v2769 = vand.u32 %v2768, 65535
    %v2770 = vshrl.u32 %v2768, 16
    %v2772 = vmul.u32 %v2769, 52429
    %v2773 = vmul.u32 %v2769, 52428
    %v2774 = vmul.u32 %v2770, 52429
    %v2775 = vmul.u32 %v2770, 52428
    %v2776 = vshll.u32 %v2773, 16
    %v2777 = vshrl.u32 %v2773, 16
    %v2778 = vshll.u32 %v2774, 16
    %v2779 = vshrl.u32 %v2774, 16
    %vm2780 = vc.u32 %v2772, %v2776
    %v2781 = vsel %vm2780, 1, 0
    %v2782 = vadd.s32 %v2772, %v2776
    %v2783 = vadd.s32 %v2775, %v2781
    %vm2784 = vc.u32 %v2782, %v2778
    %v2785 = vsel %vm2784, 1, 0
    %v2786 = vadd.s32 %v2782, %v2778
    %v2787 = vadd.s32 %v2783, %v2785
    %v2788 = vadd.s32 %v2787, %v2777
    %v2789 = vadd.s32 %v2788, %v2779
    %v2790 = vshrl.u32 %v2789, 2
    %v2791 = vmul.u32 %v2790, 5
    %v2792 = vsub.s32 %v2768, %v2791
    %v2793 = vsub.s32 0, %v2792
    %v2794 = vsel %vm2766, %v2793, %v2792
    %vm2795 = vcmp.lt.s32.totalorder %v692, 0
    %v2796 = vsub.s32 0, %v692
    %v2797 = vsel %vm2795, %v2796, %v692
    %v2798 = vand.u32 %v2797, 65535
    %v2799 = vshrl.u32 %v2797, 16
    %v2801 = vmul.u32 %v2798, 52429
    %v2802 = vmul.u32 %v2798, 52428
    %v2803 = vmul.u32 %v2799, 52429
    %v2804 = vmul.u32 %v2799, 52428
    %v2805 = vshll.u32 %v2802, 16
    %v2806 = vshrl.u32 %v2802, 16
    %v2807 = vshll.u32 %v2803, 16
    %v2808 = vshrl.u32 %v2803, 16
    %vm2809 = vc.u32 %v2801, %v2805
    %v2810 = vsel %vm2809, 1, 0
    %v2811 = vadd.s32 %v2801, %v2805
    %v2812 = vadd.s32 %v2804, %v2810
    %vm2813 = vc.u32 %v2811, %v2807
    %v2814 = vsel %vm2813, 1, 0
    %v2815 = vadd.s32 %v2811, %v2807
    %v2816 = vadd.s32 %v2812, %v2814
    %v2817 = vadd.s32 %v2816, %v2806
    %v2818 = vadd.s32 %v2817, %v2808
    %v2819 = vshrl.u32 %v2818, 2
    %v2820 = vmul.u32 %v2819, 5
    %v2821 = vsub.s32 %v2797, %v2820
    %v2822 = vsub.s32 0, %v2821
    %v2823 = vsel %vm2795, %v2822, %v2821
    %vm2824 = vcmp.lt.s32.totalorder %v693, 0
    %v2825 = vsub.s32 0, %v693
    %v2826 = vsel %vm2824, %v2825, %v693
    %v2827 = vand.u32 %v2826, 65535
    %v2828 = vshrl.u32 %v2826, 16
    %v2830 = vmul.u32 %v2827, 52429
    %v2831 = vmul.u32 %v2827, 52428
    %v2832 = vmul.u32 %v2828, 52429
    %v2833 = vmul.u32 %v2828, 52428
    %v2834 = vshll.u32 %v2831, 16
    %v2835 = vshrl.u32 %v2831, 16
    %v2836 = vshll.u32 %v2832, 16
    %v2837 = vshrl.u32 %v2832, 16
    %vm2838 = vc.u32 %v2830, %v2834
    %v2839 = vsel %vm2838, 1, 0
    %v2840 = vadd.s32 %v2830, %v2834
    %v2841 = vadd.s32 %v2833, %v2839
    %vm2842 = vc.u32 %v2840, %v2836
    %v2843 = vsel %vm2842, 1, 0
    %v2844 = vadd.s32 %v2840, %v2836
    %v2845 = vadd.s32 %v2841, %v2843
    %v2846 = vadd.s32 %v2845, %v2835
    %v2847 = vadd.s32 %v2846, %v2837
    %v2848 = vshrl.u32 %v2847, 2
    %v2849 = vmul.u32 %v2848, 5
    %v2850 = vsub.s32 %v2826, %v2849
    %v2851 = vsub.s32 0, %v2850
    %v2852 = vsel %vm2824, %v2851, %v2850
    %vm2853 = vcmp.ne.s32.totalorder %v2185, 0
    %vm2854 = vcmp.ne.s32.totalorder %v2214, 0
    %vm2855 = vcmp.ne.s32.totalorder %v2243, 0
    %vm2856 = vcmp.ne.s32.totalorder %v2272, 0
    %vm2857 = vcmp.ne.s32.totalorder %v2301, 0
    %vm2858 = vcmp.ne.s32.totalorder %v2330, 0
    %vm2859 = vcmp.ne.s32.totalorder %v2359, 0
    %vm2860 = vcmp.ne.s32.totalorder %v2388, 0
    %vm2861 = vcmp.ne.s32.totalorder %v2417, 0
    %vm2862 = vcmp.ne.s32.totalorder %v2446, 0
    %vm2863 = vcmp.ne.s32.totalorder %v2475, 0
    %vm2864 = vcmp.ne.s32.totalorder %v2504, 0
    %vm2865 = vcmp.ne.s32.totalorder %v2533, 0
    %vm2866 = vcmp.ne.s32.totalorder %v2562, 0
    %vm2867 = vcmp.ne.s32.totalorder %v2591, 0
    %vm2868 = vcmp.ne.s32.totalorder %v2620, 0
    %vm2869 = vcmp.ne.s32.totalorder %v2649, 0
    %vm2870 = vcmp.ne.s32.totalorder %v2678, 0
    %vm2871 = vcmp.ne.s32.totalorder %v2707, 0
    %vm2872 = vcmp.ne.s32.totalorder %v2736, 0
    %vm2873 = vcmp.ne.s32.totalorder %v2765, 0
    %vm2874 = vcmp.ne.s32.totalorder %v2794, 0
    %vm2875 = vcmp.ne.s32.totalorder %v2823, 0
    %vm2876 = vcmp.ne.s32.totalorder %v2852, 0
    %vm2877 = vcmp.lt.s32.totalorder %v2185, 0
    %vm2878 = vcmp.lt.s32.totalorder %v2214, 0
    %vm2879 = vcmp.lt.s32.totalorder %v2243, 0
    %vm2880 = vcmp.lt.s32.totalorder %v2272, 0
    %vm2881 = vcmp.lt.s32.totalorder %v2301, 0
    %vm2882 = vcmp.lt.s32.totalorder %v2330, 0
    %vm2883 = vcmp.lt.s32.totalorder %v2359, 0
    %vm2884 = vcmp.lt.s32.totalorder %v2388, 0
    %vm2885 = vcmp.lt.s32.totalorder %v2417, 0
    %vm2886 = vcmp.lt.s32.totalorder %v2446, 0
    %vm2887 = vcmp.lt.s32.totalorder %v2475, 0
    %vm2888 = vcmp.lt.s32.totalorder %v2504, 0
    %vm2889 = vcmp.lt.s32.totalorder %v2533, 0
    %vm2890 = vcmp.lt.s32.totalorder %v2562, 0
    %vm2891 = vcmp.lt.s32.totalorder %v2591, 0
    %vm2892 = vcmp.lt.s32.totalorder %v2620, 0
    %vm2893 = vcmp.lt.s32.totalorder %v2649, 0
    %vm2894 = vcmp.lt.s32.totalorder %v2678, 0
    %vm2895 = vcmp.lt.s32.totalorder %v2707, 0
    %vm2896 = vcmp.lt.s32.totalorder %v2736, 0
    %vm2897 = vcmp.lt.s32.totalorder %v2765, 0
    %vm2898 = vcmp.lt.s32.totalorder %v2794, 0
    %vm2899 = vcmp.lt.s32.totalorder %v2823, 0
    %vm2900 = vcmp.lt.s32.totalorder %v2852, 0
    %vm2901 = vmand %vm2877, %vm2853
    %vm2902 = vmand %vm2878, %vm2854
    %vm2903 = vmand %vm2879, %vm2855
    %vm2904 = vmand %vm2880, %vm2856
    %vm2905 = vmand %vm2881, %vm2857
    %vm2906 = vmand %vm2882, %vm2858
    %vm2907 = vmand %vm2883, %vm2859
    %vm2908 = vmand %vm2884, %vm2860
    %vm2909 = vmand %vm2885, %vm2861
    %vm2910 = vmand %vm2886, %vm2862
    %vm2911 = vmand %vm2887, %vm2863
    %vm2912 = vmand %vm2888, %vm2864
    %vm2913 = vmand %vm2889, %vm2865
    %vm2914 = vmand %vm2890, %vm2866
    %vm2915 = vmand %vm2891, %vm2867
    %vm2916 = vmand %vm2892, %vm2868
    %vm2917 = vmand %vm2893, %vm2869
    %vm2918 = vmand %vm2894, %vm2870
    %vm2919 = vmand %vm2895, %vm2871
    %vm2920 = vmand %vm2896, %vm2872
    %vm2921 = vmand %vm2897, %vm2873
    %vm2922 = vmand %vm2898, %vm2874
    %vm2923 = vmand %vm2899, %vm2875
    %vm2924 = vmand %vm2900, %vm2876
    %v2925 = vadd.s32 %v2185, 5
    %v2926 = vadd.s32 %v2214, 5
    %v2927 = vadd.s32 %v2243, 5
    %v2928 = vadd.s32 %v2272, 5
    %v2929 = vadd.s32 %v2301, 5
    %v2930 = vadd.s32 %v2330, 5
    %v2931 = vadd.s32 %v2359, 5
    %v2932 = vadd.s32 %v2388, 5
    %v2933 = vadd.s32 %v2417, 5
    %v2934 = vadd.s32 %v2446, 5
    %v2935 = vadd.s32 %v2475, 5
    %v2936 = vadd.s32 %v2504, 5
    %v2937 = vadd.s32 %v2533, 5
    %v2938 = vadd.s32 %v2562, 5
    %v2939 = vadd.s32 %v2591, 5
    %v2940 = vadd.s32 %v2620, 5
    %v2941 = vadd.s32 %v2649, 5
    %v2942 = vadd.s32 %v2678, 5
    %v2943 = vadd.s32 %v2707, 5
    %v2944 = vadd.s32 %v2736, 5
    %v2945 = vadd.s32 %v2765, 5
    %v2946 = vadd.s32 %v2794, 5
    %v2947 = vadd.s32 %v2823, 5
    %v2948 = vadd.s32 %v2852, 5
    %v2949 = vsel %vm2901, %v2925, %v2185
    %v2950 = vsel %vm2902, %v2926, %v2214
    %v2951 = vsel %vm2903, %v2927, %v2243
    %v2952 = vsel %vm2904, %v2928, %v2272
    %v2953 = vsel %vm2905, %v2929, %v2301
    %v2954 = vsel %vm2906, %v2930, %v2330
    %v2955 = vsel %vm2907, %v2931, %v2359
    %v2956 = vsel %vm2908, %v2932, %v2388
    %v2957 = vsel %vm2909, %v2933, %v2417
    %v2958 = vsel %vm2910, %v2934, %v2446
    %v2959 = vsel %vm2911, %v2935, %v2475
    %v2960 = vsel %vm2912, %v2936, %v2504
    %v2961 = vsel %vm2913, %v2937, %v2533
    %v2962 = vsel %vm2914, %v2938, %v2562
    %v2963 = vsel %vm2915, %v2939, %v2591
    %v2964 = vsel %vm2916, %v2940, %v2620
    %v2965 = vsel %vm2917, %v2941, %v2649
    %v2966 = vsel %vm2918, %v2942, %v2678
    %v2967 = vsel %vm2919, %v2943, %v2707
    %v2968 = vsel %vm2920, %v2944, %v2736
    %v2969 = vsel %vm2921, %v2945, %v2765
    %v2970 = vsel %vm2922, %v2946, %v2794
    %v2971 = vsel %vm2923, %v2947, %v2823
    %v2972 = vsel %vm2924, %v2948, %v2852
    %vm2973 = vcmp.eq.s32.totalorder %v2949, 0
    %vm2974 = vcmp.eq.s32.totalorder %v2950, 0
    %vm2975 = vcmp.eq.s32.totalorder %v2951, 0
    %vm2976 = vcmp.eq.s32.totalorder %v2952, 0
    %vm2977 = vcmp.eq.s32.totalorder %v2953, 0
    %vm2978 = vcmp.eq.s32.totalorder %v2954, 0
    %vm2979 = vcmp.eq.s32.totalorder %v2955, 0
    %vm2980 = vcmp.eq.s32.totalorder %v2956, 0
    %vm2981 = vcmp.eq.s32.totalorder %v2957, 0
    %vm2982 = vcmp.eq.s32.totalorder %v2958, 0
    %vm2983 = vcmp.eq.s32.totalorder %v2959, 0
    %vm2984 = vcmp.eq.s32.totalorder %v2960, 0
    %vm2985 = vcmp.eq.s32.totalorder %v2961, 0
    %vm2986 = vcmp.eq.s32.totalorder %v2962, 0
    %vm2987 = vcmp.eq.s32.totalorder %v2963, 0
    %vm2988 = vcmp.eq.s32.totalorder %v2964, 0
    %vm2989 = vcmp.eq.s32.totalorder %v2965, 0
    %vm2990 = vcmp.eq.s32.totalorder %v2966, 0
    %vm2991 = vcmp.eq.s32.totalorder %v2967, 0
    %vm2992 = vcmp.eq.s32.totalorder %v2968, 0
    %vm2993 = vcmp.eq.s32.totalorder %v2969, 0
    %vm2994 = vcmp.eq.s32.totalorder %v2970, 0
    %vm2995 = vcmp.eq.s32.totalorder %v2971, 0
    %vm2996 = vcmp.eq.s32.totalorder %v2972, 0
    %vm2997 = vcmp.le.s32.totalorder %v670, 11
    %vm2998 = vcmp.le.s32.totalorder %v671, 11
    %vm2999 = vcmp.le.s32.totalorder %v672, 11
    %vm3000 = vcmp.le.s32.totalorder %v673, 11
    %vm3001 = vcmp.le.s32.totalorder %v674, 11
    %vm3002 = vcmp.le.s32.totalorder %v675, 11
    %vm3003 = vcmp.le.s32.totalorder %v676, 11
    %vm3004 = vcmp.le.s32.totalorder %v677, 11
    %vm3005 = vcmp.le.s32.totalorder %v678, 11
    %vm3006 = vcmp.le.s32.totalorder %v679, 11
    %vm3007 = vcmp.le.s32.totalorder %v680, 11
    %vm3008 = vcmp.le.s32.totalorder %v681, 11
    %vm3009 = vcmp.le.s32.totalorder %v682, 11
    %vm3010 = vcmp.le.s32.totalorder %v683, 11
    %vm3011 = vcmp.le.s32.totalorder %v684, 11
    %vm3012 = vcmp.le.s32.totalorder %v685, 11
    %vm3013 = vcmp.le.s32.totalorder %v686, 11
    %vm3014 = vcmp.le.s32.totalorder %v687, 11
    %vm3015 = vcmp.le.s32.totalorder %v688, 11
    %vm3016 = vcmp.le.s32.totalorder %v689, 11
    %vm3017 = vcmp.le.s32.totalorder %v690, 11
    %vm3018 = vcmp.le.s32.totalorder %v691, 11
    %vm3019 = vcmp.le.s32.totalorder %v692, 11
    %vm3020 = vcmp.le.s32.totalorder %v693, 11
    %vm3021 = vmand %vm2973, %vm2997
    %vm3022 = vmand %vm2974, %vm2998
    %vm3023 = vmand %vm2975, %vm2999
    %vm3024 = vmand %vm2976, %vm3000
    %vm3025 = vmand %vm2977, %vm3001
    %vm3026 = vmand %vm2978, %vm3002
    %vm3027 = vmand %vm2979, %vm3003
    %vm3028 = vmand %vm2980, %vm3004
    %vm3029 = vmand %vm2981, %vm3005
    %vm3030 = vmand %vm2982, %vm3006
    %vm3031 = vmand %vm2983, %vm3007
    %vm3032 = vmand %vm2984, %vm3008
    %vm3033 = vmand %vm2985, %vm3009
    %vm3034 = vmand %vm2986, %vm3010
    %vm3035 = vmand %vm2987, %vm3011
    %vm3036 = vmand %vm2988, %vm3012
    %vm3037 = vmand %vm2989, %vm3013
    %vm3038 = vmand %vm2990, %vm3014
    %vm3039 = vmand %vm2991, %vm3015
    %vm3040 = vmand %vm2992, %vm3016
    %vm3041 = vmand %vm2993, %vm3017
    %vm3042 = vmand %vm2994, %vm3018
    %vm3043 = vmand %vm2995, %vm3019
    %vm3044 = vmand %vm2996, %vm3020
    %vm3045 = vcmp.ge.s32.totalorder %v695, 5
    %vm3046 = vmand %vm3021, %vm3045
    %vm3047 = vmand %vm3022, %vm3045
    %vm3048 = vmand %vm3023, %vm3045
    %vm3049 = vmand %vm3024, %vm3045
    %vm3050 = vmand %vm3025, %vm3045
    %vm3051 = vmand %vm3026, %vm3045
    %vm3052 = vmand %vm3027, %vm3045
    %vm3053 = vmand %vm3028, %vm3045
    %vm3054 = vmand %vm3029, %vm3045
    %vm3055 = vmand %vm3030, %vm3045
    %vm3056 = vmand %vm3031, %vm3045
    %vm3057 = vmand %vm3032, %vm3045
    %vm3058 = vmand %vm3033, %vm3045
    %vm3059 = vmand %vm3034, %vm3045
    %vm3060 = vmand %vm3035, %vm3045
    %vm3061 = vmand %vm3036, %vm3045
    %vm3062 = vmand %vm3037, %vm3045
    %vm3063 = vmand %vm3038, %vm3045
    %vm3064 = vmand %vm3039, %vm3045
    %vm3065 = vmand %vm3040, %vm3045
    %vm3066 = vmand %vm3041, %vm3045
    %vm3067 = vmand %vm3042, %vm3045
    %vm3068 = vmand %vm3043, %vm3045
    %vm3069 = vmand %vm3044, %vm3045
    %vm3070 = vcmp.lt.s32.totalorder %v695, 8
    %vm3071 = vmand %vm3046, %vm3070
    %vm3072 = vmand %vm3047, %vm3070
    %vm3073 = vmand %vm3048, %vm3070
    %vm3074 = vmand %vm3049, %vm3070
    %vm3075 = vmand %vm3050, %vm3070
    %vm3076 = vmand %vm3051, %vm3070
    %vm3077 = vmand %vm3052, %vm3070
    %vm3078 = vmand %vm3053, %vm3070
    %vm3079 = vmand %vm3054, %vm3070
    %vm3080 = vmand %vm3055, %vm3070
    %vm3081 = vmand %vm3056, %vm3070
    %vm3082 = vmand %vm3057, %vm3070
    %vm3083 = vmand %vm3058, %vm3070
    %vm3084 = vmand %vm3059, %vm3070
    %vm3085 = vmand %vm3060, %vm3070
    %vm3086 = vmand %vm3061, %vm3070
    %vm3087 = vmand %vm3062, %vm3070
    %vm3088 = vmand %vm3063, %vm3070
    %vm3089 = vmand %vm3064, %vm3070
    %vm3090 = vmand %vm3065, %vm3070
    %vm3091 = vmand %vm3066, %vm3070
    %vm3092 = vmand %vm3067, %vm3070
    %vm3093 = vmand %vm3068, %vm3070
    %vm3094 = vmand %vm3069, %vm3070
    %v3095 = vand.u32 2147483647, %v2133
    %v3096 = vand.u32 2147483647, %v2134
    %v3097 = vand.u32 2147483647, %v2135
    %v3098 = vand.u32 2147483647, %v2136
    %v3099 = vand.u32 2147483647, %v2137
    %v3100 = vand.u32 2147483647, %v2138
    %v3101 = vand.u32 2147483647, %v2139
    %v3102 = vand.u32 2147483647, %v2140
    %v3103 = vand.u32 2147483647, %v2141
    %v3104 = vand.u32 2147483647, %v2142
    %v3105 = vand.u32 2147483647, %v2143
    %v3106 = vand.u32 2147483647, %v2144
    %v3107 = vand.u32 2147483647, %v2145
    %v3108 = vand.u32 2147483647, %v2146
    %v3109 = vand.u32 2147483647, %v2147
    %v3110 = vand.u32 2147483647, %v2148
    %v3111 = vand.u32 2147483647, %v2149
    %v3112 = vand.u32 2147483647, %v2150
    %v3113 = vand.u32 2147483647, %v2151
    %v3114 = vand.u32 2147483647, %v2152
    %v3115 = vand.u32 2147483647, %v2153
    %v3116 = vand.u32 2147483647, %v2154
    %v3117 = vand.u32 2147483647, %v2155
    %v3118 = vand.u32 2147483647, %v2156
    %v3119 = vsel %vm3071, %v3095, 0.0
    %v3120 = vsel %vm3072, %v3096, 0.0
    %v3121 = vsel %vm3073, %v3097, 0.0
    %v3122 = vsel %vm3074, %v3098, 0.0
    %v3123 = vsel %vm3075, %v3099, 0.0
    %v3124 = vsel %vm3076, %v3100, 0.0
    %v3125 = vsel %vm3077, %v3101, 0.0
    %v3126 = vsel %vm3078, %v3102, 0.0
    %v3127 = vsel %vm3079, %v3103, 0.0
    %v3128 = vsel %vm3080, %v3104, 0.0
    %v3129 = vsel %vm3081, %v3105, 0.0
    %v3130 = vsel %vm3082, %v3106, 0.0
    %v3131 = vsel %vm3083, %v3107, 0.0
    %v3132 = vsel %vm3084, %v3108, 0.0
    %v3133 = vsel %vm3085, %v3109, 0.0
    %v3134 = vsel %vm3086, %v3110, 0.0
    %v3135 = vsel %vm3087, %v3111, 0.0
    %v3136 = vsel %vm3088, %v3112, 0.0
    %v3137 = vsel %vm3089, %v3113, 0.0
    %v3138 = vsel %vm3090, %v3114, 0.0
    %v3139 = vsel %vm3091, %v3115, 0.0
    %v3140 = vsel %vm3092, %v3116, 0.0
    %v3141 = vsel %vm3093, %v3117, 0.0
    %v3142 = vsel %vm3094, %v3118, 0.0
    %v3143 = vsel %vm1903, %v3119, 0.0
    %v3144 = vsel %vm1903, %v3120, 0.0
    %v3145 = vadd.f32 %v3143, %v3144
    %v3146 = vsel %vm1903, %v3121, 0.0
    %v3147 = vadd.f32 %v3145, %v3146
    %v3148 = vsel %vm1903, %v3122, 0.0
    %v3149 = vadd.f32 %v3147, %v3148
    %v3150 = vsel %vm1903, %v3123, 0.0
    %v3151 = vadd.f32 %v3149, %v3150
    %v3152 = vsel %vm1903, %v3124, 0.0
    %v3153 = vadd.f32 %v3151, %v3152
    %v3154 = vsel %vm1903, %v3125, 0.0
    %v3155 = vadd.f32 %v3153, %v3154
    %v3156 = vsel %vm1903, %v3126, 0.0
    %v3157 = vadd.f32 %v3155, %v3156
    %v3158 = vsel %vm1903, %v3127, 0.0
    %v3159 = vadd.f32 %v3157, %v3158
    %v3160 = vsel %vm1903, %v3128, 0.0
    %v3161 = vadd.f32 %v3159, %v3160
    %v3162 = vsel %vm1903, %v3129, 0.0
    %v3163 = vadd.f32 %v3161, %v3162
    %v3164 = vsel %vm1903, %v3130, 0.0
    %v3165 = vadd.f32 %v3163, %v3164
    %v3166 = vsel %vm1903, %v3131, 0.0
    %v3167 = vadd.f32 %v3165, %v3166
    %v3168 = vsel %vm1903, %v3132, 0.0
    %v3169 = vadd.f32 %v3167, %v3168
    %v3170 = vsel %vm1903, %v3133, 0.0
    %v3171 = vadd.f32 %v3169, %v3170
    %v3172 = vsel %vm1903, %v3134, 0.0
    %v3173 = vadd.f32 %v3171, %v3172
    %v3174 = vsel %vm1903, %v3135, 0.0
    %v3175 = vadd.f32 %v3173, %v3174
    %v3176 = vsel %vm1903, %v3136, 0.0
    %v3177 = vadd.f32 %v3175, %v3176
    %v3178 = vsel %vm1903, %v3137, 0.0
    %v3179 = vadd.f32 %v3177, %v3178
    %v3180 = vsel %vm1903, %v3138, 0.0
    %v3181 = vadd.f32 %v3179, %v3180
    %v3182 = vsel %vm1903, %v3139, 0.0
    %v3183 = vadd.f32 %v3181, %v3182
    %v3184 = vsel %vm1903, %v3140, 0.0
    %v3185 = vadd.f32 %v3183, %v3184
    %v3186 = vsel %vm1903, %v3141, 0.0
    %v3187 = vadd.f32 %v3185, %v3186
    %v3188 = vsel %vm1903, %v3142, 0.0
    %v3189 = vadd.f32 %v3187, %v3188
    %3190 = vadd.xlane.f32.xlu0 %v3189
    %v3191 = vpop.xlane.xlu0 %3190
    %v3192 = vrot.slane %v3191, 4
    %v3193 = vadd.f32 %v3191, %v3192
    %v3194 = vrot.slane %v3193, 2
    %v3195 = vadd.f32 %v3193, %v3194
    %v3196 = vrot.slane %v3195, 1
    %v3197 = vadd.f32 %v3195, %v3196
    %s3198 = vtos %v3197
    %s3199 = sadd.f32 %s1960, %s3198
    %vm3200 = vcmask 1042432
    %v3201 = vrot.slane %v310, 5
    %v3202 = vrot.slane %v313, 5
    %v3203 = vsel %vm3200, %v3201, %v3202
    %v3204 = vrot.slane %v316, 5
    %v3205 = vsel %vm3200, %v3202, %v3204
    %v3206 = vrot.slane %v319, 5
    %v3207 = vsel %vm3200, %v3204, %v3206
    %v3208 = vrot.slane %v322, 5
    %v3209 = vsel %vm3200, %v3206, %v3208
    %v3210 = vrot.slane %v325, 5
    %v3211 = vsel %vm3200, %v3208, %v3210
    %v3212 = vrot.slane %v328, 5
    %v3213 = vsel %vm3200, %v3210, %v3212
    %v3214 = vrot.slane %v331, 5
    %v3215 = vsel %vm3200, %v3212, %v3214
    %v3216 = vrot.slane %v334, 5
    %v3217 = vsel %vm3200, %v3214, %v3216
    %v3218 = vrot.slane %v337, 5
    %v3219 = vsel %vm3200, %v3216, %v3218
    %v3220 = vrot.slane %v340, 5
    %v3221 = vsel %vm3200, %v3218, %v3220
    %v3222 = vrot.slane %v343, 5
    %v3223 = vsel %vm3200, %v3220, %v3222
    %v3224 = vrot.slane %v346, 5
    %v3225 = vsel %vm3200, %v3222, %v3224
    %v3226 = vrot.slane %v349, 5
    %v3227 = vsel %vm3200, %v3224, %v3226
    %v3228 = vrot.slane %v352, 5
    %v3229 = vsel %vm3200, %v3226, %v3228
    %v3230 = vrot.slane %v355, 5
    %v3231 = vsel %vm3200, %v3228, %v3230
    %v3232 = vrot.slane %v358, 5
    %v3233 = vsel %vm3200, %v3230, %v3232
    %v3234 = vrot.slane %v361, 5
    %v3235 = vsel %vm3200, %v3232, %v3234
    %v3236 = vrot.slane %v364, 5
    %v3237 = vsel %vm3200, %v3234, %v3236
    %v3238 = vrot.slane %v367, 5
    %v3239 = vsel %vm3200, %v3236, %v3238
    %v3240 = vrot.slane %v370, 5
    %v3241 = vsel %vm3200, %v3238, %v3240
    %v3242 = vrot.slane %v373, 5
    %v3243 = vsel %vm3200, %v3240, %v3242
    %v3244 = vrot.slane %v376, 5
    %v3245 = vsel %vm3200, %v3242, %v3244
    %v3246 = vrot.slane %v379, 5
    %v3247 = vsel %vm3200, %v3244, %v3246
    %v3248 = vrot.slane 0.0, 5
    %v3249 = vsel %vm3200, %v3246, %v3248
    %v3274 = vadd.f32 %v2133, %v3203
    %v3275 = vadd.f32 %v2134, %v3205
    %v3276 = vadd.f32 %v2135, %v3207
    %v3277 = vadd.f32 %v2136, %v3209
    %v3278 = vadd.f32 %v2137, %v3211
    %v3279 = vadd.f32 %v2138, %v3213
    %v3280 = vadd.f32 %v2139, %v3215
    %v3281 = vadd.f32 %v2140, %v3217
    %v3282 = vadd.f32 %v2141, %v3219
    %v3283 = vadd.f32 %v2142, %v3221
    %v3284 = vadd.f32 %v2143, %v3223
    %v3285 = vadd.f32 %v2144, %v3225
    %v3286 = vadd.f32 %v2145, %v3227
    %v3287 = vadd.f32 %v2146, %v3229
    %v3288 = vadd.f32 %v2147, %v3231
    %v3289 = vadd.f32 %v2148, %v3233
    %v3290 = vadd.f32 %v2149, %v3235
    %v3291 = vadd.f32 %v2150, %v3237
    %v3292 = vadd.f32 %v2151, %v3239
    %v3293 = vadd.f32 %v2152, %v3241
    %v3294 = vadd.f32 %v2153, %v3243
    %v3295 = vadd.f32 %v2154, %v3245
    %v3296 = vadd.f32 %v2155, %v3247
    %v3297 = vadd.f32 %v2156, %v3249
    %vm3298 = vcmask 1041408
    %v3299 = vrot.slane %v310, 6
    %v3300 = vrot.slane %v313, 6
    %v3301 = vsel %vm3298, %v3299, %v3300
    %v3302 = vrot.slane %v316, 6
    %v3303 = vsel %vm3298, %v3300, %v3302
    %v3304 = vrot.slane %v319, 6
    %v3305 = vsel %vm3298, %v3302, %v3304
    %v3306 = vrot.slane %v322, 6
    %v3307 = vsel %vm3298, %v3304, %v3306
    %v3308 = vrot.slane %v325, 6
    %v3309 = vsel %vm3298, %v3306, %v3308
    %v3310 = vrot.slane %v328, 6
    %v3311 = vsel %vm3298, %v3308, %v3310
    %v3312 = vrot.slane %v331, 6
    %v3313 = vsel %vm3298, %v3310, %v3312
    %v3314 = vrot.slane %v334, 6
    %v3315 = vsel %vm3298, %v3312, %v3314
    %v3316 = vrot.slane %v337, 6
    %v3317 = vsel %vm3298, %v3314, %v3316
    %v3318 = vrot.slane %v340, 6
    %v3319 = vsel %vm3298, %v3316, %v3318
    %v3320 = vrot.slane %v343, 6
    %v3321 = vsel %vm3298, %v3318, %v3320
    %v3322 = vrot.slane %v346, 6
    %v3323 = vsel %vm3298, %v3320, %v3322
    %v3324 = vrot.slane %v349, 6
    %v3325 = vsel %vm3298, %v3322, %v3324
    %v3326 = vrot.slane %v352, 6
    %v3327 = vsel %vm3298, %v3324, %v3326
    %v3328 = vrot.slane %v355, 6
    %v3329 = vsel %vm3298, %v3326, %v3328
    %v3330 = vrot.slane %v358, 6
    %v3331 = vsel %vm3298, %v3328, %v3330
    %v3332 = vrot.slane %v361, 6
    %v3333 = vsel %vm3298, %v3330, %v3332
    %v3334 = vrot.slane %v364, 6
    %v3335 = vsel %vm3298, %v3332, %v3334
    %v3336 = vrot.slane %v367, 6
    %v3337 = vsel %vm3298, %v3334, %v3336
    %v3338 = vrot.slane %v370, 6
    %v3339 = vsel %vm3298, %v3336, %v3338
    %v3340 = vrot.slane %v373, 6
    %v3341 = vsel %vm3298, %v3338, %v3340
    %v3342 = vrot.slane %v376, 6
    %v3343 = vsel %vm3298, %v3340, %v3342
    %v3344 = vrot.slane %v379, 6
    %v3345 = vsel %vm3298, %v3342, %v3344
    %v3346 = vrot.slane 0.0, 6
    %v3347 = vsel %vm3298, %v3344, %v3346
    %v3372 = vadd.f32 %v3274, %v3301
    %v3373 = vadd.f32 %v3275, %v3303
    %v3374 = vadd.f32 %v3276, %v3305
    %v3375 = vadd.f32 %v3277, %v3307
    %v3376 = vadd.f32 %v3278, %v3309
    %v3377 = vadd.f32 %v3279, %v3311
    %v3378 = vadd.f32 %v3280, %v3313
    %v3379 = vadd.f32 %v3281, %v3315
    %v3380 = vadd.f32 %v3282, %v3317
    %v3381 = vadd.f32 %v3283, %v3319
    %v3382 = vadd.f32 %v3284, %v3321
    %v3383 = vadd.f32 %v3285, %v3323
    %v3384 = vadd.f32 %v3286, %v3325
    %v3385 = vadd.f32 %v3287, %v3327
    %v3386 = vadd.f32 %v3288, %v3329
    %v3387 = vadd.f32 %v3289, %v3331
    %v3388 = vadd.f32 %v3290, %v3333
    %v3389 = vadd.f32 %v3291, %v3335
    %v3390 = vadd.f32 %v3292, %v3337
    %v3391 = vadd.f32 %v3293, %v3339
    %v3392 = vadd.f32 %v3294, %v3341
    %v3393 = vadd.f32 %v3295, %v3343
    %v3394 = vadd.f32 %v3296, %v3345
    %v3395 = vadd.f32 %v3297, %v3347
    %vm3396 = vcmp.lt.s32.totalorder %v670, 0
    %v3397 = vsub.s32 0, %v670
    %v3398 = vsel %vm3396, %v3397, %v670
    %v3399 = vand.u32 %v3398, 65535
    %v3400 = vshrl.u32 %v3398, 16
    %v3402 = vmul.u32 %v3399, 9362
    %v3403 = vmul.u32 %v3399, 37449
    %v3404 = vmul.u32 %v3400, 9362
    %v3405 = vmul.u32 %v3400, 37449
    %v3406 = vshll.u32 %v3403, 16
    %v3407 = vshrl.u32 %v3403, 16
    %v3408 = vshll.u32 %v3404, 16
    %v3409 = vshrl.u32 %v3404, 16
    %vm3410 = vc.u32 %v3402, %v3406
    %v3411 = vsel %vm3410, 1, 0
    %v3412 = vadd.s32 %v3402, %v3406
    %v3413 = vadd.s32 %v3405, %v3411
    %vm3414 = vc.u32 %v3412, %v3408
    %v3415 = vsel %vm3414, 1, 0
    %v3416 = vadd.s32 %v3412, %v3408
    %v3417 = vadd.s32 %v3413, %v3415
    %v3418 = vadd.s32 %v3417, %v3407
    %v3419 = vadd.s32 %v3418, %v3409
    %vm3420 = vc.u32 %v3416, 2454267026
    %v3421 = vsel %vm3420, 1, 0
    %v3422 = vadd.s32 %v3419, %v3421
    %v3423 = vshrl.u32 %v3422, 2
    %v3424 = vmul.u32 %v3423, 7
    %v3425 = vsub.s32 %v3398, %v3424
    %v3426 = vsub.s32 0, %v3425
    %v3427 = vsel %vm3396, %v3426, %v3425
    %vm3428 = vcmp.lt.s32.totalorder %v671, 0
    %v3429 = vsub.s32 0, %v671
    %v3430 = vsel %vm3428, %v3429, %v671
    %v3431 = vand.u32 %v3430, 65535
    %v3432 = vshrl.u32 %v3430, 16
    %v3434 = vmul.u32 %v3431, 9362
    %v3435 = vmul.u32 %v3431, 37449
    %v3436 = vmul.u32 %v3432, 9362
    %v3437 = vmul.u32 %v3432, 37449
    %v3438 = vshll.u32 %v3435, 16
    %v3439 = vshrl.u32 %v3435, 16
    %v3440 = vshll.u32 %v3436, 16
    %v3441 = vshrl.u32 %v3436, 16
    %vm3442 = vc.u32 %v3434, %v3438
    %v3443 = vsel %vm3442, 1, 0
    %v3444 = vadd.s32 %v3434, %v3438
    %v3445 = vadd.s32 %v3437, %v3443
    %vm3446 = vc.u32 %v3444, %v3440
    %v3447 = vsel %vm3446, 1, 0
    %v3448 = vadd.s32 %v3444, %v3440
    %v3449 = vadd.s32 %v3445, %v3447
    %v3450 = vadd.s32 %v3449, %v3439
    %v3451 = vadd.s32 %v3450, %v3441
    %vm3452 = vc.u32 %v3448, 2454267026
    %v3453 = vsel %vm3452, 1, 0
    %v3454 = vadd.s32 %v3451, %v3453
    %v3455 = vshrl.u32 %v3454, 2
    %v3456 = vmul.u32 %v3455, 7
    %v3457 = vsub.s32 %v3430, %v3456
    %v3458 = vsub.s32 0, %v3457
    %v3459 = vsel %vm3428, %v3458, %v3457
    %vm3460 = vcmp.lt.s32.totalorder %v672, 0
    %v3461 = vsub.s32 0, %v672
    %v3462 = vsel %vm3460, %v3461, %v672
    %v3463 = vand.u32 %v3462, 65535
    %v3464 = vshrl.u32 %v3462, 16
    %v3466 = vmul.u32 %v3463, 9362
    %v3467 = vmul.u32 %v3463, 37449
    %v3468 = vmul.u32 %v3464, 9362
    %v3469 = vmul.u32 %v3464, 37449
    %v3470 = vshll.u32 %v3467, 16
    %v3471 = vshrl.u32 %v3467, 16
    %v3472 = vshll.u32 %v3468, 16
    %v3473 = vshrl.u32 %v3468, 16
    %vm3474 = vc.u32 %v3466, %v3470
    %v3475 = vsel %vm3474, 1, 0
    %v3476 = vadd.s32 %v3466, %v3470
    %v3477 = vadd.s32 %v3469, %v3475
    %vm3478 = vc.u32 %v3476, %v3472
    %v3479 = vsel %vm3478, 1, 0
    %v3480 = vadd.s32 %v3476, %v3472
    %v3481 = vadd.s32 %v3477, %v3479
    %v3482 = vadd.s32 %v3481, %v3471
    %v3483 = vadd.s32 %v3482, %v3473
    %vm3484 = vc.u32 %v3480, 2454267026
    %v3485 = vsel %vm3484, 1, 0
    %v3486 = vadd.s32 %v3483, %v3485
    %v3487 = vshrl.u32 %v3486, 2
    %v3488 = vmul.u32 %v3487, 7
    %v3489 = vsub.s32 %v3462, %v3488
    %v3490 = vsub.s32 0, %v3489
    %v3491 = vsel %vm3460, %v3490, %v3489
    %vm3492 = vcmp.lt.s32.totalorder %v673, 0
    %v3493 = vsub.s32 0, %v673
    %v3494 = vsel %vm3492, %v3493, %v673
    %v3495 = vand.u32 %v3494, 65535
    %v3496 = vshrl.u32 %v3494, 16
    %v3498 = vmul.u32 %v3495, 9362
    %v3499 = vmul.u32 %v3495, 37449
    %v3500 = vmul.u32 %v3496, 9362
    %v3501 = vmul.u32 %v3496, 37449
    %v3502 = vshll.u32 %v3499, 16
    %v3503 = vshrl.u32 %v3499, 16
    %v3504 = vshll.u32 %v3500, 16
    %v3505 = vshrl.u32 %v3500, 16
    %vm3506 = vc.u32 %v3498, %v3502
    %v3507 = vsel %vm3506, 1, 0
    %v3508 = vadd.s32 %v3498, %v3502
    %v3509 = vadd.s32 %v3501, %v3507
    %vm3510 = vc.u32 %v3508, %v3504
    %v3511 = vsel %vm3510, 1, 0
    %v3512 = vadd.s32 %v3508, %v3504
    %v3513 = vadd.s32 %v3509, %v3511
    %v3514 = vadd.s32 %v3513, %v3503
    %v3515 = vadd.s32 %v3514, %v3505
    %vm3516 = vc.u32 %v3512, 2454267026
    %v3517 = vsel %vm3516, 1, 0
    %v3518 = vadd.s32 %v3515, %v3517
    %v3519 = vshrl.u32 %v3518, 2
    %v3520 = vmul.u32 %v3519, 7
    %v3521 = vsub.s32 %v3494, %v3520
    %v3522 = vsub.s32 0, %v3521
    %v3523 = vsel %vm3492, %v3522, %v3521
    %vm3524 = vcmp.lt.s32.totalorder %v674, 0
    %v3525 = vsub.s32 0, %v674
    %v3526 = vsel %vm3524, %v3525, %v674
    %v3527 = vand.u32 %v3526, 65535
    %v3528 = vshrl.u32 %v3526, 16
    %v3530 = vmul.u32 %v3527, 9362
    %v3531 = vmul.u32 %v3527, 37449
    %v3532 = vmul.u32 %v3528, 9362
    %v3533 = vmul.u32 %v3528, 37449
    %v3534 = vshll.u32 %v3531, 16
    %v3535 = vshrl.u32 %v3531, 16
    %v3536 = vshll.u32 %v3532, 16
    %v3537 = vshrl.u32 %v3532, 16
    %vm3538 = vc.u32 %v3530, %v3534
    %v3539 = vsel %vm3538, 1, 0
    %v3540 = vadd.s32 %v3530, %v3534
    %v3541 = vadd.s32 %v3533, %v3539
    %vm3542 = vc.u32 %v3540, %v3536
    %v3543 = vsel %vm3542, 1, 0
    %v3544 = vadd.s32 %v3540, %v3536
    %v3545 = vadd.s32 %v3541, %v3543
    %v3546 = vadd.s32 %v3545, %v3535
    %v3547 = vadd.s32 %v3546, %v3537
    %vm3548 = vc.u32 %v3544, 2454267026
    %v3549 = vsel %vm3548, 1, 0
    %v3550 = vadd.s32 %v3547, %v3549
    %v3551 = vshrl.u32 %v3550, 2
    %v3552 = vmul.u32 %v3551, 7
    %v3553 = vsub.s32 %v3526, %v3552
    %v3554 = vsub.s32 0, %v3553
    %v3555 = vsel %vm3524, %v3554, %v3553
    %vm3556 = vcmp.lt.s32.totalorder %v675, 0
    %v3557 = vsub.s32 0, %v675
    %v3558 = vsel %vm3556, %v3557, %v675
    %v3559 = vand.u32 %v3558, 65535
    %v3560 = vshrl.u32 %v3558, 16
    %v3562 = vmul.u32 %v3559, 9362
    %v3563 = vmul.u32 %v3559, 37449
    %v3564 = vmul.u32 %v3560, 9362
    %v3565 = vmul.u32 %v3560, 37449
    %v3566 = vshll.u32 %v3563, 16
    %v3567 = vshrl.u32 %v3563, 16
    %v3568 = vshll.u32 %v3564, 16
    %v3569 = vshrl.u32 %v3564, 16
    %vm3570 = vc.u32 %v3562, %v3566
    %v3571 = vsel %vm3570, 1, 0
    %v3572 = vadd.s32 %v3562, %v3566
    %v3573 = vadd.s32 %v3565, %v3571
    %vm3574 = vc.u32 %v3572, %v3568
    %v3575 = vsel %vm3574, 1, 0
    %v3576 = vadd.s32 %v3572, %v3568
    %v3577 = vadd.s32 %v3573, %v3575
    %v3578 = vadd.s32 %v3577, %v3567
    %v3579 = vadd.s32 %v3578, %v3569
    %vm3580 = vc.u32 %v3576, 2454267026
    %v3581 = vsel %vm3580, 1, 0
    %v3582 = vadd.s32 %v3579, %v3581
    %v3583 = vshrl.u32 %v3582, 2
    %v3584 = vmul.u32 %v3583, 7
    %v3585 = vsub.s32 %v3558, %v3584
    %v3586 = vsub.s32 0, %v3585
    %v3587 = vsel %vm3556, %v3586, %v3585
    %vm3588 = vcmp.lt.s32.totalorder %v676, 0
    %v3589 = vsub.s32 0, %v676
    %v3590 = vsel %vm3588, %v3589, %v676
    %v3591 = vand.u32 %v3590, 65535
    %v3592 = vshrl.u32 %v3590, 16
    %v3594 = vmul.u32 %v3591, 9362
    %v3595 = vmul.u32 %v3591, 37449
    %v3596 = vmul.u32 %v3592, 9362
    %v3597 = vmul.u32 %v3592, 37449
    %v3598 = vshll.u32 %v3595, 16
    %v3599 = vshrl.u32 %v3595, 16
    %v3600 = vshll.u32 %v3596, 16
    %v3601 = vshrl.u32 %v3596, 16
    %vm3602 = vc.u32 %v3594, %v3598
    %v3603 = vsel %vm3602, 1, 0
    %v3604 = vadd.s32 %v3594, %v3598
    %v3605 = vadd.s32 %v3597, %v3603
    %vm3606 = vc.u32 %v3604, %v3600
    %v3607 = vsel %vm3606, 1, 0
    %v3608 = vadd.s32 %v3604, %v3600
    %v3609 = vadd.s32 %v3605, %v3607
    %v3610 = vadd.s32 %v3609, %v3599
    %v3611 = vadd.s32 %v3610, %v3601
    %vm3612 = vc.u32 %v3608, 2454267026
    %v3613 = vsel %vm3612, 1, 0
    %v3614 = vadd.s32 %v3611, %v3613
    %v3615 = vshrl.u32 %v3614, 2
    %v3616 = vmul.u32 %v3615, 7
    %v3617 = vsub.s32 %v3590, %v3616
    %v3618 = vsub.s32 0, %v3617
    %v3619 = vsel %vm3588, %v3618, %v3617
    %vm3620 = vcmp.lt.s32.totalorder %v677, 0
    %v3621 = vsub.s32 0, %v677
    %v3622 = vsel %vm3620, %v3621, %v677
    %v3623 = vand.u32 %v3622, 65535
    %v3624 = vshrl.u32 %v3622, 16
    %v3626 = vmul.u32 %v3623, 9362
    %v3627 = vmul.u32 %v3623, 37449
    %v3628 = vmul.u32 %v3624, 9362
    %v3629 = vmul.u32 %v3624, 37449
    %v3630 = vshll.u32 %v3627, 16
    %v3631 = vshrl.u32 %v3627, 16
    %v3632 = vshll.u32 %v3628, 16
    %v3633 = vshrl.u32 %v3628, 16
    %vm3634 = vc.u32 %v3626, %v3630
    %v3635 = vsel %vm3634, 1, 0
    %v3636 = vadd.s32 %v3626, %v3630
    %v3637 = vadd.s32 %v3629, %v3635
    %vm3638 = vc.u32 %v3636, %v3632
    %v3639 = vsel %vm3638, 1, 0
    %v3640 = vadd.s32 %v3636, %v3632
    %v3641 = vadd.s32 %v3637, %v3639
    %v3642 = vadd.s32 %v3641, %v3631
    %v3643 = vadd.s32 %v3642, %v3633
    %vm3644 = vc.u32 %v3640, 2454267026
    %v3645 = vsel %vm3644, 1, 0
    %v3646 = vadd.s32 %v3643, %v3645
    %v3647 = vshrl.u32 %v3646, 2
    %v3648 = vmul.u32 %v3647, 7
    %v3649 = vsub.s32 %v3622, %v3648
    %v3650 = vsub.s32 0, %v3649
    %v3651 = vsel %vm3620, %v3650, %v3649
    %vm3652 = vcmp.lt.s32.totalorder %v678, 0
    %v3653 = vsub.s32 0, %v678
    %v3654 = vsel %vm3652, %v3653, %v678
    %v3655 = vand.u32 %v3654, 65535
    %v3656 = vshrl.u32 %v3654, 16
    %v3658 = vmul.u32 %v3655, 9362
    %v3659 = vmul.u32 %v3655, 37449
    %v3660 = vmul.u32 %v3656, 9362
    %v3661 = vmul.u32 %v3656, 37449
    %v3662 = vshll.u32 %v3659, 16
    %v3663 = vshrl.u32 %v3659, 16
    %v3664 = vshll.u32 %v3660, 16
    %v3665 = vshrl.u32 %v3660, 16
    %vm3666 = vc.u32 %v3658, %v3662
    %v3667 = vsel %vm3666, 1, 0
    %v3668 = vadd.s32 %v3658, %v3662
    %v3669 = vadd.s32 %v3661, %v3667
    %vm3670 = vc.u32 %v3668, %v3664
    %v3671 = vsel %vm3670, 1, 0
    %v3672 = vadd.s32 %v3668, %v3664
    %v3673 = vadd.s32 %v3669, %v3671
    %v3674 = vadd.s32 %v3673, %v3663
    %v3675 = vadd.s32 %v3674, %v3665
    %vm3676 = vc.u32 %v3672, 2454267026
    %v3677 = vsel %vm3676, 1, 0
    %v3678 = vadd.s32 %v3675, %v3677
    %v3679 = vshrl.u32 %v3678, 2
    %v3680 = vmul.u32 %v3679, 7
    %v3681 = vsub.s32 %v3654, %v3680
    %v3682 = vsub.s32 0, %v3681
    %v3683 = vsel %vm3652, %v3682, %v3681
    %vm3684 = vcmp.lt.s32.totalorder %v679, 0
    %v3685 = vsub.s32 0, %v679
    %v3686 = vsel %vm3684, %v3685, %v679
    %v3687 = vand.u32 %v3686, 65535
    %v3688 = vshrl.u32 %v3686, 16
    %v3690 = vmul.u32 %v3687, 9362
    %v3691 = vmul.u32 %v3687, 37449
    %v3692 = vmul.u32 %v3688, 9362
    %v3693 = vmul.u32 %v3688, 37449
    %v3694 = vshll.u32 %v3691, 16
    %v3695 = vshrl.u32 %v3691, 16
    %v3696 = vshll.u32 %v3692, 16
    %v3697 = vshrl.u32 %v3692, 16
    %vm3698 = vc.u32 %v3690, %v3694
    %v3699 = vsel %vm3698, 1, 0
    %v3700 = vadd.s32 %v3690, %v3694
    %v3701 = vadd.s32 %v3693, %v3699
    %vm3702 = vc.u32 %v3700, %v3696
    %v3703 = vsel %vm3702, 1, 0
    %v3704 = vadd.s32 %v3700, %v3696
    %v3705 = vadd.s32 %v3701, %v3703
    %v3706 = vadd.s32 %v3705, %v3695
    %v3707 = vadd.s32 %v3706, %v3697
    %vm3708 = vc.u32 %v3704, 2454267026
    %v3709 = vsel %vm3708, 1, 0
    %v3710 = vadd.s32 %v3707, %v3709
    %v3711 = vshrl.u32 %v3710, 2
    %v3712 = vmul.u32 %v3711, 7
    %v3713 = vsub.s32 %v3686, %v3712
    %v3714 = vsub.s32 0, %v3713
    %v3715 = vsel %vm3684, %v3714, %v3713
    %vm3716 = vcmp.lt.s32.totalorder %v680, 0
    %v3717 = vsub.s32 0, %v680
    %v3718 = vsel %vm3716, %v3717, %v680
    %v3719 = vand.u32 %v3718, 65535
    %v3720 = vshrl.u32 %v3718, 16
    %v3722 = vmul.u32 %v3719, 9362
    %v3723 = vmul.u32 %v3719, 37449
    %v3724 = vmul.u32 %v3720, 9362
    %v3725 = vmul.u32 %v3720, 37449
    %v3726 = vshll.u32 %v3723, 16
    %v3727 = vshrl.u32 %v3723, 16
    %v3728 = vshll.u32 %v3724, 16
    %v3729 = vshrl.u32 %v3724, 16
    %vm3730 = vc.u32 %v3722, %v3726
    %v3731 = vsel %vm3730, 1, 0
    %v3732 = vadd.s32 %v3722, %v3726
    %v3733 = vadd.s32 %v3725, %v3731
    %vm3734 = vc.u32 %v3732, %v3728
    %v3735 = vsel %vm3734, 1, 0
    %v3736 = vadd.s32 %v3732, %v3728
    %v3737 = vadd.s32 %v3733, %v3735
    %v3738 = vadd.s32 %v3737, %v3727
    %v3739 = vadd.s32 %v3738, %v3729
    %vm3740 = vc.u32 %v3736, 2454267026
    %v3741 = vsel %vm3740, 1, 0
    %v3742 = vadd.s32 %v3739, %v3741
    %v3743 = vshrl.u32 %v3742, 2
    %v3744 = vmul.u32 %v3743, 7
    %v3745 = vsub.s32 %v3718, %v3744
    %v3746 = vsub.s32 0, %v3745
    %v3747 = vsel %vm3716, %v3746, %v3745
    %vm3748 = vcmp.lt.s32.totalorder %v681, 0
    %v3749 = vsub.s32 0, %v681
    %v3750 = vsel %vm3748, %v3749, %v681
    %v3751 = vand.u32 %v3750, 65535
    %v3752 = vshrl.u32 %v3750, 16
    %v3754 = vmul.u32 %v3751, 9362
    %v3755 = vmul.u32 %v3751, 37449
    %v3756 = vmul.u32 %v3752, 9362
    %v3757 = vmul.u32 %v3752, 37449
    %v3758 = vshll.u32 %v3755, 16
    %v3759 = vshrl.u32 %v3755, 16
    %v3760 = vshll.u32 %v3756, 16
    %v3761 = vshrl.u32 %v3756, 16
    %vm3762 = vc.u32 %v3754, %v3758
    %v3763 = vsel %vm3762, 1, 0
    %v3764 = vadd.s32 %v3754, %v3758
    %v3765 = vadd.s32 %v3757, %v3763
    %vm3766 = vc.u32 %v3764, %v3760
    %v3767 = vsel %vm3766, 1, 0
    %v3768 = vadd.s32 %v3764, %v3760
    %v3769 = vadd.s32 %v3765, %v3767
    %v3770 = vadd.s32 %v3769, %v3759
    %v3771 = vadd.s32 %v3770, %v3761
    %vm3772 = vc.u32 %v3768, 2454267026
    %v3773 = vsel %vm3772, 1, 0
    %v3774 = vadd.s32 %v3771, %v3773
    %v3775 = vshrl.u32 %v3774, 2
    %v3776 = vmul.u32 %v3775, 7
    %v3777 = vsub.s32 %v3750, %v3776
    %v3778 = vsub.s32 0, %v3777
    %v3779 = vsel %vm3748, %v3778, %v3777
    %vm3780 = vcmp.lt.s32.totalorder %v682, 0
    %v3781 = vsub.s32 0, %v682
    %v3782 = vsel %vm3780, %v3781, %v682
    %v3783 = vand.u32 %v3782, 65535
    %v3784 = vshrl.u32 %v3782, 16
    %v3786 = vmul.u32 %v3783, 9362
    %v3787 = vmul.u32 %v3783, 37449
    %v3788 = vmul.u32 %v3784, 9362
    %v3789 = vmul.u32 %v3784, 37449
    %v3790 = vshll.u32 %v3787, 16
    %v3791 = vshrl.u32 %v3787, 16
    %v3792 = vshll.u32 %v3788, 16
    %v3793 = vshrl.u32 %v3788, 16
    %vm3794 = vc.u32 %v3786, %v3790
    %v3795 = vsel %vm3794, 1, 0
    %v3796 = vadd.s32 %v3786, %v3790
    %v3797 = vadd.s32 %v3789, %v3795
    %vm3798 = vc.u32 %v3796, %v3792
    %v3799 = vsel %vm3798, 1, 0
    %v3800 = vadd.s32 %v3796, %v3792
    %v3801 = vadd.s32 %v3797, %v3799
    %v3802 = vadd.s32 %v3801, %v3791
    %v3803 = vadd.s32 %v3802, %v3793
    %vm3804 = vc.u32 %v3800, 2454267026
    %v3805 = vsel %vm3804, 1, 0
    %v3806 = vadd.s32 %v3803, %v3805
    %v3807 = vshrl.u32 %v3806, 2
    %v3808 = vmul.u32 %v3807, 7
    %v3809 = vsub.s32 %v3782, %v3808
    %v3810 = vsub.s32 0, %v3809
    %v3811 = vsel %vm3780, %v3810, %v3809
    %vm3812 = vcmp.lt.s32.totalorder %v683, 0
    %v3813 = vsub.s32 0, %v683
    %v3814 = vsel %vm3812, %v3813, %v683
    %v3815 = vand.u32 %v3814, 65535
    %v3816 = vshrl.u32 %v3814, 16
    %v3818 = vmul.u32 %v3815, 9362
    %v3819 = vmul.u32 %v3815, 37449
    %v3820 = vmul.u32 %v3816, 9362
    %v3821 = vmul.u32 %v3816, 37449
    %v3822 = vshll.u32 %v3819, 16
    %v3823 = vshrl.u32 %v3819, 16
    %v3824 = vshll.u32 %v3820, 16
    %v3825 = vshrl.u32 %v3820, 16
    %vm3826 = vc.u32 %v3818, %v3822
    %v3827 = vsel %vm3826, 1, 0
    %v3828 = vadd.s32 %v3818, %v3822
    %v3829 = vadd.s32 %v3821, %v3827
    %vm3830 = vc.u32 %v3828, %v3824
    %v3831 = vsel %vm3830, 1, 0
    %v3832 = vadd.s32 %v3828, %v3824
    %v3833 = vadd.s32 %v3829, %v3831
    %v3834 = vadd.s32 %v3833, %v3823
    %v3835 = vadd.s32 %v3834, %v3825
    %vm3836 = vc.u32 %v3832, 2454267026
    %v3837 = vsel %vm3836, 1, 0
    %v3838 = vadd.s32 %v3835, %v3837
    %v3839 = vshrl.u32 %v3838, 2
    %v3840 = vmul.u32 %v3839, 7
    %v3841 = vsub.s32 %v3814, %v3840
    %v3842 = vsub.s32 0, %v3841
    %v3843 = vsel %vm3812, %v3842, %v3841
    %vm3844 = vcmp.lt.s32.totalorder %v684, 0
    %v3845 = vsub.s32 0, %v684
    %v3846 = vsel %vm3844, %v3845, %v684
    %v3847 = vand.u32 %v3846, 65535
    %v3848 = vshrl.u32 %v3846, 16
    %v3850 = vmul.u32 %v3847, 9362
    %v3851 = vmul.u32 %v3847, 37449
    %v3852 = vmul.u32 %v3848, 9362
    %v3853 = vmul.u32 %v3848, 37449
    %v3854 = vshll.u32 %v3851, 16
    %v3855 = vshrl.u32 %v3851, 16
    %v3856 = vshll.u32 %v3852, 16
    %v3857 = vshrl.u32 %v3852, 16
    %vm3858 = vc.u32 %v3850, %v3854
    %v3859 = vsel %vm3858, 1, 0
    %v3860 = vadd.s32 %v3850, %v3854
    %v3861 = vadd.s32 %v3853, %v3859
    %vm3862 = vc.u32 %v3860, %v3856
    %v3863 = vsel %vm3862, 1, 0
    %v3864 = vadd.s32 %v3860, %v3856
    %v3865 = vadd.s32 %v3861, %v3863
    %v3866 = vadd.s32 %v3865, %v3855
    %v3867 = vadd.s32 %v3866, %v3857
    %vm3868 = vc.u32 %v3864, 2454267026
    %v3869 = vsel %vm3868, 1, 0
    %v3870 = vadd.s32 %v3867, %v3869
    %v3871 = vshrl.u32 %v3870, 2
    %v3872 = vmul.u32 %v3871, 7
    %v3873 = vsub.s32 %v3846, %v3872
    %v3874 = vsub.s32 0, %v3873
    %v3875 = vsel %vm3844, %v3874, %v3873
    %vm3876 = vcmp.lt.s32.totalorder %v685, 0
    %v3877 = vsub.s32 0, %v685
    %v3878 = vsel %vm3876, %v3877, %v685
    %v3879 = vand.u32 %v3878, 65535
    %v3880 = vshrl.u32 %v3878, 16
    %v3882 = vmul.u32 %v3879, 9362
    %v3883 = vmul.u32 %v3879, 37449
    %v3884 = vmul.u32 %v3880, 9362
    %v3885 = vmul.u32 %v3880, 37449
    %v3886 = vshll.u32 %v3883, 16
    %v3887 = vshrl.u32 %v3883, 16
    %v3888 = vshll.u32 %v3884, 16
    %v3889 = vshrl.u32 %v3884, 16
    %vm3890 = vc.u32 %v3882, %v3886
    %v3891 = vsel %vm3890, 1, 0
    %v3892 = vadd.s32 %v3882, %v3886
    %v3893 = vadd.s32 %v3885, %v3891
    %vm3894 = vc.u32 %v3892, %v3888
    %v3895 = vsel %vm3894, 1, 0
    %v3896 = vadd.s32 %v3892, %v3888
    %v3897 = vadd.s32 %v3893, %v3895
    %v3898 = vadd.s32 %v3897, %v3887
    %v3899 = vadd.s32 %v3898, %v3889
    %vm3900 = vc.u32 %v3896, 2454267026
    %v3901 = vsel %vm3900, 1, 0
    %v3902 = vadd.s32 %v3899, %v3901
    %v3903 = vshrl.u32 %v3902, 2
    %v3904 = vmul.u32 %v3903, 7
    %v3905 = vsub.s32 %v3878, %v3904
    %v3906 = vsub.s32 0, %v3905
    %v3907 = vsel %vm3876, %v3906, %v3905
    %vm3908 = vcmp.lt.s32.totalorder %v686, 0
    %v3909 = vsub.s32 0, %v686
    %v3910 = vsel %vm3908, %v3909, %v686
    %v3911 = vand.u32 %v3910, 65535
    %v3912 = vshrl.u32 %v3910, 16
    %v3914 = vmul.u32 %v3911, 9362
    %v3915 = vmul.u32 %v3911, 37449
    %v3916 = vmul.u32 %v3912, 9362
    %v3917 = vmul.u32 %v3912, 37449
    %v3918 = vshll.u32 %v3915, 16
    %v3919 = vshrl.u32 %v3915, 16
    %v3920 = vshll.u32 %v3916, 16
    %v3921 = vshrl.u32 %v3916, 16
    %vm3922 = vc.u32 %v3914, %v3918
    %v3923 = vsel %vm3922, 1, 0
    %v3924 = vadd.s32 %v3914, %v3918
    %v3925 = vadd.s32 %v3917, %v3923
    %vm3926 = vc.u32 %v3924, %v3920
    %v3927 = vsel %vm3926, 1, 0
    %v3928 = vadd.s32 %v3924, %v3920
    %v3929 = vadd.s32 %v3925, %v3927
    %v3930 = vadd.s32 %v3929, %v3919
    %v3931 = vadd.s32 %v3930, %v3921
    %vm3932 = vc.u32 %v3928, 2454267026
    %v3933 = vsel %vm3932, 1, 0
    %v3934 = vadd.s32 %v3931, %v3933
    %v3935 = vshrl.u32 %v3934, 2
    %v3936 = vmul.u32 %v3935, 7
    %v3937 = vsub.s32 %v3910, %v3936
    %v3938 = vsub.s32 0, %v3937
    %v3939 = vsel %vm3908, %v3938, %v3937
    %vm3940 = vcmp.lt.s32.totalorder %v687, 0
    %v3941 = vsub.s32 0, %v687
    %v3942 = vsel %vm3940, %v3941, %v687
    %v3943 = vand.u32 %v3942, 65535
    %v3944 = vshrl.u32 %v3942, 16
    %v3946 = vmul.u32 %v3943, 9362
    %v3947 = vmul.u32 %v3943, 37449
    %v3948 = vmul.u32 %v3944, 9362
    %v3949 = vmul.u32 %v3944, 37449
    %v3950 = vshll.u32 %v3947, 16
    %v3951 = vshrl.u32 %v3947, 16
    %v3952 = vshll.u32 %v3948, 16
    %v3953 = vshrl.u32 %v3948, 16
    %vm3954 = vc.u32 %v3946, %v3950
    %v3955 = vsel %vm3954, 1, 0
    %v3956 = vadd.s32 %v3946, %v3950
    %v3957 = vadd.s32 %v3949, %v3955
    %vm3958 = vc.u32 %v3956, %v3952
    %v3959 = vsel %vm3958, 1, 0
    %v3960 = vadd.s32 %v3956, %v3952
    %v3961 = vadd.s32 %v3957, %v3959
    %v3962 = vadd.s32 %v3961, %v3951
    %v3963 = vadd.s32 %v3962, %v3953
    %vm3964 = vc.u32 %v3960, 2454267026
    %v3965 = vsel %vm3964, 1, 0
    %v3966 = vadd.s32 %v3963, %v3965
    %v3967 = vshrl.u32 %v3966, 2
    %v3968 = vmul.u32 %v3967, 7
    %v3969 = vsub.s32 %v3942, %v3968
    %v3970 = vsub.s32 0, %v3969
    %v3971 = vsel %vm3940, %v3970, %v3969
    %vm3972 = vcmp.lt.s32.totalorder %v688, 0
    %v3973 = vsub.s32 0, %v688
    %v3974 = vsel %vm3972, %v3973, %v688
    %v3975 = vand.u32 %v3974, 65535
    %v3976 = vshrl.u32 %v3974, 16
    %v3978 = vmul.u32 %v3975, 9362
    %v3979 = vmul.u32 %v3975, 37449
    %v3980 = vmul.u32 %v3976, 9362
    %v3981 = vmul.u32 %v3976, 37449
    %v3982 = vshll.u32 %v3979, 16
    %v3983 = vshrl.u32 %v3979, 16
    %v3984 = vshll.u32 %v3980, 16
    %v3985 = vshrl.u32 %v3980, 16
    %vm3986 = vc.u32 %v3978, %v3982
    %v3987 = vsel %vm3986, 1, 0
    %v3988 = vadd.s32 %v3978, %v3982
    %v3989 = vadd.s32 %v3981, %v3987
    %vm3990 = vc.u32 %v3988, %v3984
    %v3991 = vsel %vm3990, 1, 0
    %v3992 = vadd.s32 %v3988, %v3984
    %v3993 = vadd.s32 %v3989, %v3991
    %v3994 = vadd.s32 %v3993, %v3983
    %v3995 = vadd.s32 %v3994, %v3985
    %vm3996 = vc.u32 %v3992, 2454267026
    %v3997 = vsel %vm3996, 1, 0
    %v3998 = vadd.s32 %v3995, %v3997
    %v3999 = vshrl.u32 %v3998, 2
    %v4000 = vmul.u32 %v3999, 7
    %v4001 = vsub.s32 %v3974, %v4000
    %v4002 = vsub.s32 0, %v4001
    %v4003 = vsel %vm3972, %v4002, %v4001
    %vm4004 = vcmp.lt.s32.totalorder %v689, 0
    %v4005 = vsub.s32 0, %v689
    %v4006 = vsel %vm4004, %v4005, %v689
    %v4007 = vand.u32 %v4006, 65535
    %v4008 = vshrl.u32 %v4006, 16
    %v4010 = vmul.u32 %v4007, 9362
    %v4011 = vmul.u32 %v4007, 37449
    %v4012 = vmul.u32 %v4008, 9362
    %v4013 = vmul.u32 %v4008, 37449
    %v4014 = vshll.u32 %v4011, 16
    %v4015 = vshrl.u32 %v4011, 16
    %v4016 = vshll.u32 %v4012, 16
    %v4017 = vshrl.u32 %v4012, 16
    %vm4018 = vc.u32 %v4010, %v4014
    %v4019 = vsel %vm4018, 1, 0
    %v4020 = vadd.s32 %v4010, %v4014
    %v4021 = vadd.s32 %v4013, %v4019
    %vm4022 = vc.u32 %v4020, %v4016
    %v4023 = vsel %vm4022, 1, 0
    %v4024 = vadd.s32 %v4020, %v4016
    %v4025 = vadd.s32 %v4021, %v4023
    %v4026 = vadd.s32 %v4025, %v4015
    %v4027 = vadd.s32 %v4026, %v4017
    %vm4028 = vc.u32 %v4024, 2454267026
    %v4029 = vsel %vm4028, 1, 0
    %v4030 = vadd.s32 %v4027, %v4029
    %v4031 = vshrl.u32 %v4030, 2
    %v4032 = vmul.u32 %v4031, 7
    %v4033 = vsub.s32 %v4006, %v4032
    %v4034 = vsub.s32 0, %v4033
    %v4035 = vsel %vm4004, %v4034, %v4033
    %vm4036 = vcmp.lt.s32.totalorder %v690, 0
    %v4037 = vsub.s32 0, %v690
    %v4038 = vsel %vm4036, %v4037, %v690
    %v4039 = vand.u32 %v4038, 65535
    %v4040 = vshrl.u32 %v4038, 16
    %v4042 = vmul.u32 %v4039, 9362
    %v4043 = vmul.u32 %v4039, 37449
    %v4044 = vmul.u32 %v4040, 9362
    %v4045 = vmul.u32 %v4040, 37449
    %v4046 = vshll.u32 %v4043, 16
    %v4047 = vshrl.u32 %v4043, 16
    %v4048 = vshll.u32 %v4044, 16
    %v4049 = vshrl.u32 %v4044, 16
    %vm4050 = vc.u32 %v4042, %v4046
    %v4051 = vsel %vm4050, 1, 0
    %v4052 = vadd.s32 %v4042, %v4046
    %v4053 = vadd.s32 %v4045, %v4051
    %vm4054 = vc.u32 %v4052, %v4048
    %v4055 = vsel %vm4054, 1, 0
    %v4056 = vadd.s32 %v4052, %v4048
    %v4057 = vadd.s32 %v4053, %v4055
    %v4058 = vadd.s32 %v4057, %v4047
    %v4059 = vadd.s32 %v4058, %v4049
    %vm4060 = vc.u32 %v4056, 2454267026
    %v4061 = vsel %vm4060, 1, 0
    %v4062 = vadd.s32 %v4059, %v4061
    %v4063 = vshrl.u32 %v4062, 2
    %v4064 = vmul.u32 %v4063, 7
    %v4065 = vsub.s32 %v4038, %v4064
    %v4066 = vsub.s32 0, %v4065
    %v4067 = vsel %vm4036, %v4066, %v4065
    %vm4068 = vcmp.lt.s32.totalorder %v691, 0
    %v4069 = vsub.s32 0, %v691
    %v4070 = vsel %vm4068, %v4069, %v691
    %v4071 = vand.u32 %v4070, 65535
    %v4072 = vshrl.u32 %v4070, 16
    %v4074 = vmul.u32 %v4071, 9362
    %v4075 = vmul.u32 %v4071, 37449
    %v4076 = vmul.u32 %v4072, 9362
    %v4077 = vmul.u32 %v4072, 37449
    %v4078 = vshll.u32 %v4075, 16
    %v4079 = vshrl.u32 %v4075, 16
    %v4080 = vshll.u32 %v4076, 16
    %v4081 = vshrl.u32 %v4076, 16
    %vm4082 = vc.u32 %v4074, %v4078
    %v4083 = vsel %vm4082, 1, 0
    %v4084 = vadd.s32 %v4074, %v4078
    %v4085 = vadd.s32 %v4077, %v4083
    %vm4086 = vc.u32 %v4084, %v4080
    %v4087 = vsel %vm4086, 1, 0
    %v4088 = vadd.s32 %v4084, %v4080
    %v4089 = vadd.s32 %v4085, %v4087
    %v4090 = vadd.s32 %v4089, %v4079
    %v4091 = vadd.s32 %v4090, %v4081
    %vm4092 = vc.u32 %v4088, 2454267026
    %v4093 = vsel %vm4092, 1, 0
    %v4094 = vadd.s32 %v4091, %v4093
    %v4095 = vshrl.u32 %v4094, 2
    %v4096 = vmul.u32 %v4095, 7
    %v4097 = vsub.s32 %v4070, %v4096
    %v4098 = vsub.s32 0, %v4097
    %v4099 = vsel %vm4068, %v4098, %v4097
    %vm4100 = vcmp.lt.s32.totalorder %v692, 0
    %v4101 = vsub.s32 0, %v692
    %v4102 = vsel %vm4100, %v4101, %v692
    %v4103 = vand.u32 %v4102, 65535
    %v4104 = vshrl.u32 %v4102, 16
    %v4106 = vmul.u32 %v4103, 9362
    %v4107 = vmul.u32 %v4103, 37449
    %v4108 = vmul.u32 %v4104, 9362
    %v4109 = vmul.u32 %v4104, 37449
    %v4110 = vshll.u32 %v4107, 16
    %v4111 = vshrl.u32 %v4107, 16
    %v4112 = vshll.u32 %v4108, 16
    %v4113 = vshrl.u32 %v4108, 16
    %vm4114 = vc.u32 %v4106, %v4110
    %v4115 = vsel %vm4114, 1, 0
    %v4116 = vadd.s32 %v4106, %v4110
    %v4117 = vadd.s32 %v4109, %v4115
    %vm4118 = vc.u32 %v4116, %v4112
    %v4119 = vsel %vm4118, 1, 0
    %v4120 = vadd.s32 %v4116, %v4112
    %v4121 = vadd.s32 %v4117, %v4119
    %v4122 = vadd.s32 %v4121, %v4111
    %v4123 = vadd.s32 %v4122, %v4113
    %vm4124 = vc.u32 %v4120, 2454267026
    %v4125 = vsel %vm4124, 1, 0
    %v4126 = vadd.s32 %v4123, %v4125
    %v4127 = vshrl.u32 %v4126, 2
    %v4128 = vmul.u32 %v4127, 7
    %v4129 = vsub.s32 %v4102, %v4128
    %v4130 = vsub.s32 0, %v4129
    %v4131 = vsel %vm4100, %v4130, %v4129
    %vm4132 = vcmp.lt.s32.totalorder %v693, 0
    %v4133 = vsub.s32 0, %v693
    %v4134 = vsel %vm4132, %v4133, %v693
    %v4135 = vand.u32 %v4134, 65535
    %v4136 = vshrl.u32 %v4134, 16
    %v4138 = vmul.u32 %v4135, 9362
    %v4139 = vmul.u32 %v4135, 37449
    %v4140 = vmul.u32 %v4136, 9362
    %v4141 = vmul.u32 %v4136, 37449
    %v4142 = vshll.u32 %v4139, 16
    %v4143 = vshrl.u32 %v4139, 16
    %v4144 = vshll.u32 %v4140, 16
    %v4145 = vshrl.u32 %v4140, 16
    %vm4146 = vc.u32 %v4138, %v4142
    %v4147 = vsel %vm4146, 1, 0
    %v4148 = vadd.s32 %v4138, %v4142
    %v4149 = vadd.s32 %v4141, %v4147
    %vm4150 = vc.u32 %v4148, %v4144
    %v4151 = vsel %vm4150, 1, 0
    %v4152 = vadd.s32 %v4148, %v4144
    %v4153 = vadd.s32 %v4149, %v4151
    %v4154 = vadd.s32 %v4153, %v4143
    %v4155 = vadd.s32 %v4154, %v4145
    %vm4156 = vc.u32 %v4152, 2454267026
    %v4157 = vsel %vm4156, 1, 0
    %v4158 = vadd.s32 %v4155, %v4157
    %v4159 = vshrl.u32 %v4158, 2
    %v4160 = vmul.u32 %v4159, 7
    %v4161 = vsub.s32 %v4134, %v4160
    %v4162 = vsub.s32 0, %v4161
    %v4163 = vsel %vm4132, %v4162, %v4161
    %vm4164 = vcmp.ne.s32.totalorder %v3427, 0
    %vm4165 = vcmp.ne.s32.totalorder %v3459, 0
    %vm4166 = vcmp.ne.s32.totalorder %v3491, 0
    %vm4167 = vcmp.ne.s32.totalorder %v3523, 0
    %vm4168 = vcmp.ne.s32.totalorder %v3555, 0
    %vm4169 = vcmp.ne.s32.totalorder %v3587, 0
    %vm4170 = vcmp.ne.s32.totalorder %v3619, 0
    %vm4171 = vcmp.ne.s32.totalorder %v3651, 0
    %vm4172 = vcmp.ne.s32.totalorder %v3683, 0
    %vm4173 = vcmp.ne.s32.totalorder %v3715, 0
    %vm4174 = vcmp.ne.s32.totalorder %v3747, 0
    %vm4175 = vcmp.ne.s32.totalorder %v3779, 0
    %vm4176 = vcmp.ne.s32.totalorder %v3811, 0
    %vm4177 = vcmp.ne.s32.totalorder %v3843, 0
    %vm4178 = vcmp.ne.s32.totalorder %v3875, 0
    %vm4179 = vcmp.ne.s32.totalorder %v3907, 0
    %vm4180 = vcmp.ne.s32.totalorder %v3939, 0
    %vm4181 = vcmp.ne.s32.totalorder %v3971, 0
    %vm4182 = vcmp.ne.s32.totalorder %v4003, 0
    %vm4183 = vcmp.ne.s32.totalorder %v4035, 0
    %vm4184 = vcmp.ne.s32.totalorder %v4067, 0
    %vm4185 = vcmp.ne.s32.totalorder %v4099, 0
    %vm4186 = vcmp.ne.s32.totalorder %v4131, 0
    %vm4187 = vcmp.ne.s32.totalorder %v4163, 0
    %vm4188 = vcmp.lt.s32.totalorder %v3427, 0
    %vm4189 = vcmp.lt.s32.totalorder %v3459, 0
    %vm4190 = vcmp.lt.s32.totalorder %v3491, 0
    %vm4191 = vcmp.lt.s32.totalorder %v3523, 0
    %vm4192 = vcmp.lt.s32.totalorder %v3555, 0
    %vm4193 = vcmp.lt.s32.totalorder %v3587, 0
    %vm4194 = vcmp.lt.s32.totalorder %v3619, 0
    %vm4195 = vcmp.lt.s32.totalorder %v3651, 0
    %vm4196 = vcmp.lt.s32.totalorder %v3683, 0
    %vm4197 = vcmp.lt.s32.totalorder %v3715, 0
    %vm4198 = vcmp.lt.s32.totalorder %v3747, 0
    %vm4199 = vcmp.lt.s32.totalorder %v3779, 0
    %vm4200 = vcmp.lt.s32.totalorder %v3811, 0
    %vm4201 = vcmp.lt.s32.totalorder %v3843, 0
    %vm4202 = vcmp.lt.s32.totalorder %v3875, 0
    %vm4203 = vcmp.lt.s32.totalorder %v3907, 0
    %vm4204 = vcmp.lt.s32.totalorder %v3939, 0
    %vm4205 = vcmp.lt.s32.totalorder %v3971, 0
    %vm4206 = vcmp.lt.s32.totalorder %v4003, 0
    %vm4207 = vcmp.lt.s32.totalorder %v4035, 0
    %vm4208 = vcmp.lt.s32.totalorder %v4067, 0
    %vm4209 = vcmp.lt.s32.totalorder %v4099, 0
    %vm4210 = vcmp.lt.s32.totalorder %v4131, 0
    %vm4211 = vcmp.lt.s32.totalorder %v4163, 0
    %vm4212 = vmand %vm4188, %vm4164
    %vm4213 = vmand %vm4189, %vm4165
    %vm4214 = vmand %vm4190, %vm4166
    %vm4215 = vmand %vm4191, %vm4167
    %vm4216 = vmand %vm4192, %vm4168
    %vm4217 = vmand %vm4193, %vm4169
    %vm4218 = vmand %vm4194, %vm4170
    %vm4219 = vmand %vm4195, %vm4171
    %vm4220 = vmand %vm4196, %vm4172
    %vm4221 = vmand %vm4197, %vm4173
    %vm4222 = vmand %vm4198, %vm4174
    %vm4223 = vmand %vm4199, %vm4175
    %vm4224 = vmand %vm4200, %vm4176
    %vm4225 = vmand %vm4201, %vm4177
    %vm4226 = vmand %vm4202, %vm4178
    %vm4227 = vmand %vm4203, %vm4179
    %vm4228 = vmand %vm4204, %vm4180
    %vm4229 = vmand %vm4205, %vm4181
    %vm4230 = vmand %vm4206, %vm4182
    %vm4231 = vmand %vm4207, %vm4183
    %vm4232 = vmand %vm4208, %vm4184
    %vm4233 = vmand %vm4209, %vm4185
    %vm4234 = vmand %vm4210, %vm4186
    %vm4235 = vmand %vm4211, %vm4187
    %v4236 = vadd.s32 %v3427, 7
    %v4237 = vadd.s32 %v3459, 7
    %v4238 = vadd.s32 %v3491, 7
    %v4239 = vadd.s32 %v3523, 7
    %v4240 = vadd.s32 %v3555, 7
    %v4241 = vadd.s32 %v3587, 7
    %v4242 = vadd.s32 %v3619, 7
    %v4243 = vadd.s32 %v3651, 7
    %v4244 = vadd.s32 %v3683, 7
    %v4245 = vadd.s32 %v3715, 7
    %v4246 = vadd.s32 %v3747, 7
    %v4247 = vadd.s32 %v3779, 7
    %v4248 = vadd.s32 %v3811, 7
    %v4249 = vadd.s32 %v3843, 7
    %v4250 = vadd.s32 %v3875, 7
    %v4251 = vadd.s32 %v3907, 7
    %v4252 = vadd.s32 %v3939, 7
    %v4253 = vadd.s32 %v3971, 7
    %v4254 = vadd.s32 %v4003, 7
    %v4255 = vadd.s32 %v4035, 7
    %v4256 = vadd.s32 %v4067, 7
    %v4257 = vadd.s32 %v4099, 7
    %v4258 = vadd.s32 %v4131, 7
    %v4259 = vadd.s32 %v4163, 7
    %v4260 = vsel %vm4212, %v4236, %v3427
    %v4261 = vsel %vm4213, %v4237, %v3459
    %v4262 = vsel %vm4214, %v4238, %v3491
    %v4263 = vsel %vm4215, %v4239, %v3523
    %v4264 = vsel %vm4216, %v4240, %v3555
    %v4265 = vsel %vm4217, %v4241, %v3587
    %v4266 = vsel %vm4218, %v4242, %v3619
    %v4267 = vsel %vm4219, %v4243, %v3651
    %v4268 = vsel %vm4220, %v4244, %v3683
    %v4269 = vsel %vm4221, %v4245, %v3715
    %v4270 = vsel %vm4222, %v4246, %v3747
    %v4271 = vsel %vm4223, %v4247, %v3779
    %v4272 = vsel %vm4224, %v4248, %v3811
    %v4273 = vsel %vm4225, %v4249, %v3843
    %v4274 = vsel %vm4226, %v4250, %v3875
    %v4275 = vsel %vm4227, %v4251, %v3907
    %v4276 = vsel %vm4228, %v4252, %v3939
    %v4277 = vsel %vm4229, %v4253, %v3971
    %v4278 = vsel %vm4230, %v4254, %v4003
    %v4279 = vsel %vm4231, %v4255, %v4035
    %v4280 = vsel %vm4232, %v4256, %v4067
    %v4281 = vsel %vm4233, %v4257, %v4099
    %v4282 = vsel %vm4234, %v4258, %v4131
    %v4283 = vsel %vm4235, %v4259, %v4163
    %vm4284 = vcmp.eq.s32.totalorder %v4260, 0
    %vm4285 = vcmp.eq.s32.totalorder %v4261, 0
    %vm4286 = vcmp.eq.s32.totalorder %v4262, 0
    %vm4287 = vcmp.eq.s32.totalorder %v4263, 0
    %vm4288 = vcmp.eq.s32.totalorder %v4264, 0
    %vm4289 = vcmp.eq.s32.totalorder %v4265, 0
    %vm4290 = vcmp.eq.s32.totalorder %v4266, 0
    %vm4291 = vcmp.eq.s32.totalorder %v4267, 0
    %vm4292 = vcmp.eq.s32.totalorder %v4268, 0
    %vm4293 = vcmp.eq.s32.totalorder %v4269, 0
    %vm4294 = vcmp.eq.s32.totalorder %v4270, 0
    %vm4295 = vcmp.eq.s32.totalorder %v4271, 0
    %vm4296 = vcmp.eq.s32.totalorder %v4272, 0
    %vm4297 = vcmp.eq.s32.totalorder %v4273, 0
    %vm4298 = vcmp.eq.s32.totalorder %v4274, 0
    %vm4299 = vcmp.eq.s32.totalorder %v4275, 0
    %vm4300 = vcmp.eq.s32.totalorder %v4276, 0
    %vm4301 = vcmp.eq.s32.totalorder %v4277, 0
    %vm4302 = vcmp.eq.s32.totalorder %v4278, 0
    %vm4303 = vcmp.eq.s32.totalorder %v4279, 0
    %vm4304 = vcmp.eq.s32.totalorder %v4280, 0
    %vm4305 = vcmp.eq.s32.totalorder %v4281, 0
    %vm4306 = vcmp.eq.s32.totalorder %v4282, 0
    %vm4307 = vcmp.eq.s32.totalorder %v4283, 0
    %vm4308 = vcmp.le.s32.totalorder %v670, 9
    %vm4309 = vcmp.le.s32.totalorder %v671, 9
    %vm4310 = vcmp.le.s32.totalorder %v672, 9
    %vm4311 = vcmp.le.s32.totalorder %v673, 9
    %vm4312 = vcmp.le.s32.totalorder %v674, 9
    %vm4313 = vcmp.le.s32.totalorder %v675, 9
    %vm4314 = vcmp.le.s32.totalorder %v676, 9
    %vm4315 = vcmp.le.s32.totalorder %v677, 9
    %vm4316 = vcmp.le.s32.totalorder %v678, 9
    %vm4317 = vcmp.le.s32.totalorder %v679, 9
    %vm4318 = vcmp.le.s32.totalorder %v680, 9
    %vm4319 = vcmp.le.s32.totalorder %v681, 9
    %vm4320 = vcmp.le.s32.totalorder %v682, 9
    %vm4321 = vcmp.le.s32.totalorder %v683, 9
    %vm4322 = vcmp.le.s32.totalorder %v684, 9
    %vm4323 = vcmp.le.s32.totalorder %v685, 9
    %vm4324 = vcmp.le.s32.totalorder %v686, 9
    %vm4325 = vcmp.le.s32.totalorder %v687, 9
    %vm4326 = vcmp.le.s32.totalorder %v688, 9
    %vm4327 = vcmp.le.s32.totalorder %v689, 9
    %vm4328 = vcmp.le.s32.totalorder %v690, 9
    %vm4329 = vcmp.le.s32.totalorder %v691, 9
    %vm4330 = vcmp.le.s32.totalorder %v692, 9
    %vm4331 = vcmp.le.s32.totalorder %v693, 9
    %vm4332 = vmand %vm4284, %vm4308
    %vm4333 = vmand %vm4285, %vm4309
    %vm4334 = vmand %vm4286, %vm4310
    %vm4335 = vmand %vm4287, %vm4311
    %vm4336 = vmand %vm4288, %vm4312
    %vm4337 = vmand %vm4289, %vm4313
    %vm4338 = vmand %vm4290, %vm4314
    %vm4339 = vmand %vm4291, %vm4315
    %vm4340 = vmand %vm4292, %vm4316
    %vm4341 = vmand %vm4293, %vm4317
    %vm4342 = vmand %vm4294, %vm4318
    %vm4343 = vmand %vm4295, %vm4319
    %vm4344 = vmand %vm4296, %vm4320
    %vm4345 = vmand %vm4297, %vm4321
    %vm4346 = vmand %vm4298, %vm4322
    %vm4347 = vmand %vm4299, %vm4323
    %vm4348 = vmand %vm4300, %vm4324
    %vm4349 = vmand %vm4301, %vm4325
    %vm4350 = vmand %vm4302, %vm4326
    %vm4351 = vmand %vm4303, %vm4327
    %vm4352 = vmand %vm4304, %vm4328
    %vm4353 = vmand %vm4305, %vm4329
    %vm4354 = vmand %vm4306, %vm4330
    %vm4355 = vmand %vm4307, %vm4331
    %vm4356 = vcmp.ge.s32.totalorder %v695, 8
    %vm4357 = vmand %vm4332, %vm4356
    %vm4358 = vmand %vm4333, %vm4356
    %vm4359 = vmand %vm4334, %vm4356
    %vm4360 = vmand %vm4335, %vm4356
    %vm4361 = vmand %vm4336, %vm4356
    %vm4362 = vmand %vm4337, %vm4356
    %vm4363 = vmand %vm4338, %vm4356
    %vm4364 = vmand %vm4339, %vm4356
    %vm4365 = vmand %vm4340, %vm4356
    %vm4366 = vmand %vm4341, %vm4356
    %vm4367 = vmand %vm4342, %vm4356
    %vm4368 = vmand %vm4343, %vm4356
    %vm4369 = vmand %vm4344, %vm4356
    %vm4370 = vmand %vm4345, %vm4356
    %vm4371 = vmand %vm4346, %vm4356
    %vm4372 = vmand %vm4347, %vm4356
    %vm4373 = vmand %vm4348, %vm4356
    %vm4374 = vmand %vm4349, %vm4356
    %vm4375 = vmand %vm4350, %vm4356
    %vm4376 = vmand %vm4351, %vm4356
    %vm4377 = vmand %vm4352, %vm4356
    %vm4378 = vmand %vm4353, %vm4356
    %vm4379 = vmand %vm4354, %vm4356
    %vm4380 = vmand %vm4355, %vm4356
    %vm4381 = vcmp.lt.s32.totalorder %v695, 10
    %vm4382 = vmand %vm4357, %vm4381
    %vm4383 = vmand %vm4358, %vm4381
    %vm4384 = vmand %vm4359, %vm4381
    %vm4385 = vmand %vm4360, %vm4381
    %vm4386 = vmand %vm4361, %vm4381
    %vm4387 = vmand %vm4362, %vm4381
    %vm4388 = vmand %vm4363, %vm4381
    %vm4389 = vmand %vm4364, %vm4381
    %vm4390 = vmand %vm4365, %vm4381
    %vm4391 = vmand %vm4366, %vm4381
    %vm4392 = vmand %vm4367, %vm4381
    %vm4393 = vmand %vm4368, %vm4381
    %vm4394 = vmand %vm4369, %vm4381
    %vm4395 = vmand %vm4370, %vm4381
    %vm4396 = vmand %vm4371, %vm4381
    %vm4397 = vmand %vm4372, %vm4381
    %vm4398 = vmand %vm4373, %vm4381
    %vm4399 = vmand %vm4374, %vm4381
    %vm4400 = vmand %vm4375, %vm4381
    %vm4401 = vmand %vm4376, %vm4381
    %vm4402 = vmand %vm4377, %vm4381
    %vm4403 = vmand %vm4378, %vm4381
    %vm4404 = vmand %vm4379, %vm4381
    %vm4405 = vmand %vm4380, %vm4381
    %v4406 = vand.u32 2147483647, %v3372
    %v4407 = vand.u32 2147483647, %v3373
    %v4408 = vand.u32 2147483647, %v3374
    %v4409 = vand.u32 2147483647, %v3375
    %v4410 = vand.u32 2147483647, %v3376
    %v4411 = vand.u32 2147483647, %v3377
    %v4412 = vand.u32 2147483647, %v3378
    %v4413 = vand.u32 2147483647, %v3379
    %v4414 = vand.u32 2147483647, %v3380
    %v4415 = vand.u32 2147483647, %v3381
    %v4416 = vand.u32 2147483647, %v3382
    %v4417 = vand.u32 2147483647, %v3383
    %v4418 = vand.u32 2147483647, %v3384
    %v4419 = vand.u32 2147483647, %v3385
    %v4420 = vand.u32 2147483647, %v3386
    %v4421 = vand.u32 2147483647, %v3387
    %v4422 = vand.u32 2147483647, %v3388
    %v4423 = vand.u32 2147483647, %v3389
    %v4424 = vand.u32 2147483647, %v3390
    %v4425 = vand.u32 2147483647, %v3391
    %v4426 = vand.u32 2147483647, %v3392
    %v4427 = vand.u32 2147483647, %v3393
    %v4428 = vand.u32 2147483647, %v3394
    %v4429 = vand.u32 2147483647, %v3395
    %v4430 = vsel %vm4382, %v4406, 0.0
    %v4431 = vsel %vm4383, %v4407, 0.0
    %v4432 = vsel %vm4384, %v4408, 0.0
    %v4433 = vsel %vm4385, %v4409, 0.0
    %v4434 = vsel %vm4386, %v4410, 0.0
    %v4435 = vsel %vm4387, %v4411, 0.0
    %v4436 = vsel %vm4388, %v4412, 0.0
    %v4437 = vsel %vm4389, %v4413, 0.0
    %v4438 = vsel %vm4390, %v4414, 0.0
    %v4439 = vsel %vm4391, %v4415, 0.0
    %v4440 = vsel %vm4392, %v4416, 0.0
    %v4441 = vsel %vm4393, %v4417, 0.0
    %v4442 = vsel %vm4394, %v4418, 0.0
    %v4443 = vsel %vm4395, %v4419, 0.0
    %v4444 = vsel %vm4396, %v4420, 0.0
    %v4445 = vsel %vm4397, %v4421, 0.0
    %v4446 = vsel %vm4398, %v4422, 0.0
    %v4447 = vsel %vm4399, %v4423, 0.0
    %v4448 = vsel %vm4400, %v4424, 0.0
    %v4449 = vsel %vm4401, %v4425, 0.0
    %v4450 = vsel %vm4402, %v4426, 0.0
    %v4451 = vsel %vm4403, %v4427, 0.0
    %v4452 = vsel %vm4404, %v4428, 0.0
    %v4453 = vsel %vm4405, %v4429, 0.0
    %v4454 = vsel %vm1903, %v4430, 0.0
    %v4455 = vsel %vm1903, %v4431, 0.0
    %v4456 = vadd.f32 %v4454, %v4455
    %v4457 = vsel %vm1903, %v4432, 0.0
    %v4458 = vadd.f32 %v4456, %v4457
    %v4459 = vsel %vm1903, %v4433, 0.0
    %v4460 = vadd.f32 %v4458, %v4459
    %v4461 = vsel %vm1903, %v4434, 0.0
    %v4462 = vadd.f32 %v4460, %v4461
    %v4463 = vsel %vm1903, %v4435, 0.0
    %v4464 = vadd.f32 %v4462, %v4463
    %v4465 = vsel %vm1903, %v4436, 0.0
    %v4466 = vadd.f32 %v4464, %v4465
    %v4467 = vsel %vm1903, %v4437, 0.0
    %v4468 = vadd.f32 %v4466, %v4467
    %v4469 = vsel %vm1903, %v4438, 0.0
    %v4470 = vadd.f32 %v4468, %v4469
    %v4471 = vsel %vm1903, %v4439, 0.0
    %v4472 = vadd.f32 %v4470, %v4471
    %v4473 = vsel %vm1903, %v4440, 0.0
    %v4474 = vadd.f32 %v4472, %v4473
    %v4475 = vsel %vm1903, %v4441, 0.0
    %v4476 = vadd.f32 %v4474, %v4475
    %v4477 = vsel %vm1903, %v4442, 0.0
    %v4478 = vadd.f32 %v4476, %v4477
    %v4479 = vsel %vm1903, %v4443, 0.0
    %v4480 = vadd.f32 %v4478, %v4479
    %v4481 = vsel %vm1903, %v4444, 0.0
    %v4482 = vadd.f32 %v4480, %v4481
    %v4483 = vsel %vm1903, %v4445, 0.0
    %v4484 = vadd.f32 %v4482, %v4483
    %v4485 = vsel %vm1903, %v4446, 0.0
    %v4486 = vadd.f32 %v4484, %v4485
    %v4487 = vsel %vm1903, %v4447, 0.0
    %v4488 = vadd.f32 %v4486, %v4487
    %v4489 = vsel %vm1903, %v4448, 0.0
    %v4490 = vadd.f32 %v4488, %v4489
    %v4491 = vsel %vm1903, %v4449, 0.0
    %v4492 = vadd.f32 %v4490, %v4491
    %v4493 = vsel %vm1903, %v4450, 0.0
    %v4494 = vadd.f32 %v4492, %v4493
    %v4495 = vsel %vm1903, %v4451, 0.0
    %v4496 = vadd.f32 %v4494, %v4495
    %v4497 = vsel %vm1903, %v4452, 0.0
    %v4498 = vadd.f32 %v4496, %v4497
    %v4499 = vsel %vm1903, %v4453, 0.0
    %v4500 = vadd.f32 %v4498, %v4499
    %4501 = vadd.xlane.f32.xlu0 %v4500
    %v4502 = vpop.xlane.xlu0 %4501
    %v4503 = vrot.slane %v4502, 4
    %v4504 = vadd.f32 %v4502, %v4503
    %v4505 = vrot.slane %v4504, 2
    %v4506 = vadd.f32 %v4504, %v4505
    %v4507 = vrot.slane %v4506, 1
    %v4508 = vadd.f32 %v4506, %v4507
    %s4509 = vtos %v4508
    %s4510 = sadd.f32 %s3199, %s4509
    %v4511 = vld [vmem:[#allocation2] sm:$0x1]
    %v4512 = vstv %s4510
    %v4513 = vadd.f32 %v4511, %v4512
    %vm4514 = vcmask 0
    %4515 = vst.msk [vmem:[#allocation2] sm:$0x1] %vm4514, %v4513
    // Predicated region
    $region18: #{tpu_custom_call.1} parent=1 // pred_check
      _
    $region19: #{tpu_custom_call.1} parent=1 // pred_check_branch
      %4517 = sbr.rel (0) target = $region21
    $region20: #{tpu_custom_call.1} parent=1 // pred_region
      %4519 = vsyncadd [#allocation3], 0
      %s4521 = sshll.u32 [#allocation2], 4
      %s4522 = int_to_ptr.vmem [resolvable:$true] %s4521
      %s4523 = sshll.u32 %s3, 4
      %s4524 = int_to_ptr.hbm [resolvable:$true] %s4523
      %4526 = dma.vmem_to_hbm [thread:$0]  %s4522, 16, %s4524, [#allocation3]
    $region21: #{tpu_custom_call.1} parent=1 // pred_fallthru
      _
    // Predicated region
    $region22: #{tpu_custom_call.1} parent=1 // pred_check
      _
    $region23: #{tpu_custom_call.1} parent=1 // pred_check_branch
      %4528 = sbr.rel (0) target = $region25
    $region24: #{tpu_custom_call.1} parent=1 // pred_region
      %4530 = dma.done [#allocation3], 16
    $region25: #{tpu_custom_call.1} parent=1 // pred_fallthru
      _
    %4531 = vsyncpa [#allocation3], 1

</llo_original>
